<compile_context>
chip_gen: v5e
topology: v5e:2x2
jax: 0.10.0
libtpu: 0.0.40
codegen_flags: <defaults>
</compile_context>

<pallas_src>
import jax
import jax.numpy as jnp
from jax.experimental import pallas as pl
from jax.experimental.pallas import tpu as pltpu

H0 = 16                      # input spatial size (16x16 -> four 2x2 pools -> 1x1)
C = 64                       # channel width of every conv layer
K = 9 * C                    # im2col depth for layers 2-4
TAPS = tuple((dy, dx) for dy in range(3) for dx in range(3))


def _pool2x2_into(src_ref, pitch, hin, dst_ref, dst_pitch):
    """2x2 max-pool the (hin x hin) map stored in src_ref rows r = h*pitch + w
    (valid w < hin, channels on lanes) and write the pooled (hin/2 x hin/2)
    map into the interior of the zero-padded flat buffer dst_ref."""
    hp_n = hin // 2
    for hp in range(hp_n):
        p00 = src_ref[pl.ds((2 * hp) * pitch, hp_n, 2), :]
        p01 = src_ref[pl.ds((2 * hp) * pitch + 1, hp_n, 2), :]
        p10 = src_ref[pl.ds((2 * hp + 1) * pitch, hp_n, 2), :]
        p11 = src_ref[pl.ds((2 * hp + 1) * pitch + 1, hp_n, 2), :]
        pooled = jnp.maximum(jnp.maximum(p00, p01), jnp.maximum(p10, p11))
        dst_ref[pl.ds((hp + 1) * dst_pitch + 1, hp_n), :] = pooled


def _conv_bn_relu(apad_ref, hin, cols_ref, w_mat, scale, bias, ybuf_ref):
    """3x3 'same' conv + folded BN affine + ReLU of the zero-padded activation
    in apad_ref (flat, row pitch hin+2, C lanes).  Conv output rows
    r = h*(hin+2) + w (valid w < hin) are written to ybuf_ref[:hin*(hin+2)]."""
    pitch = hin + 2
    m = hin * pitch
    # In-kernel im2col: 9 contiguous slices of the padded activation (one per
    # 3x3 tap) laid side by side on the lane axis -> ONE (m,576)x(576,64)
    # MXU matmul for the whole layer.
    for t, (dy, dx) in enumerate(TAPS):
        cols_ref[pl.ds(0, m), C * t:C * (t + 1)] = (
            apad_ref[pl.ds(dy * pitch + dx, m), :])
    y = jnp.dot(cols_ref[pl.ds(0, m), :], w_mat,
                preferred_element_type=jnp.float32)
    ybuf_ref[pl.ds(0, m), :] = jnp.maximum(y * scale + bias, 0.0)


def _cnn_block_kernel(x_ref, w1_ref, w_ref, scale_ref, bias_ref, o_ref,
                      ybuf, cols, ap2, ap3, ap4):
    # Zero the padded-activation scratch so every conv sees zero padding.
    ap2[...] = jnp.zeros_like(ap2)
    ap3[...] = jnp.zeros_like(ap3)
    ap4[...] = jnp.zeros_like(ap4)

    # ---- layer 1 (Cin = 1): 9 shifted VPU FMAs + BN + ReLU -----------------
    pitch1 = H0 + 2                          # 18
    m1 = H0 * pitch1                         # 288 rows (2 junk cols per row)
    dy0, dx0 = TAPS[0]
    acc = x_ref[0, pl.ds(dy0 * pitch1 + dx0, m1), :] * w1_ref[0]
    for t in range(1, 9):
        dy, dx = TAPS[t]
        acc = acc + x_ref[0, pl.ds(dy * pitch1 + dx, m1), :] * w1_ref[t]
    ybuf[pl.ds(0, m1), :] = jnp.maximum(acc * scale_ref[0] + bias_ref[0], 0.0)
    _pool2x2_into(ybuf, pitch1, H0, ap2, 10)          # 16x16 -> padded 8x8

    # ---- layer 2 ------------------------------------------------------------
    _conv_bn_relu(ap2, 8, cols, w_ref[0], scale_ref[1], bias_ref[1], ybuf)
    _pool2x2_into(ybuf, 10, 8, ap3, 6)                # 8x8 -> padded 4x4

    # ---- layer 3 ------------------------------------------------------------
    _conv_bn_relu(ap3, 4, cols, w_ref[1], scale_ref[2], bias_ref[2], ybuf)
    _pool2x2_into(ybuf, 6, 4, ap4, 4)                 # 4x4 -> padded 2x2

    # ---- layer 4 + final 2x2 pool -> (1, 64) --------------------------------
    _conv_bn_relu(ap4, 2, cols, w_ref[2], scale_ref[3], bias_ref[3], ybuf)
    p00 = ybuf[pl.ds(0, 1), :]
    p01 = ybuf[pl.ds(1, 1), :]
    p10 = ybuf[pl.ds(4, 1), :]
    p11 = ybuf[pl.ds(5, 1), :]
    o_ref[0] = jnp.maximum(jnp.maximum(p00, p01), jnp.maximum(p10, p11))


def cnn_block_forward(x_nchw, params):
    """x_nchw: (N, 1, 16, 16) f32 (PyTorch layout).  Returns (N, 64, 1, 1)."""
    n, cin, h, w = x_nchw.shape
    assert (cin, h, w) == (1, H0, H0)

    # One-time tiny host-side prep: zero-pad the 1-channel image and flatten to
    # the row-pitch-18 layout the kernel indexes.  Two zero guard rows keep the
    # last 3x3 tap's slice in bounds (they only land in discarded junk rows).
    xpad = jnp.pad(x_nchw[:, 0], ((0, 0), (1, 1), (1, 1)))          # (N, 18, 18)
    xflat = xpad.reshape(n, (H0 + 2) * (H0 + 2), 1)
    xflat = jnp.pad(xflat, ((0, 0), (0, 2), (0, 0)))                # (N, 326, 1)

    w1 = params[0][0].reshape(9, 1, C)                              # (9, 1, 64)
    w234 = jnp.stack([p[0].reshape(K, C) for p in params[1:]])      # (3, 576, 64)
    scale = jnp.stack([p[1].reshape(1, C) for p in params])         # (4, 1, 64)
    bias = jnp.stack([p[2].reshape(1, C) for p in params])          # (4, 1, 64)

    out = pl.pallas_call(
        _cnn_block_kernel,
        out_shape=jax.ShapeDtypeStruct((n, 1, C), jnp.float32),
        grid_spec=pltpu.PrefetchScalarGridSpec(
            num_scalar_prefetch=0,
            grid=(n,),
            in_specs=[
                pl.BlockSpec((1, (H0 + 2) * (H0 + 2) + 2, 1), lambda i: (i, 0, 0)),
                pl.BlockSpec((9, 1, C), lambda i: (0, 0, 0)),
                pl.BlockSpec((3, K, C), lambda i: (0, 0, 0)),
                pl.BlockSpec((4, 1, C), lambda i: (0, 0, 0)),
                pl.BlockSpec((4, 1, C), lambda i: (0, 0, 0)),
            ],
            out_specs=pl.BlockSpec((1, 1, C), lambda i: (i, 0, 0)),
            scratch_shapes=[
                pltpu.VMEM((H0 * (H0 + 2), C), jnp.float32),        # ybuf (288, 64)
                pltpu.VMEM((8 * 10, K), jnp.float32),               # cols (80, 576)
                pltpu.VMEM((10 * 10 + 2, C), jnp.float32),          # ap2  (102, 64)
                pltpu.VMEM((6 * 6 + 2, C), jnp.float32),            # ap3  (38, 64)
                pltpu.VMEM((4 * 4 + 2, C), jnp.float32),            # ap4  (18, 64)
            ],
        ),
        compiler_params=pltpu.CompilerParams(dimension_semantics=("parallel",)),
    )(xflat, w1, w234, scale, bias)

    return out.reshape(n, C, 1, 1)


def init_params(key):
    """Deterministic synthetic params for the 4 conv/BN blocks (eval-mode BN folded)."""
    params = []
    cin, cout, eps = 1, 64, 1e-5
    for _ in range(4):
        key, kw, kb = jax.random.split(key, 3)
        fan_in = 9 * cin
        w = jax.random.normal(kw, (3, 3, cin, cout), jnp.float32) / jnp.sqrt(float(fan_in))
        b = jax.random.normal(kb, (cout,), jnp.float32) * 0.01
        gamma = jnp.ones((cout,), jnp.float32)
        beta = jnp.zeros((cout,), jnp.float32)
        running_mean = jnp.zeros((cout,), jnp.float32)
        running_var = jnp.ones((cout,), jnp.float32)
        scale = gamma / jnp.sqrt(running_var + eps)
        bias = (b - running_mean) * scale + beta
        params.append((w, scale, bias))
        cin = cout
    return params


def reference_forward(x_nchw, params):
    """Pure-JAX reference (no Pallas) for correctness checking."""
    x = jnp.transpose(x_nchw, (0, 2, 3, 1))
    for (w, scale, bias) in params:
        y = jax.lax.conv_general_dilated(
            x, w, window_strides=(1, 1), padding="SAME",
            dimension_numbers=("NHWC", "HWIO", "NHWC"))
        y = jnp.maximum(y * scale + bias, 0.0)
        x = jax.lax.reduce_window(y, -jnp.inf, jax.lax.max,
                                  (1, 2, 2, 1), (1, 2, 2, 1), "VALID")
    return jnp.transpose(x, (0, 3, 1, 2))


if __name__ == "__main__":
    key = jax.random.PRNGKey(0)
    kx, kp = jax.random.split(key)
    x = jax.random.normal(kx, (2, 1, 16, 16), jnp.float32)  # NCHW, like PyTorch
    params = init_params(kp)

    fwd = jax.jit(cnn_block_forward)
    out = jax.block_until_ready(fwd(x, params))
    assert out.shape == (2, 64, 1, 1), out.shape

    ref = reference_forward(x, params)
    if not bool(jnp.allclose(out, ref, rtol=1e-4, atol=1e-4)):
        raise AssertionError("Pallas kernel output mismatch vs JAX reference")

    print("KERNEL_OK")
</pallas_src>

<mosaic_0001>
module attributes {stable_mosaic.version = 11 : i64} {
  func.func @_cnn_block_kernel(%arg0: i32, %arg1: memref<1x326x1xf32, #tpu.memory_space<vmem>>, %arg2: memref<9x1x64xf32, #tpu.memory_space<vmem>>, %arg3: memref<3x576x64xf32, #tpu.memory_space<vmem>>, %arg4: memref<4x1x64xf32, #tpu.memory_space<vmem>>, %arg5: memref<4x1x64xf32, #tpu.memory_space<vmem>>, %arg6: memref<1x1x64xf32, #tpu.memory_space<vmem>>, %arg7: memref<288x64xf32, #tpu.memory_space<vmem>>, %arg8: memref<80x576xf32, #tpu.memory_space<vmem>>, %arg9: memref<102x64xf32, #tpu.memory_space<vmem>>, %arg10: memref<38x64xf32, #tpu.memory_space<vmem>>, %arg11: memref<18x64xf32, #tpu.memory_space<vmem>>) attributes {dimension_semantics = [#tpu.dimension_semantics<parallel>], iteration_bounds = array<i64: 2>, scalar_prefetch = 0 : i64, scratch_operands = 5 : i64, tpu.core_type = #tpu.core_type<tc>, window_params = [{transform_indices = @transform_0, window_bounds = array<i64: 1, 326, 1>}, {pipeline_mode = #tpu.pipeline_mode<synchronous>, transform_indices = @transform_1, window_bounds = array<i64: 9, 1, 64>}, {pipeline_mode = #tpu.pipeline_mode<synchronous>, transform_indices = @transform_2, window_bounds = array<i64: 3, 576, 64>}, {pipeline_mode = #tpu.pipeline_mode<synchronous>, transform_indices = @transform_3, window_bounds = array<i64: 4, 1, 64>}, {pipeline_mode = #tpu.pipeline_mode<synchronous>, transform_indices = @transform_4, window_bounds = array<i64: 4, 1, 64>}, {transform_indices = @transform_5, window_bounds = array<i64: 1, 1, 64>}]} {
    %cst = arith.constant 0.000000e+00 : f32
    %0 = vector.broadcast %cst : f32 to vector<102x64xf32>
    %c0 = arith.constant 0 : index
    %c0_0 = arith.constant 0 : index
    %1 = vector.load %arg9[%c0, %c0_0] : memref<102x64xf32, #tpu.memory_space<vmem>>, vector<102x64xf32>
    tpu.vector_store %arg9[%c0, %c0_0], %0 {strides = array<i32>} : memref<102x64xf32, #tpu.memory_space<vmem>>, vector<102x64xf32>,
    %cst_1 = arith.constant 0.000000e+00 : f32
    %2 = vector.broadcast %cst_1 : f32 to vector<38x64xf32>
    %c0_2 = arith.constant 0 : index
    %c0_3 = arith.constant 0 : index
    %3 = vector.load %arg10[%c0_2, %c0_3] : memref<38x64xf32, #tpu.memory_space<vmem>>, vector<38x64xf32>
    tpu.vector_store %arg10[%c0_2, %c0_3], %2 {strides = array<i32>} : memref<38x64xf32, #tpu.memory_space<vmem>>, vector<38x64xf32>,
    %cst_4 = arith.constant 0.000000e+00 : f32
    %4 = vector.broadcast %cst_4 : f32 to vector<18x64xf32>
    %c0_5 = arith.constant 0 : index
    %c0_6 = arith.constant 0 : index
    %5 = vector.load %arg11[%c0_5, %c0_6] : memref<18x64xf32, #tpu.memory_space<vmem>>, vector<18x64xf32>
    tpu.vector_store %arg11[%c0_5, %c0_6], %4 {strides = array<i32>} : memref<18x64xf32, #tpu.memory_space<vmem>>, vector<18x64xf32>,
    %c0_7 = arith.constant 0 : index
    %c0_8 = arith.constant 0 : index
    %c0_9 = arith.constant 0 : index
    %6 = vector.load %arg1[%c0_7, %c0_8, %c0_9] : memref<1x326x1xf32, #tpu.memory_space<vmem>>, vector<1x288x1xf32>
    %7 = vector.shape_cast %6 : vector<1x288x1xf32> to vector<288x1xf32>
    %c0_10 = arith.constant 0 : index
    %c0_11 = arith.constant 0 : index
    %c0_12 = arith.constant 0 : index
    %8 = vector.load %arg2[%c0_10, %c0_11, %c0_12] : memref<9x1x64xf32, #tpu.memory_space<vmem>>, vector<1x1x64xf32>
    %9 = vector.shape_cast %8 : vector<1x1x64xf32> to vector<1x64xf32>
    %10 = vector.broadcast %7 : vector<288x1xf32> to vector<288x64xf32>
    %11 = vector.broadcast %9 : vector<1x64xf32> to vector<288x64xf32>
    %12 = arith.mulf %10, %11 : vector<288x64xf32>
    %c0_13 = arith.constant 0 : index
    %c1 = arith.constant 1 : index
    %c0_14 = arith.constant 0 : index
    %13 = vector.load %arg1[%c0_13, %c1, %c0_14] : memref<1x326x1xf32, #tpu.memory_space<vmem>>, vector<1x288x1xf32>
    %14 = vector.shape_cast %13 : vector<1x288x1xf32> to vector<288x1xf32>
    %c1_15 = arith.constant 1 : index
    %c0_16 = arith.constant 0 : index
    %c0_17 = arith.constant 0 : index
    %15 = vector.load %arg2[%c1_15, %c0_16, %c0_17] : memref<9x1x64xf32, #tpu.memory_space<vmem>>, vector<1x1x64xf32>
    %16 = vector.shape_cast %15 : vector<1x1x64xf32> to vector<1x64xf32>
    %17 = vector.broadcast %14 : vector<288x1xf32> to vector<288x64xf32>
    %18 = vector.broadcast %16 : vector<1x64xf32> to vector<288x64xf32>
    %19 = arith.mulf %17, %18 : vector<288x64xf32>
    %20 = arith.addf %12, %19 : vector<288x64xf32>
    %c0_18 = arith.constant 0 : index
    %c2 = arith.constant 2 : index
    %c0_19 = arith.constant 0 : index
    %21 = vector.load %arg1[%c0_18, %c2, %c0_19] : memref<1x326x1xf32, #tpu.memory_space<vmem>>, vector<1x288x1xf32>
    %22 = vector.shape_cast %21 : vector<1x288x1xf32> to vector<288x1xf32>
    %c2_20 = arith.constant 2 : index
    %c0_21 = arith.constant 0 : index
    %c0_22 = arith.constant 0 : index
    %23 = vector.load %arg2[%c2_20, %c0_21, %c0_22] : memref<9x1x64xf32, #tpu.memory_space<vmem>>, vector<1x1x64xf32>
    %24 = vector.shape_cast %23 : vector<1x1x64xf32> to vector<1x64xf32>
    %25 = vector.broadcast %22 : vector<288x1xf32> to vector<288x64xf32>
    %26 = vector.broadcast %24 : vector<1x64xf32> to vector<288x64xf32>
    %27 = arith.mulf %25, %26 : vector<288x64xf32>
    %28 = arith.addf %20, %27 : vector<288x64xf32>
    %c0_23 = arith.constant 0 : index
    %c18 = arith.constant 18 : index
    %c0_24 = arith.constant 0 : index
    %29 = vector.load %arg1[%c0_23, %c18, %c0_24] : memref<1x326x1xf32, #tpu.memory_space<vmem>>, vector<1x288x1xf32>
    %30 = vector.shape_cast %29 : vector<1x288x1xf32> to vector<288x1xf32>
    %c3 = arith.constant 3 : index
    %c0_25 = arith.constant 0 : index
    %c0_26 = arith.constant 0 : index
    %31 = vector.load %arg2[%c3, %c0_25, %c0_26] : memref<9x1x64xf32, #tpu.memory_space<vmem>>, vector<1x1x64xf32>
    %32 = vector.shape_cast %31 : vector<1x1x64xf32> to vector<1x64xf32>
    %33 = vector.broadcast %30 : vector<288x1xf32> to vector<288x64xf32>
    %34 = vector.broadcast %32 : vector<1x64xf32> to vector<288x64xf32>
    %35 = arith.mulf %33, %34 : vector<288x64xf32>
    %36 = arith.addf %28, %35 : vector<288x64xf32>
    %c0_27 = arith.constant 0 : index
    %c19 = arith.constant 19 : index
    %c0_28 = arith.constant 0 : index
    %37 = vector.load %arg1[%c0_27, %c19, %c0_28] : memref<1x326x1xf32, #tpu.memory_space<vmem>>, vector<1x288x1xf32>
    %38 = vector.shape_cast %37 : vector<1x288x1xf32> to vector<288x1xf32>
    %c4 = arith.constant 4 : index
    %c0_29 = arith.constant 0 : index
    %c0_30 = arith.constant 0 : index
    %39 = vector.load %arg2[%c4, %c0_29, %c0_30] : memref<9x1x64xf32, #tpu.memory_space<vmem>>, vector<1x1x64xf32>
    %40 = vector.shape_cast %39 : vector<1x1x64xf32> to vector<1x64xf32>
    %41 = vector.broadcast %38 : vector<288x1xf32> to vector<288x64xf32>
    %42 = vector.broadcast %40 : vector<1x64xf32> to vector<288x64xf32>
    %43 = arith.mulf %41, %42 : vector<288x64xf32>
    %44 = arith.addf %36, %43 : vector<288x64xf32>
    %c0_31 = arith.constant 0 : index
    %c20 = arith.constant 20 : index
    %c0_32 = arith.constant 0 : index
    %45 = vector.load %arg1[%c0_31, %c20, %c0_32] : memref<1x326x1xf32, #tpu.memory_space<vmem>>, vector<1x288x1xf32>
    %46 = vector.shape_cast %45 : vector<1x288x1xf32> to vector<288x1xf32>
    %c5 = arith.constant 5 : index
    %c0_33 = arith.constant 0 : index
    %c0_34 = arith.constant 0 : index
    %47 = vector.load %arg2[%c5, %c0_33, %c0_34] : memref<9x1x64xf32, #tpu.memory_space<vmem>>, vector<1x1x64xf32>
    %48 = vector.shape_cast %47 : vector<1x1x64xf32> to vector<1x64xf32>
    %49 = vector.broadcast %46 : vector<288x1xf32> to vector<288x64xf32>
    %50 = vector.broadcast %48 : vector<1x64xf32> to vector<288x64xf32>
    %51 = arith.mulf %49, %50 : vector<288x64xf32>
    %52 = arith.addf %44, %51 : vector<288x64xf32>
    %c0_35 = arith.constant 0 : index
    %c36 = arith.constant 36 : index
    %c0_36 = arith.constant 0 : index
    %53 = vector.load %arg1[%c0_35, %c36, %c0_36] : memref<1x326x1xf32, #tpu.memory_space<vmem>>, vector<1x288x1xf32>
    %54 = vector.shape_cast %53 : vector<1x288x1xf32> to vector<288x1xf32>
    %c6 = arith.constant 6 : index
    %c0_37 = arith.constant 0 : index
    %c0_38 = arith.constant 0 : index
    %55 = vector.load %arg2[%c6, %c0_37, %c0_38] : memref<9x1x64xf32, #tpu.memory_space<vmem>>, vector<1x1x64xf32>
    %56 = vector.shape_cast %55 : vector<1x1x64xf32> to vector<1x64xf32>
    %57 = vector.broadcast %54 : vector<288x1xf32> to vector<288x64xf32>
    %58 = vector.broadcast %56 : vector<1x64xf32> to vector<288x64xf32>
    %59 = arith.mulf %57, %58 : vector<288x64xf32>
    %60 = arith.addf %52, %59 : vector<288x64xf32>
    %c0_39 = arith.constant 0 : index
    %c37 = arith.constant 37 : index
    %c0_40 = arith.constant 0 : index
    %61 = vector.load %arg1[%c0_39, %c37, %c0_40] : memref<1x326x1xf32, #tpu.memory_space<vmem>>, vector<1x288x1xf32>
    %62 = vector.shape_cast %61 : vector<1x288x1xf32> to vector<288x1xf32>
    %c7 = arith.constant 7 : index
    %c0_41 = arith.constant 0 : index
    %c0_42 = arith.constant 0 : index
    %63 = vector.load %arg2[%c7, %c0_41, %c0_42] : memref<9x1x64xf32, #tpu.memory_space<vmem>>, vector<1x1x64xf32>
    %64 = vector.shape_cast %63 : vector<1x1x64xf32> to vector<1x64xf32>
    %65 = vector.broadcast %62 : vector<288x1xf32> to vector<288x64xf32>
    %66 = vector.broadcast %64 : vector<1x64xf32> to vector<288x64xf32>
    %67 = arith.mulf %65, %66 : vector<288x64xf32>
    %68 = arith.addf %60, %67 : vector<288x64xf32>
    %c0_43 = arith.constant 0 : index
    %c38 = arith.constant 38 : index
    %c0_44 = arith.constant 0 : index
    %69 = vector.load %arg1[%c0_43, %c38, %c0_44] : memref<1x326x1xf32, #tpu.memory_space<vmem>>, vector<1x288x1xf32>
    %70 = vector.shape_cast %69 : vector<1x288x1xf32> to vector<288x1xf32>
    %c8 = arith.constant 8 : index
    %c0_45 = arith.constant 0 : index
    %c0_46 = arith.constant 0 : index
    %71 = vector.load %arg2[%c8, %c0_45, %c0_46] : memref<9x1x64xf32, #tpu.memory_space<vmem>>, vector<1x1x64xf32>
    %72 = vector.shape_cast %71 : vector<1x1x64xf32> to vector<1x64xf32>
    %73 = vector.broadcast %70 : vector<288x1xf32> to vector<288x64xf32>
    %74 = vector.broadcast %72 : vector<1x64xf32> to vector<288x64xf32>
    %75 = arith.mulf %73, %74 : vector<288x64xf32>
    %76 = arith.addf %68, %75 : vector<288x64xf32>
    %c0_47 = arith.constant 0 : index
    %c0_48 = arith.constant 0 : index
    %c0_49 = arith.constant 0 : index
    %77 = vector.load %arg4[%c0_47, %c0_48, %c0_49] : memref<4x1x64xf32, #tpu.memory_space<vmem>>, vector<1x1x64xf32>
    %78 = vector.shape_cast %77 : vector<1x1x64xf32> to vector<1x64xf32>
    %79 = vector.broadcast %78 : vector<1x64xf32> to vector<288x64xf32>
    %80 = arith.mulf %76, %79 : vector<288x64xf32>
    %c0_50 = arith.constant 0 : index
    %c0_51 = arith.constant 0 : index
    %c0_52 = arith.constant 0 : index
    %81 = vector.load %arg5[%c0_50, %c0_51, %c0_52] : memref<4x1x64xf32, #tpu.memory_space<vmem>>, vector<1x1x64xf32>
    %82 = vector.shape_cast %81 : vector<1x1x64xf32> to vector<1x64xf32>
    %83 = vector.broadcast %82 : vector<1x64xf32> to vector<288x64xf32>
    %84 = arith.addf %80, %83 : vector<288x64xf32>
    %cst_53 = arith.constant 0.000000e+00 : f32
    %85 = vector.broadcast %cst_53 : f32 to vector<288x64xf32>
    %86 = arith.maximumf %84, %85 : vector<288x64xf32>
    %c0_54 = arith.constant 0 : index
    %c0_55 = arith.constant 0 : index
    %87 = vector.load %arg7[%c0_54, %c0_55] : memref<288x64xf32, #tpu.memory_space<vmem>>, vector<288x64xf32>
    tpu.vector_store %arg7[%c0_54, %c0_55], %86 {strides = array<i32>} : memref<288x64xf32, #tpu.memory_space<vmem>>, vector<288x64xf32>,
    %c0_56 = arith.constant 0 : index
    %c0_57 = arith.constant 0 : index
    %88 = tpu.strided_load %arg7[%c0_56, %c0_57] {strides = array<i32: 2, 1>} : memref<288x64xf32, #tpu.memory_space<vmem>>, vector<8x64xf32>
    %c1_58 = arith.constant 1 : index
    %c0_59 = arith.constant 0 : index
    %89 = tpu.strided_load %arg7[%c1_58, %c0_59] {strides = array<i32: 2, 1>} : memref<288x64xf32, #tpu.memory_space<vmem>>, vector<8x64xf32>
    %c18_60 = arith.constant 18 : index
    %c0_61 = arith.constant 0 : index
    %90 = tpu.strided_load %arg7[%c18_60, %c0_61] {strides = array<i32: 2, 1>} : memref<288x64xf32, #tpu.memory_space<vmem>>, vector<8x64xf32>
    %c19_62 = arith.constant 19 : index
    %c0_63 = arith.constant 0 : index
    %91 = tpu.strided_load %arg7[%c19_62, %c0_63] {strides = array<i32: 2, 1>} : memref<288x64xf32, #tpu.memory_space<vmem>>, vector<8x64xf32>
    %92 = arith.maximumf %88, %89 : vector<8x64xf32>
    %93 = arith.maximumf %90, %91 : vector<8x64xf32>
    %94 = arith.maximumf %92, %93 : vector<8x64xf32>
    %c11 = arith.constant 11 : index
    %c0_64 = arith.constant 0 : index
    %95 = vector.load %arg9[%c11, %c0_64] : memref<102x64xf32, #tpu.memory_space<vmem>>, vector<8x64xf32>
    tpu.vector_store %arg9[%c11, %c0_64], %94 {strides = array<i32>} : memref<102x64xf32, #tpu.memory_space<vmem>>, vector<8x64xf32>,
    %c36_65 = arith.constant 36 : index
    %c0_66 = arith.constant 0 : index
    %96 = tpu.strided_load %arg7[%c36_65, %c0_66] {strides = array<i32: 2, 1>} : memref<288x64xf32, #tpu.memory_space<vmem>>, vector<8x64xf32>
    %c37_67 = arith.constant 37 : index
    %c0_68 = arith.constant 0 : index
    %97 = tpu.strided_load %arg7[%c37_67, %c0_68] {strides = array<i32: 2, 1>} : memref<288x64xf32, #tpu.memory_space<vmem>>, vector<8x64xf32>
    %c54 = arith.constant 54 : index
    %c0_69 = arith.constant 0 : index
    %98 = tpu.strided_load %arg7[%c54, %c0_69] {strides = array<i32: 2, 1>} : memref<288x64xf32, #tpu.memory_space<vmem>>, vector<8x64xf32>
    %c55 = arith.constant 55 : index
    %c0_70 = arith.constant 0 : index
    %99 = tpu.strided_load %arg7[%c55, %c0_70] {strides = array<i32: 2, 1>} : memref<288x64xf32, #tpu.memory_space<vmem>>, vector<8x64xf32>
    %100 = arith.maximumf %96, %97 : vector<8x64xf32>
    %101 = arith.maximumf %98, %99 : vector<8x64xf32>
    %102 = arith.maximumf %100, %101 : vector<8x64xf32>
    %c21 = arith.constant 21 : index
    %c0_71 = arith.constant 0 : index
    %103 = vector.load %arg9[%c21, %c0_71] : memref<102x64xf32, #tpu.memory_space<vmem>>, vector<8x64xf32>
    tpu.vector_store %arg9[%c21, %c0_71], %102 {strides = array<i32>} : memref<102x64xf32, #tpu.memory_space<vmem>>, vector<8x64xf32>,
    %c72 = arith.constant 72 : index
    %c0_72 = arith.constant 0 : index
    %104 = tpu.strided_load %arg7[%c72, %c0_72] {strides = array<i32: 2, 1>} : memref<288x64xf32, #tpu.memory_space<vmem>>, vector<8x64xf32>
    %c73 = arith.constant 73 : index
    %c0_73 = arith.constant 0 : index
    %105 = tpu.strided_load %arg7[%c73, %c0_73] {strides = array<i32: 2, 1>} : memref<288x64xf32, #tpu.memory_space<vmem>>, vector<8x64xf32>
    %c90 = arith.constant 90 : index
    %c0_74 = arith.constant 0 : index
    %106 = tpu.strided_load %arg7[%c90, %c0_74] {strides = array<i32: 2, 1>} : memref<288x64xf32, #tpu.memory_space<vmem>>, vector<8x64xf32>
    %c91 = arith.constant 91 : index
    %c0_75 = arith.constant 0 : index
    %107 = tpu.strided_load %arg7[%c91, %c0_75] {strides = array<i32: 2, 1>} : memref<288x64xf32, #tpu.memory_space<vmem>>, vector<8x64xf32>
    %108 = arith.maximumf %104, %105 : vector<8x64xf32>
    %109 = arith.maximumf %106, %107 : vector<8x64xf32>
    %110 = arith.maximumf %108, %109 : vector<8x64xf32>
    %c31 = arith.constant 31 : index
    %c0_76 = arith.constant 0 : index
    %111 = vector.load %arg9[%c31, %c0_76] : memref<102x64xf32, #tpu.memory_space<vmem>>, vector<8x64xf32>
    tpu.vector_store %arg9[%c31, %c0_76], %110 {strides = array<i32>} : memref<102x64xf32, #tpu.memory_space<vmem>>, vector<8x64xf32>,
    %c108 = arith.constant 108 : index
    %c0_77 = arith.constant 0 : index
    %112 = tpu.strided_load %arg7[%c108, %c0_77] {strides = array<i32: 2, 1>} : memref<288x64xf32, #tpu.memory_space<vmem>>, vector<8x64xf32>
    %c109 = arith.constant 109 : index
    %c0_78 = arith.constant 0 : index
    %113 = tpu.strided_load %arg7[%c109, %c0_78] {strides = array<i32: 2, 1>} : memref<288x64xf32, #tpu.memory_space<vmem>>, vector<8x64xf32>
    %c126 = arith.constant 126 : index
    %c0_79 = arith.constant 0 : index
    %114 = tpu.strided_load %arg7[%c126, %c0_79] {strides = array<i32: 2, 1>} : memref<288x64xf32, #tpu.memory_space<vmem>>, vector<8x64xf32>
    %c127 = arith.constant 127 : index
    %c0_80 = arith.constant 0 : index
    %115 = tpu.strided_load %arg7[%c127, %c0_80] {strides = array<i32: 2, 1>} : memref<288x64xf32, #tpu.memory_space<vmem>>, vector<8x64xf32>
    %116 = arith.maximumf %112, %113 : vector<8x64xf32>
    %117 = arith.maximumf %114, %115 : vector<8x64xf32>
    %118 = arith.maximumf %116, %117 : vector<8x64xf32>
    %c41 = arith.constant 41 : index
    %c0_81 = arith.constant 0 : index
    %119 = vector.load %arg9[%c41, %c0_81] : memref<102x64xf32, #tpu.memory_space<vmem>>, vector<8x64xf32>
    tpu.vector_store %arg9[%c41, %c0_81], %118 {strides = array<i32>} : memref<102x64xf32, #tpu.memory_space<vmem>>, vector<8x64xf32>,
    %c144 = arith.constant 144 : index
    %c0_82 = arith.constant 0 : index
    %120 = tpu.strided_load %arg7[%c144, %c0_82] {strides = array<i32: 2, 1>} : memref<288x64xf32, #tpu.memory_space<vmem>>, vector<8x64xf32>
    %c145 = arith.constant 145 : index
    %c0_83 = arith.constant 0 : index
    %121 = tpu.strided_load %arg7[%c145, %c0_83] {strides = array<i32: 2, 1>} : memref<288x64xf32, #tpu.memory_space<vmem>>, vector<8x64xf32>
    %c162 = arith.constant 162 : index
    %c0_84 = arith.constant 0 : index
    %122 = tpu.strided_load %arg7[%c162, %c0_84] {strides = array<i32: 2, 1>} : memref<288x64xf32, #tpu.memory_space<vmem>>, vector<8x64xf32>
    %c163 = arith.constant 163 : index
    %c0_85 = arith.constant 0 : index
    %123 = tpu.strided_load %arg7[%c163, %c0_85] {strides = array<i32: 2, 1>} : memref<288x64xf32, #tpu.memory_space<vmem>>, vector<8x64xf32>
    %124 = arith.maximumf %120, %121 : vector<8x64xf32>
    %125 = arith.maximumf %122, %123 : vector<8x64xf32>
    %126 = arith.maximumf %124, %125 : vector<8x64xf32>
    %c51 = arith.constant 51 : index
    %c0_86 = arith.constant 0 : index
    %127 = vector.load %arg9[%c51, %c0_86] : memref<102x64xf32, #tpu.memory_space<vmem>>, vector<8x64xf32>
    tpu.vector_store %arg9[%c51, %c0_86], %126 {strides = array<i32>} : memref<102x64xf32, #tpu.memory_space<vmem>>, vector<8x64xf32>,
    %c180 = arith.constant 180 : index
    %c0_87 = arith.constant 0 : index
    %128 = tpu.strided_load %arg7[%c180, %c0_87] {strides = array<i32: 2, 1>} : memref<288x64xf32, #tpu.memory_space<vmem>>, vector<8x64xf32>
    %c181 = arith.constant 181 : index
    %c0_88 = arith.constant 0 : index
    %129 = tpu.strided_load %arg7[%c181, %c0_88] {strides = array<i32: 2, 1>} : memref<288x64xf32, #tpu.memory_space<vmem>>, vector<8x64xf32>
    %c198 = arith.constant 198 : index
    %c0_89 = arith.constant 0 : index
    %130 = tpu.strided_load %arg7[%c198, %c0_89] {strides = array<i32: 2, 1>} : memref<288x64xf32, #tpu.memory_space<vmem>>, vector<8x64xf32>
    %c199 = arith.constant 199 : index
    %c0_90 = arith.constant 0 : index
    %131 = tpu.strided_load %arg7[%c199, %c0_90] {strides = array<i32: 2, 1>} : memref<288x64xf32, #tpu.memory_space<vmem>>, vector<8x64xf32>
    %132 = arith.maximumf %128, %129 : vector<8x64xf32>
    %133 = arith.maximumf %130, %131 : vector<8x64xf32>
    %134 = arith.maximumf %132, %133 : vector<8x64xf32>
    %c61 = arith.constant 61 : index
    %c0_91 = arith.constant 0 : index
    %135 = vector.load %arg9[%c61, %c0_91] : memref<102x64xf32, #tpu.memory_space<vmem>>, vector<8x64xf32>
    tpu.vector_store %arg9[%c61, %c0_91], %134 {strides = array<i32>} : memref<102x64xf32, #tpu.memory_space<vmem>>, vector<8x64xf32>,
    %c216 = arith.constant 216 : index
    %c0_92 = arith.constant 0 : index
    %136 = tpu.strided_load %arg7[%c216, %c0_92] {strides = array<i32: 2, 1>} : memref<288x64xf32, #tpu.memory_space<vmem>>, vector<8x64xf32>
    %c217 = arith.constant 217 : index
    %c0_93 = arith.constant 0 : index
    %137 = tpu.strided_load %arg7[%c217, %c0_93] {strides = array<i32: 2, 1>} : memref<288x64xf32, #tpu.memory_space<vmem>>, vector<8x64xf32>
    %c234 = arith.constant 234 : index
    %c0_94 = arith.constant 0 : index
    %138 = tpu.strided_load %arg7[%c234, %c0_94] {strides = array<i32: 2, 1>} : memref<288x64xf32, #tpu.memory_space<vmem>>, vector<8x64xf32>
    %c235 = arith.constant 235 : index
    %c0_95 = arith.constant 0 : index
    %139 = tpu.strided_load %arg7[%c235, %c0_95] {strides = array<i32: 2, 1>} : memref<288x64xf32, #tpu.memory_space<vmem>>, vector<8x64xf32>
    %140 = arith.maximumf %136, %137 : vector<8x64xf32>
    %141 = arith.maximumf %138, %139 : vector<8x64xf32>
    %142 = arith.maximumf %140, %141 : vector<8x64xf32>
    %c71 = arith.constant 71 : index
    %c0_96 = arith.constant 0 : index
    %143 = vector.load %arg9[%c71, %c0_96] : memref<102x64xf32, #tpu.memory_space<vmem>>, vector<8x64xf32>
    tpu.vector_store %arg9[%c71, %c0_96], %142 {strides = array<i32>} : memref<102x64xf32, #tpu.memory_space<vmem>>, vector<8x64xf32>,
    %c252 = arith.constant 252 : index
    %c0_97 = arith.constant 0 : index
    %144 = tpu.strided_load %arg7[%c252, %c0_97] {strides = array<i32: 2, 1>} : memref<288x64xf32, #tpu.memory_space<vmem>>, vector<8x64xf32>
    %c253 = arith.constant 253 : index
    %c0_98 = arith.constant 0 : index
    %145 = tpu.strided_load %arg7[%c253, %c0_98] {strides = array<i32: 2, 1>} : memref<288x64xf32, #tpu.memory_space<vmem>>, vector<8x64xf32>
    %c270 = arith.constant 270 : index
    %c0_99 = arith.constant 0 : index
    %146 = tpu.strided_load %arg7[%c270, %c0_99] {strides = array<i32: 2, 1>} : memref<288x64xf32, #tpu.memory_space<vmem>>, vector<8x64xf32>
    %c271 = arith.constant 271 : index
    %c0_100 = arith.constant 0 : index
    %147 = tpu.strided_load %arg7[%c271, %c0_100] {strides = array<i32: 2, 1>} : memref<288x64xf32, #tpu.memory_space<vmem>>, vector<8x64xf32>
    %148 = arith.maximumf %144, %145 : vector<8x64xf32>
    %149 = arith.maximumf %146, %147 : vector<8x64xf32>
    %150 = arith.maximumf %148, %149 : vector<8x64xf32>
    %c81 = arith.constant 81 : index
    %c0_101 = arith.constant 0 : index
    %151 = vector.load %arg9[%c81, %c0_101] : memref<102x64xf32, #tpu.memory_space<vmem>>, vector<8x64xf32>
    tpu.vector_store %arg9[%c81, %c0_101], %150 {strides = array<i32>} : memref<102x64xf32, #tpu.memory_space<vmem>>, vector<8x64xf32>,
    %c0_102 = arith.constant 0 : index
    %c0_103 = arith.constant 0 : index
    %c0_104 = arith.constant 0 : index
    %152 = vector.load %arg3[%c0_102, %c0_103, %c0_104] : memref<3x576x64xf32, #tpu.memory_space<vmem>>, vector<1x576x64xf32>
    %153 = vector.shape_cast %152 : vector<1x576x64xf32> to vector<576x64xf32>
    %c1_105 = arith.constant 1 : index
    %c0_106 = arith.constant 0 : index
    %c0_107 = arith.constant 0 : index
    %154 = vector.load %arg4[%c1_105, %c0_106, %c0_107] : memref<4x1x64xf32, #tpu.memory_space<vmem>>, vector<1x1x64xf32>
    %155 = vector.shape_cast %154 : vector<1x1x64xf32> to vector<1x64xf32>
    %c1_108 = arith.constant 1 : index
    %c0_109 = arith.constant 0 : index
    %c0_110 = arith.constant 0 : index
    %156 = vector.load %arg5[%c1_108, %c0_109, %c0_110] : memref<4x1x64xf32, #tpu.memory_space<vmem>>, vector<1x1x64xf32>
    %157 = vector.shape_cast %156 : vector<1x1x64xf32> to vector<1x64xf32>
    %c0_111 = arith.constant 0 : index
    %c0_112 = arith.constant 0 : index
    %158 = vector.load %arg9[%c0_111, %c0_112] : memref<102x64xf32, #tpu.memory_space<vmem>>, vector<80x64xf32>
    %c0_113 = arith.constant 0 : index
    %c0_114 = arith.constant 0 : index
    %159 = vector.load %arg8[%c0_113, %c0_114] : memref<80x576xf32, #tpu.memory_space<vmem>>, vector<80x64xf32>
    tpu.vector_store %arg8[%c0_113, %c0_114], %158 {strides = array<i32>} : memref<80x576xf32, #tpu.memory_space<vmem>>, vector<80x64xf32>,
    %c1_115 = arith.constant 1 : index
    %c0_116 = arith.constant 0 : index
    %160 = vector.load %arg9[%c1_115, %c0_116] : memref<102x64xf32, #tpu.memory_space<vmem>>, vector<80x64xf32>
    %c0_117 = arith.constant 0 : index
    %c64 = arith.constant 64 : index
    %161 = vector.load %arg8[%c0_117, %c64] : memref<80x576xf32, #tpu.memory_space<vmem>>, vector<80x64xf32>
    tpu.vector_store %arg8[%c0_117, %c64], %160 {strides = array<i32>} : memref<80x576xf32, #tpu.memory_space<vmem>>, vector<80x64xf32>,
    %c2_118 = arith.constant 2 : index
    %c0_119 = arith.constant 0 : index
    %162 = vector.load %arg9[%c2_118, %c0_119] : memref<102x64xf32, #tpu.memory_space<vmem>>, vector<80x64xf32>
    %c0_120 = arith.constant 0 : index
    %c128 = arith.constant 128 : index
    %163 = vector.load %arg8[%c0_120, %c128] : memref<80x576xf32, #tpu.memory_space<vmem>>, vector<80x64xf32>
    tpu.vector_store %arg8[%c0_120, %c128], %162 {strides = array<i32>} : memref<80x576xf32, #tpu.memory_space<vmem>>, vector<80x64xf32>,
    %c10 = arith.constant 10 : index
    %c0_121 = arith.constant 0 : index
    %164 = vector.load %arg9[%c10, %c0_121] : memref<102x64xf32, #tpu.memory_space<vmem>>, vector<80x64xf32>
    %c0_122 = arith.constant 0 : index
    %c192 = arith.constant 192 : index
    %165 = vector.load %arg8[%c0_122, %c192] : memref<80x576xf32, #tpu.memory_space<vmem>>, vector<80x64xf32>
    tpu.vector_store %arg8[%c0_122, %c192], %164 {strides = array<i32>} : memref<80x576xf32, #tpu.memory_space<vmem>>, vector<80x64xf32>,
    %c11_123 = arith.constant 11 : index
    %c0_124 = arith.constant 0 : index
    %166 = vector.load %arg9[%c11_123, %c0_124] : memref<102x64xf32, #tpu.memory_space<vmem>>, vector<80x64xf32>
    %c0_125 = arith.constant 0 : index
    %c256 = arith.constant 256 : index
    %167 = vector.load %arg8[%c0_125, %c256] : memref<80x576xf32, #tpu.memory_space<vmem>>, vector<80x64xf32>
    tpu.vector_store %arg8[%c0_125, %c256], %166 {strides = array<i32>} : memref<80x576xf32, #tpu.memory_space<vmem>>, vector<80x64xf32>,
    %c12 = arith.constant 12 : index
    %c0_126 = arith.constant 0 : index
    %168 = vector.load %arg9[%c12, %c0_126] : memref<102x64xf32, #tpu.memory_space<vmem>>, vector<80x64xf32>
    %c0_127 = arith.constant 0 : index
    %c320 = arith.constant 320 : index
    %169 = vector.load %arg8[%c0_127, %c320] : memref<80x576xf32, #tpu.memory_space<vmem>>, vector<80x64xf32>
    tpu.vector_store %arg8[%c0_127, %c320], %168 {strides = array<i32>} : memref<80x576xf32, #tpu.memory_space<vmem>>, vector<80x64xf32>,
    %c20_128 = arith.constant 20 : index
    %c0_129 = arith.constant 0 : index
    %170 = vector.load %arg9[%c20_128, %c0_129] : memref<102x64xf32, #tpu.memory_space<vmem>>, vector<80x64xf32>
    %c0_130 = arith.constant 0 : index
    %c384 = arith.constant 384 : index
    %171 = vector.load %arg8[%c0_130, %c384] : memref<80x576xf32, #tpu.memory_space<vmem>>, vector<80x64xf32>
    tpu.vector_store %arg8[%c0_130, %c384], %170 {strides = array<i32>} : memref<80x576xf32, #tpu.memory_space<vmem>>, vector<80x64xf32>,
    %c21_131 = arith.constant 21 : index
    %c0_132 = arith.constant 0 : index
    %172 = vector.load %arg9[%c21_131, %c0_132] : memref<102x64xf32, #tpu.memory_space<vmem>>, vector<80x64xf32>
    %c0_133 = arith.constant 0 : index
    %c448 = arith.constant 448 : index
    %173 = vector.load %arg8[%c0_133, %c448] : memref<80x576xf32, #tpu.memory_space<vmem>>, vector<80x64xf32>
    tpu.vector_store %arg8[%c0_133, %c448], %172 {strides = array<i32>} : memref<80x576xf32, #tpu.memory_space<vmem>>, vector<80x64xf32>,
    %c22 = arith.constant 22 : index
    %c0_134 = arith.constant 0 : index
    %174 = vector.load %arg9[%c22, %c0_134] : memref<102x64xf32, #tpu.memory_space<vmem>>, vector<80x64xf32>
    %c0_135 = arith.constant 0 : index
    %c512 = arith.constant 512 : index
    %175 = vector.load %arg8[%c0_135, %c512] : memref<80x576xf32, #tpu.memory_space<vmem>>, vector<80x64xf32>
    tpu.vector_store %arg8[%c0_135, %c512], %174 {strides = array<i32>} : memref<80x576xf32, #tpu.memory_space<vmem>>, vector<80x64xf32>,
    %c0_136 = arith.constant 0 : index
    %c0_137 = arith.constant 0 : index
    %176 = vector.load %arg8[%c0_136, %c0_137] : memref<80x576xf32, #tpu.memory_space<vmem>>, vector<80x576xf32>
    %cst_138 = arith.constant dense<0.000000e+00> : vector<80x64xf32>
    %177 = tpu.matmul %176, %153, %cst_138 {dimension_numbers = #tpu.dot_dimension_numbers<[1], [0], [0], [1], [0, 0, 1, 1], [], []>} : vector<80x576xf32>, vector<576x64xf32>, vector<80x64xf32> -> vector<80x64xf32>
    %178 = vector.broadcast %155 : vector<1x64xf32> to vector<80x64xf32>
    %179 = arith.mulf %177, %178 : vector<80x64xf32>
    %180 = vector.broadcast %157 : vector<1x64xf32> to vector<80x64xf32>
    %181 = arith.addf %179, %180 : vector<80x64xf32>
    %cst_139 = arith.constant 0.000000e+00 : f32
    %182 = vector.broadcast %cst_139 : f32 to vector<80x64xf32>
    %183 = arith.maximumf %181, %182 : vector<80x64xf32>
    %c0_140 = arith.constant 0 : index
    %c0_141 = arith.constant 0 : index
    %184 = vector.load %arg7[%c0_140, %c0_141] : memref<288x64xf32, #tpu.memory_space<vmem>>, vector<80x64xf32>
    tpu.vector_store %arg7[%c0_140, %c0_141], %183 {strides = array<i32>} : memref<288x64xf32, #tpu.memory_space<vmem>>, vector<80x64xf32>,
    %c0_142 = arith.constant 0 : index
    %c0_143 = arith.constant 0 : index
    %185 = tpu.strided_load %arg7[%c0_142, %c0_143] {strides = array<i32: 2, 1>} : memref<288x64xf32, #tpu.memory_space<vmem>>, vector<4x64xf32>
    %c1_144 = arith.constant 1 : index
    %c0_145 = arith.constant 0 : index
    %186 = tpu.strided_load %arg7[%c1_144, %c0_145] {strides = array<i32: 2, 1>} : memref<288x64xf32, #tpu.memory_space<vmem>>, vector<4x64xf32>
    %c10_146 = arith.constant 10 : index
    %c0_147 = arith.constant 0 : index
    %187 = tpu.strided_load %arg7[%c10_146, %c0_147] {strides = array<i32: 2, 1>} : memref<288x64xf32, #tpu.memory_space<vmem>>, vector<4x64xf32>
    %c11_148 = arith.constant 11 : index
    %c0_149 = arith.constant 0 : index
    %188 = tpu.strided_load %arg7[%c11_148, %c0_149] {strides = array<i32: 2, 1>} : memref<288x64xf32, #tpu.memory_space<vmem>>, vector<4x64xf32>
    %189 = arith.maximumf %185, %186 : vector<4x64xf32>
    %190 = arith.maximumf %187, %188 : vector<4x64xf32>
    %191 = arith.maximumf %189, %190 : vector<4x64xf32>
    %c7_150 = arith.constant 7 : index
    %c0_151 = arith.constant 0 : index
    %192 = vector.load %arg10[%c7_150, %c0_151] : memref<38x64xf32, #tpu.memory_space<vmem>>, vector<4x64xf32>
    tpu.vector_store %arg10[%c7_150, %c0_151], %191 {strides = array<i32>} : memref<38x64xf32, #tpu.memory_space<vmem>>, vector<4x64xf32>,
    %c20_152 = arith.constant 20 : index
    %c0_153 = arith.constant 0 : index
    %193 = tpu.strided_load %arg7[%c20_152, %c0_153] {strides = array<i32: 2, 1>} : memref<288x64xf32, #tpu.memory_space<vmem>>, vector<4x64xf32>
    %c21_154 = arith.constant 21 : index
    %c0_155 = arith.constant 0 : index
    %194 = tpu.strided_load %arg7[%c21_154, %c0_155] {strides = array<i32: 2, 1>} : memref<288x64xf32, #tpu.memory_space<vmem>>, vector<4x64xf32>
    %c30 = arith.constant 30 : index
    %c0_156 = arith.constant 0 : index
    %195 = tpu.strided_load %arg7[%c30, %c0_156] {strides = array<i32: 2, 1>} : memref<288x64xf32, #tpu.memory_space<vmem>>, vector<4x64xf32>
    %c31_157 = arith.constant 31 : index
    %c0_158 = arith.constant 0 : index
    %196 = tpu.strided_load %arg7[%c31_157, %c0_158] {strides = array<i32: 2, 1>} : memref<288x64xf32, #tpu.memory_space<vmem>>, vector<4x64xf32>
    %197 = arith.maximumf %193, %194 : vector<4x64xf32>
    %198 = arith.maximumf %195, %196 : vector<4x64xf32>
    %199 = arith.maximumf %197, %198 : vector<4x64xf32>
    %c13 = arith.constant 13 : index
    %c0_159 = arith.constant 0 : index
    %200 = vector.load %arg10[%c13, %c0_159] : memref<38x64xf32, #tpu.memory_space<vmem>>, vector<4x64xf32>
    tpu.vector_store %arg10[%c13, %c0_159], %199 {strides = array<i32>} : memref<38x64xf32, #tpu.memory_space<vmem>>, vector<4x64xf32>,
    %c40 = arith.constant 40 : index
    %c0_160 = arith.constant 0 : index
    %201 = tpu.strided_load %arg7[%c40, %c0_160] {strides = array<i32: 2, 1>} : memref<288x64xf32, #tpu.memory_space<vmem>>, vector<4x64xf32>
    %c41_161 = arith.constant 41 : index
    %c0_162 = arith.constant 0 : index
    %202 = tpu.strided_load %arg7[%c41_161, %c0_162] {strides = array<i32: 2, 1>} : memref<288x64xf32, #tpu.memory_space<vmem>>, vector<4x64xf32>
    %c50 = arith.constant 50 : index
    %c0_163 = arith.constant 0 : index
    %203 = tpu.strided_load %arg7[%c50, %c0_163] {strides = array<i32: 2, 1>} : memref<288x64xf32, #tpu.memory_space<vmem>>, vector<4x64xf32>
    %c51_164 = arith.constant 51 : index
    %c0_165 = arith.constant 0 : index
    %204 = tpu.strided_load %arg7[%c51_164, %c0_165] {strides = array<i32: 2, 1>} : memref<288x64xf32, #tpu.memory_space<vmem>>, vector<4x64xf32>
    %205 = arith.maximumf %201, %202 : vector<4x64xf32>
    %206 = arith.maximumf %203, %204 : vector<4x64xf32>
    %207 = arith.maximumf %205, %206 : vector<4x64xf32>
    %c19_166 = arith.constant 19 : index
    %c0_167 = arith.constant 0 : index
    %208 = vector.load %arg10[%c19_166, %c0_167] : memref<38x64xf32, #tpu.memory_space<vmem>>, vector<4x64xf32>
    tpu.vector_store %arg10[%c19_166, %c0_167], %207 {strides = array<i32>} : memref<38x64xf32, #tpu.memory_space<vmem>>, vector<4x64xf32>,
    %c60 = arith.constant 60 : index
    %c0_168 = arith.constant 0 : index
    %209 = tpu.strided_load %arg7[%c60, %c0_168] {strides = array<i32: 2, 1>} : memref<288x64xf32, #tpu.memory_space<vmem>>, vector<4x64xf32>
    %c61_169 = arith.constant 61 : index
    %c0_170 = arith.constant 0 : index
    %210 = tpu.strided_load %arg7[%c61_169, %c0_170] {strides = array<i32: 2, 1>} : memref<288x64xf32, #tpu.memory_space<vmem>>, vector<4x64xf32>
    %c70 = arith.constant 70 : index
    %c0_171 = arith.constant 0 : index
    %211 = tpu.strided_load %arg7[%c70, %c0_171] {strides = array<i32: 2, 1>} : memref<288x64xf32, #tpu.memory_space<vmem>>, vector<4x64xf32>
    %c71_172 = arith.constant 71 : index
    %c0_173 = arith.constant 0 : index
    %212 = tpu.strided_load %arg7[%c71_172, %c0_173] {strides = array<i32: 2, 1>} : memref<288x64xf32, #tpu.memory_space<vmem>>, vector<4x64xf32>
    %213 = arith.maximumf %209, %210 : vector<4x64xf32>
    %214 = arith.maximumf %211, %212 : vector<4x64xf32>
    %215 = arith.maximumf %213, %214 : vector<4x64xf32>
    %c25 = arith.constant 25 : index
    %c0_174 = arith.constant 0 : index
    %216 = vector.load %arg10[%c25, %c0_174] : memref<38x64xf32, #tpu.memory_space<vmem>>, vector<4x64xf32>
    tpu.vector_store %arg10[%c25, %c0_174], %215 {strides = array<i32>} : memref<38x64xf32, #tpu.memory_space<vmem>>, vector<4x64xf32>,
    %c1_175 = arith.constant 1 : index
    %c0_176 = arith.constant 0 : index
    %c0_177 = arith.constant 0 : index
    %217 = vector.load %arg3[%c1_175, %c0_176, %c0_177] : memref<3x576x64xf32, #tpu.memory_space<vmem>>, vector<1x576x64xf32>
    %218 = vector.shape_cast %217 : vector<1x576x64xf32> to vector<576x64xf32>
    %c2_178 = arith.constant 2 : index
    %c0_179 = arith.constant 0 : index
    %c0_180 = arith.constant 0 : index
    %219 = vector.load %arg4[%c2_178, %c0_179, %c0_180] : memref<4x1x64xf32, #tpu.memory_space<vmem>>, vector<1x1x64xf32>
    %220 = vector.shape_cast %219 : vector<1x1x64xf32> to vector<1x64xf32>
    %c2_181 = arith.constant 2 : index
    %c0_182 = arith.constant 0 : index
    %c0_183 = arith.constant 0 : index
    %221 = vector.load %arg5[%c2_181, %c0_182, %c0_183] : memref<4x1x64xf32, #tpu.memory_space<vmem>>, vector<1x1x64xf32>
    %222 = vector.shape_cast %221 : vector<1x1x64xf32> to vector<1x64xf32>
    %c0_184 = arith.constant 0 : index
    %c0_185 = arith.constant 0 : index
    %223 = vector.load %arg10[%c0_184, %c0_185] : memref<38x64xf32, #tpu.memory_space<vmem>>, vector<24x64xf32>
    %c0_186 = arith.constant 0 : index
    %c0_187 = arith.constant 0 : index
    %224 = vector.load %arg8[%c0_186, %c0_187] : memref<80x576xf32, #tpu.memory_space<vmem>>, vector<24x64xf32>
    tpu.vector_store %arg8[%c0_186, %c0_187], %223 {strides = array<i32>} : memref<80x576xf32, #tpu.memory_space<vmem>>, vector<24x64xf32>,
    %c1_188 = arith.constant 1 : index
    %c0_189 = arith.constant 0 : index
    %225 = vector.load %arg10[%c1_188, %c0_189] : memref<38x64xf32, #tpu.memory_space<vmem>>, vector<24x64xf32>
    %c0_190 = arith.constant 0 : index
    %c64_191 = arith.constant 64 : index
    %226 = vector.load %arg8[%c0_190, %c64_191] : memref<80x576xf32, #tpu.memory_space<vmem>>, vector<24x64xf32>
    tpu.vector_store %arg8[%c0_190, %c64_191], %225 {strides = array<i32>} : memref<80x576xf32, #tpu.memory_space<vmem>>, vector<24x64xf32>,
    %c2_192 = arith.constant 2 : index
    %c0_193 = arith.constant 0 : index
    %227 = vector.load %arg10[%c2_192, %c0_193] : memref<38x64xf32, #tpu.memory_space<vmem>>, vector<24x64xf32>
    %c0_194 = arith.constant 0 : index
    %c128_195 = arith.constant 128 : index
    %228 = vector.load %arg8[%c0_194, %c128_195] : memref<80x576xf32, #tpu.memory_space<vmem>>, vector<24x64xf32>
    tpu.vector_store %arg8[%c0_194, %c128_195], %227 {strides = array<i32>} : memref<80x576xf32, #tpu.memory_space<vmem>>, vector<24x64xf32>,
    %c6_196 = arith.constant 6 : index
    %c0_197 = arith.constant 0 : index
    %229 = vector.load %arg10[%c6_196, %c0_197] : memref<38x64xf32, #tpu.memory_space<vmem>>, vector<24x64xf32>
    %c0_198 = arith.constant 0 : index
    %c192_199 = arith.constant 192 : index
    %230 = vector.load %arg8[%c0_198, %c192_199] : memref<80x576xf32, #tpu.memory_space<vmem>>, vector<24x64xf32>
    tpu.vector_store %arg8[%c0_198, %c192_199], %229 {strides = array<i32>} : memref<80x576xf32, #tpu.memory_space<vmem>>, vector<24x64xf32>,
    %c7_200 = arith.constant 7 : index
    %c0_201 = arith.constant 0 : index
    %231 = vector.load %arg10[%c7_200, %c0_201] : memref<38x64xf32, #tpu.memory_space<vmem>>, vector<24x64xf32>
    %c0_202 = arith.constant 0 : index
    %c256_203 = arith.constant 256 : index
    %232 = vector.load %arg8[%c0_202, %c256_203] : memref<80x576xf32, #tpu.memory_space<vmem>>, vector<24x64xf32>
    tpu.vector_store %arg8[%c0_202, %c256_203], %231 {strides = array<i32>} : memref<80x576xf32, #tpu.memory_space<vmem>>, vector<24x64xf32>,
    %c8_204 = arith.constant 8 : index
    %c0_205 = arith.constant 0 : index
    %233 = vector.load %arg10[%c8_204, %c0_205] : memref<38x64xf32, #tpu.memory_space<vmem>>, vector<24x64xf32>
    %c0_206 = arith.constant 0 : index
    %c320_207 = arith.constant 320 : index
    %234 = vector.load %arg8[%c0_206, %c320_207] : memref<80x576xf32, #tpu.memory_space<vmem>>, vector<24x64xf32>
    tpu.vector_store %arg8[%c0_206, %c320_207], %233 {strides = array<i32>} : memref<80x576xf32, #tpu.memory_space<vmem>>, vector<24x64xf32>,
    %c12_208 = arith.constant 12 : index
    %c0_209 = arith.constant 0 : index
    %235 = vector.load %arg10[%c12_208, %c0_209] : memref<38x64xf32, #tpu.memory_space<vmem>>, vector<24x64xf32>
    %c0_210 = arith.constant 0 : index
    %c384_211 = arith.constant 384 : index
    %236 = vector.load %arg8[%c0_210, %c384_211] : memref<80x576xf32, #tpu.memory_space<vmem>>, vector<24x64xf32>
    tpu.vector_store %arg8[%c0_210, %c384_211], %235 {strides = array<i32>} : memref<80x576xf32, #tpu.memory_space<vmem>>, vector<24x64xf32>,
    %c13_212 = arith.constant 13 : index
    %c0_213 = arith.constant 0 : index
    %237 = vector.load %arg10[%c13_212, %c0_213] : memref<38x64xf32, #tpu.memory_space<vmem>>, vector<24x64xf32>
    %c0_214 = arith.constant 0 : index
    %c448_215 = arith.constant 448 : index
    %238 = vector.load %arg8[%c0_214, %c448_215] : memref<80x576xf32, #tpu.memory_space<vmem>>, vector<24x64xf32>
    tpu.vector_store %arg8[%c0_214, %c448_215], %237 {strides = array<i32>} : memref<80x576xf32, #tpu.memory_space<vmem>>, vector<24x64xf32>,
    %c14 = arith.constant 14 : index
    %c0_216 = arith.constant 0 : index
    %239 = vector.load %arg10[%c14, %c0_216] : memref<38x64xf32, #tpu.memory_space<vmem>>, vector<24x64xf32>
    %c0_217 = arith.constant 0 : index
    %c512_218 = arith.constant 512 : index
    %240 = vector.load %arg8[%c0_217, %c512_218] : memref<80x576xf32, #tpu.memory_space<vmem>>, vector<24x64xf32>
    tpu.vector_store %arg8[%c0_217, %c512_218], %239 {strides = array<i32>} : memref<80x576xf32, #tpu.memory_space<vmem>>, vector<24x64xf32>,
    %c0_219 = arith.constant 0 : index
    %c0_220 = arith.constant 0 : index
    %241 = vector.load %arg8[%c0_219, %c0_220] : memref<80x576xf32, #tpu.memory_space<vmem>>, vector<24x576xf32>
    %cst_221 = arith.constant dense<0.000000e+00> : vector<24x64xf32>
    %242 = tpu.matmul %241, %218, %cst_221 {dimension_numbers = #tpu.dot_dimension_numbers<[1], [0], [0], [1], [0, 0, 1, 1], [], []>} : vector<24x576xf32>, vector<576x64xf32>, vector<24x64xf32> -> vector<24x64xf32>
    %243 = vector.broadcast %220 : vector<1x64xf32> to vector<24x64xf32>
    %244 = arith.mulf %242, %243 : vector<24x64xf32>
    %245 = vector.broadcast %222 : vector<1x64xf32> to vector<24x64xf32>
    %246 = arith.addf %244, %245 : vector<24x64xf32>
    %cst_222 = arith.constant 0.000000e+00 : f32
    %247 = vector.broadcast %cst_222 : f32 to vector<24x64xf32>
    %248 = arith.maximumf %246, %247 : vector<24x64xf32>
    %c0_223 = arith.constant 0 : index
    %c0_224 = arith.constant 0 : index
    %249 = vector.load %arg7[%c0_223, %c0_224] : memref<288x64xf32, #tpu.memory_space<vmem>>, vector<24x64xf32>
    tpu.vector_store %arg7[%c0_223, %c0_224], %248 {strides = array<i32>} : memref<288x64xf32, #tpu.memory_space<vmem>>, vector<24x64xf32>,
    %c0_225 = arith.constant 0 : index
    %c0_226 = arith.constant 0 : index
    %250 = tpu.strided_load %arg7[%c0_225, %c0_226] {strides = array<i32: 2, 1>} : memref<288x64xf32, #tpu.memory_space<vmem>>, vector<2x64xf32>
    %c1_227 = arith.constant 1 : index
    %c0_228 = arith.constant 0 : index
    %251 = tpu.strided_load %arg7[%c1_227, %c0_228] {strides = array<i32: 2, 1>} : memref<288x64xf32, #tpu.memory_space<vmem>>, vector<2x64xf32>
    %c6_229 = arith.constant 6 : index
    %c0_230 = arith.constant 0 : index
    %252 = tpu.strided_load %arg7[%c6_229, %c0_230] {strides = array<i32: 2, 1>} : memref<288x64xf32, #tpu.memory_space<vmem>>, vector<2x64xf32>
    %c7_231 = arith.constant 7 : index
    %c0_232 = arith.constant 0 : index
    %253 = tpu.strided_load %arg7[%c7_231, %c0_232] {strides = array<i32: 2, 1>} : memref<288x64xf32, #tpu.memory_space<vmem>>, vector<2x64xf32>
    %254 = arith.maximumf %250, %251 : vector<2x64xf32>
    %255 = arith.maximumf %252, %253 : vector<2x64xf32>
    %256 = arith.maximumf %254, %255 : vector<2x64xf32>
    %c5_233 = arith.constant 5 : index
    %c0_234 = arith.constant 0 : index
    %257 = vector.load %arg11[%c5_233, %c0_234] : memref<18x64xf32, #tpu.memory_space<vmem>>, vector<2x64xf32>
    tpu.vector_store %arg11[%c5_233, %c0_234], %256 {strides = array<i32>} : memref<18x64xf32, #tpu.memory_space<vmem>>, vector<2x64xf32>,
    %c12_235 = arith.constant 12 : index
    %c0_236 = arith.constant 0 : index
    %258 = tpu.strided_load %arg7[%c12_235, %c0_236] {strides = array<i32: 2, 1>} : memref<288x64xf32, #tpu.memory_space<vmem>>, vector<2x64xf32>
    %c13_237 = arith.constant 13 : index
    %c0_238 = arith.constant 0 : index
    %259 = tpu.strided_load %arg7[%c13_237, %c0_238] {strides = array<i32: 2, 1>} : memref<288x64xf32, #tpu.memory_space<vmem>>, vector<2x64xf32>
    %c18_239 = arith.constant 18 : index
    %c0_240 = arith.constant 0 : index
    %260 = tpu.strided_load %arg7[%c18_239, %c0_240] {strides = array<i32: 2, 1>} : memref<288x64xf32, #tpu.memory_space<vmem>>, vector<2x64xf32>
    %c19_241 = arith.constant 19 : index
    %c0_242 = arith.constant 0 : index
    %261 = tpu.strided_load %arg7[%c19_241, %c0_242] {strides = array<i32: 2, 1>} : memref<288x64xf32, #tpu.memory_space<vmem>>, vector<2x64xf32>
    %262 = arith.maximumf %258, %259 : vector<2x64xf32>
    %263 = arith.maximumf %260, %261 : vector<2x64xf32>
    %264 = arith.maximumf %262, %263 : vector<2x64xf32>
    %c9 = arith.constant 9 : index
    %c0_243 = arith.constant 0 : index
    %265 = vector.load %arg11[%c9, %c0_243] : memref<18x64xf32, #tpu.memory_space<vmem>>, vector<2x64xf32>
    tpu.vector_store %arg11[%c9, %c0_243], %264 {strides = array<i32>} : memref<18x64xf32, #tpu.memory_space<vmem>>, vector<2x64xf32>,
    %c2_244 = arith.constant 2 : index
    %c0_245 = arith.constant 0 : index
    %c0_246 = arith.constant 0 : index
    %266 = vector.load %arg3[%c2_244, %c0_245, %c0_246] : memref<3x576x64xf32, #tpu.memory_space<vmem>>, vector<1x576x64xf32>
    %267 = vector.shape_cast %266 : vector<1x576x64xf32> to vector<576x64xf32>
    %c3_247 = arith.constant 3 : index
    %c0_248 = arith.constant 0 : index
    %c0_249 = arith.constant 0 : index
    %268 = vector.load %arg4[%c3_247, %c0_248, %c0_249] : memref<4x1x64xf32, #tpu.memory_space<vmem>>, vector<1x1x64xf32>
    %269 = vector.shape_cast %268 : vector<1x1x64xf32> to vector<1x64xf32>
    %c3_250 = arith.constant 3 : index
    %c0_251 = arith.constant 0 : index
    %c0_252 = arith.constant 0 : index
    %270 = vector.load %arg5[%c3_250, %c0_251, %c0_252] : memref<4x1x64xf32, #tpu.memory_space<vmem>>, vector<1x1x64xf32>
    %271 = vector.shape_cast %270 : vector<1x1x64xf32> to vector<1x64xf32>
    %c0_253 = arith.constant 0 : index
    %c0_254 = arith.constant 0 : index
    %272 = vector.load %arg11[%c0_253, %c0_254] : memref<18x64xf32, #tpu.memory_space<vmem>>, vector<8x64xf32>
    %c0_255 = arith.constant 0 : index
    %c0_256 = arith.constant 0 : index
    %273 = vector.load %arg8[%c0_255, %c0_256] : memref<80x576xf32, #tpu.memory_space<vmem>>, vector<8x64xf32>
    tpu.vector_store %arg8[%c0_255, %c0_256], %272 {strides = array<i32>} : memref<80x576xf32, #tpu.memory_space<vmem>>, vector<8x64xf32>,
    %c1_257 = arith.constant 1 : index
    %c0_258 = arith.constant 0 : index
    %274 = vector.load %arg11[%c1_257, %c0_258] : memref<18x64xf32, #tpu.memory_space<vmem>>, vector<8x64xf32>
    %c0_259 = arith.constant 0 : index
    %c64_260 = arith.constant 64 : index
    %275 = vector.load %arg8[%c0_259, %c64_260] : memref<80x576xf32, #tpu.memory_space<vmem>>, vector<8x64xf32>
    tpu.vector_store %arg8[%c0_259, %c64_260], %274 {strides = array<i32>} : memref<80x576xf32, #tpu.memory_space<vmem>>, vector<8x64xf32>,
    %c2_261 = arith.constant 2 : index
    %c0_262 = arith.constant 0 : index
    %276 = vector.load %arg11[%c2_261, %c0_262] : memref<18x64xf32, #tpu.memory_space<vmem>>, vector<8x64xf32>
    %c0_263 = arith.constant 0 : index
    %c128_264 = arith.constant 128 : index
    %277 = vector.load %arg8[%c0_263, %c128_264] : memref<80x576xf32, #tpu.memory_space<vmem>>, vector<8x64xf32>
    tpu.vector_store %arg8[%c0_263, %c128_264], %276 {strides = array<i32>} : memref<80x576xf32, #tpu.memory_space<vmem>>, vector<8x64xf32>,
    %c4_265 = arith.constant 4 : index
    %c0_266 = arith.constant 0 : index
    %278 = vector.load %arg11[%c4_265, %c0_266] : memref<18x64xf32, #tpu.memory_space<vmem>>, vector<8x64xf32>
    %c0_267 = arith.constant 0 : index
    %c192_268 = arith.constant 192 : index
    %279 = vector.load %arg8[%c0_267, %c192_268] : memref<80x576xf32, #tpu.memory_space<vmem>>, vector<8x64xf32>
    tpu.vector_store %arg8[%c0_267, %c192_268], %278 {strides = array<i32>} : memref<80x576xf32, #tpu.memory_space<vmem>>, vector<8x64xf32>,
    %c5_269 = arith.constant 5 : index
    %c0_270 = arith.constant 0 : index
    %280 = vector.load %arg11[%c5_269, %c0_270] : memref<18x64xf32, #tpu.memory_space<vmem>>, vector<8x64xf32>
    %c0_271 = arith.constant 0 : index
    %c256_272 = arith.constant 256 : index
    %281 = vector.load %arg8[%c0_271, %c256_272] : memref<80x576xf32, #tpu.memory_space<vmem>>, vector<8x64xf32>
    tpu.vector_store %arg8[%c0_271, %c256_272], %280 {strides = array<i32>} : memref<80x576xf32, #tpu.memory_space<vmem>>, vector<8x64xf32>,
    %c6_273 = arith.constant 6 : index
    %c0_274 = arith.constant 0 : index
    %282 = vector.load %arg11[%c6_273, %c0_274] : memref<18x64xf32, #tpu.memory_space<vmem>>, vector<8x64xf32>
    %c0_275 = arith.constant 0 : index
    %c320_276 = arith.constant 320 : index
    %283 = vector.load %arg8[%c0_275, %c320_276] : memref<80x576xf32, #tpu.memory_space<vmem>>, vector<8x64xf32>
    tpu.vector_store %arg8[%c0_275, %c320_276], %282 {strides = array<i32>} : memref<80x576xf32, #tpu.memory_space<vmem>>, vector<8x64xf32>,
    %c8_277 = arith.constant 8 : index
    %c0_278 = arith.constant 0 : index
    %284 = vector.load %arg11[%c8_277, %c0_278] : memref<18x64xf32, #tpu.memory_space<vmem>>, vector<8x64xf32>
    %c0_279 = arith.constant 0 : index
    %c384_280 = arith.constant 384 : index
    %285 = vector.load %arg8[%c0_279, %c384_280] : memref<80x576xf32, #tpu.memory_space<vmem>>, vector<8x64xf32>
    tpu.vector_store %arg8[%c0_279, %c384_280], %284 {strides = array<i32>} : memref<80x576xf32, #tpu.memory_space<vmem>>, vector<8x64xf32>,
    %c9_281 = arith.constant 9 : index
    %c0_282 = arith.constant 0 : index
    %286 = vector.load %arg11[%c9_281, %c0_282] : memref<18x64xf32, #tpu.memory_space<vmem>>, vector<8x64xf32>
    %c0_283 = arith.constant 0 : index
    %c448_284 = arith.constant 448 : index
    %287 = vector.load %arg8[%c0_283, %c448_284] : memref<80x576xf32, #tpu.memory_space<vmem>>, vector<8x64xf32>
    tpu.vector_store %arg8[%c0_283, %c448_284], %286 {strides = array<i32>} : memref<80x576xf32, #tpu.memory_space<vmem>>, vector<8x64xf32>,
    %c10_285 = arith.constant 10 : index
    %c0_286 = arith.constant 0 : index
    %288 = vector.load %arg11[%c10_285, %c0_286] : memref<18x64xf32, #tpu.memory_space<vmem>>, vector<8x64xf32>
    %c0_287 = arith.constant 0 : index
    %c512_288 = arith.constant 512 : index
    %289 = vector.load %arg8[%c0_287, %c512_288] : memref<80x576xf32, #tpu.memory_space<vmem>>, vector<8x64xf32>
    tpu.vector_store %arg8[%c0_287, %c512_288], %288 {strides = array<i32>} : memref<80x576xf32, #tpu.memory_space<vmem>>, vector<8x64xf32>,
    %c0_289 = arith.constant 0 : index
    %c0_290 = arith.constant 0 : index
    %290 = vector.load %arg8[%c0_289, %c0_290] : memref<80x576xf32, #tpu.memory_space<vmem>>, vector<8x576xf32>
    %cst_291 = arith.constant dense<0.000000e+00> : vector<8x64xf32>
    %291 = tpu.matmul %290, %267, %cst_291 {dimension_numbers = #tpu.dot_dimension_numbers<[1], [0], [0], [1], [0, 0, 1, 1], [], []>} : vector<8x576xf32>, vector<576x64xf32>, vector<8x64xf32> -> vector<8x64xf32>
    %292 = vector.broadcast %269 : vector<1x64xf32> to vector<8x64xf32>
    %293 = arith.mulf %291, %292 : vector<8x64xf32>
    %294 = vector.broadcast %271 : vector<1x64xf32> to vector<8x64xf32>
    %295 = arith.addf %293, %294 : vector<8x64xf32>
    %cst_292 = arith.constant 0.000000e+00 : f32
    %296 = vector.broadcast %cst_292 : f32 to vector<8x64xf32>
    %297 = arith.maximumf %295, %296 : vector<8x64xf32>
    %c0_293 = arith.constant 0 : index
    %c0_294 = arith.constant 0 : index
    %298 = vector.load %arg7[%c0_293, %c0_294] : memref<288x64xf32, #tpu.memory_space<vmem>>, vector<8x64xf32>
    tpu.vector_store %arg7[%c0_293, %c0_294], %297 {strides = array<i32>} : memref<288x64xf32, #tpu.memory_space<vmem>>, vector<8x64xf32>,
    %c0_295 = arith.constant 0 : index
    %c0_296 = arith.constant 0 : index
    %299 = vector.load %arg7[%c0_295, %c0_296] : memref<288x64xf32, #tpu.memory_space<vmem>>, vector<1x64xf32>
    %c1_297 = arith.constant 1 : index
    %c0_298 = arith.constant 0 : index
    %300 = vector.load %arg7[%c1_297, %c0_298] : memref<288x64xf32, #tpu.memory_space<vmem>>, vector<1x64xf32>
    %c4_299 = arith.constant 4 : index
    %c0_300 = arith.constant 0 : index
    %301 = vector.load %arg7[%c4_299, %c0_300] : memref<288x64xf32, #tpu.memory_space<vmem>>, vector<1x64xf32>
    %c5_301 = arith.constant 5 : index
    %c0_302 = arith.constant 0 : index
    %302 = vector.load %arg7[%c5_301, %c0_302] : memref<288x64xf32, #tpu.memory_space<vmem>>, vector<1x64xf32>
    %303 = arith.maximumf %299, %300 : vector<1x64xf32>
    %304 = arith.maximumf %301, %302 : vector<1x64xf32>
    %305 = arith.maximumf %303, %304 : vector<1x64xf32>
    %c0_303 = arith.constant 0 : index
    %c0_304 = arith.constant 0 : index
    %c0_305 = arith.constant 0 : index
    %306 = vector.load %arg6[%c0_303, %c0_304, %c0_305] : memref<1x1x64xf32, #tpu.memory_space<vmem>>, vector<1x1x64xf32>
    %307 = vector.shape_cast %306 : vector<1x1x64xf32> to vector<1x64xf32>
    %308 = vector.shape_cast %305 : vector<1x64xf32> to vector<1x1x64xf32>
    tpu.vector_store %arg6[%c0_303, %c0_304, %c0_305], %308 {strides = array<i32>} : memref<1x1x64xf32, #tpu.memory_space<vmem>>, vector<1x1x64xf32>,
    return
  }
  func.func @transform_0(%arg0: i32) -> (i32, i32, i32) {
    %c0_i32 = arith.constant 0 : i32
    %c0_i32_0 = arith.constant 0 : i32
    %c0_i32_1 = arith.constant 0 : i32
    return %arg0, %c0_i32, %c0_i32_0 : i32, i32, i32
  }
  func.func @transform_1(%arg0: i32) -> (i32, i32, i32) {
    %c0_i32 = arith.constant 0 : i32
    %c0_i32_0 = arith.constant 0 : i32
    %c0_i32_1 = arith.constant 0 : i32
    %c0_i32_2 = arith.constant 0 : i32
    return %c0_i32, %c0_i32_0, %c0_i32_1 : i32, i32, i32
  }
  func.func @transform_2(%arg0: i32) -> (i32, i32, i32) {
    %c0_i32 = arith.constant 0 : i32
    %c0_i32_0 = arith.constant 0 : i32
    %c0_i32_1 = arith.constant 0 : i32
    %c0_i32_2 = arith.constant 0 : i32
    return %c0_i32, %c0_i32_0, %c0_i32_1 : i32, i32, i32
  }
  func.func @transform_3(%arg0: i32) -> (i32, i32, i32) {
    %c0_i32 = arith.constant 0 : i32
    %c0_i32_0 = arith.constant 0 : i32
    %c0_i32_1 = arith.constant 0 : i32
    %c0_i32_2 = arith.constant 0 : i32
    return %c0_i32, %c0_i32_0, %c0_i32_1 : i32, i32, i32
  }
  func.func @transform_4(%arg0: i32) -> (i32, i32, i32) {
    %c0_i32 = arith.constant 0 : i32
    %c0_i32_0 = arith.constant 0 : i32
    %c0_i32_1 = arith.constant 0 : i32
    %c0_i32_2 = arith.constant 0 : i32
    return %c0_i32, %c0_i32_0, %c0_i32_1 : i32, i32, i32
  }
  func.func @transform_5(%arg0: i32) -> (i32, i32, i32) {
    %c0_i32 = arith.constant 0 : i32
    %c0_i32_0 = arith.constant 0 : i32
    %c0_i32_1 = arith.constant 0 : i32
    return %arg0, %c0_i32, %c0_i32_0 : i32, i32, i32
  }
}

</mosaic_0001>

<llo_original>
// kernel: cnn_block_forward.1
$region0: #{cnn_block_forward.1}
  #allocation0 [shape = 'u32[]', space=smem, size = 0x4, offset = 0x4, fixed_abs, tag = 'smem constant byte address 0x4 - core index']
  #allocation1 [shape = 'u32[72,128]{1,0:T(1,128)}', space=vmem, size = 0x9000, scoped, tag = 'internal scratch']
  #allocation2 [shape = 'f32[288,64]{1,0:T(8,128)}', space=vmem, size = 0x24000, scoped, tag = 'scratch operand']
  #allocation3 [shape = 'f32[80,576]{1,0:T(8,128)}', space=vmem, size = 0x32000, scoped, tag = 'scratch operand']
  #allocation4 [shape = 'f32[102,64]{1,0:T(8,128)}', space=vmem, size = 0xd000, scoped, tag = 'scratch operand']
  #allocation5 [shape = 'f32[38,64]{1,0:T(8,128)}', space=vmem, size = 0x5000, scoped, tag = 'scratch operand']
  #allocation6 [shape = 'f32[18,64]{1,0:T(8,128)}', space=vmem, size = 0x3000, scoped, tag = 'scratch operand']
  %s0 = inlined_call_operand.vmem [shape: f32[2,326,1], index: 0, kind: input, shape index: {}]
  %s1 = inlined_call_operand.vmem [shape: f32[9,1,64], index: 1, kind: input, shape index: {}]
  %s2 = inlined_call_operand.vmem [shape: f32[3,576,64], index: 2, kind: input, shape index: {}]
  %s3 = inlined_call_operand.vmem [shape: f32[4,1,64], index: 3, kind: input, shape index: {}]
  %s4 = inlined_call_operand.vmem [shape: f32[4,1,64], index: 4, kind: input, shape index: {}]
  %s5 = inlined_call_operand.hbm [shape: f32[2,1,64], index: 5, kind: output, shape index: {}]
  %s6 = sld [smem:[#allocation0]]
  $region53: #{cnn_block_forward.1} parent=0
    _
  %s8 = ssub.s32 1, %s6
  %s9 = scalar_select 0, %s8, %s6
  $region1: #{cnn_block_forward.1} parent=0
    #allocation7 [shape = 'u8[1024]{0}', space=vmem, size = 0x400, scoped, tag = 'output window, operand 0']
    #allocation8 [shape = 's32[2]{0}', space=sflag, size = 0x8, scoped, tag = 'scoped memory for cnn_block_forward.1']
    %10 = vsyncpa [#allocation8], 0
    %s11 = scalar_lea.sflag [#allocation8], 1
    %12 = vsyncpa %s11, 0
    loop: start=0, step=1, limit=4
    $region2: #{cnn_block_forward.1} parent=1 // loop_pre_header
      _
    $region3: #{cnn_block_forward.1} parent=1 // loop_header
      %s14 = sphi 0, %s18
      %p15 = scmp.ge.s32.totalorder %s14, 4
      %s24 = sphi 0, %s26
      %s27 = sphi 0, %s24
      %s28 = sphi 0, %s27
      %s44 = sphi 0, %s28
      %s48 = sphi 0, %s48
      %s50 = sphi 0, %s48
      %s51 = sphi 0, %s50
      %s65 = sphi 0, %s51
      %s69 = sphi 0, %s69
      %s71 = sphi 0, %s69
      %s72 = sphi 0, %s71
      %s86 = sphi 0, %s72
      %s90 = sphi 0, %s90
      %s92 = sphi 0, %s90
      %s93 = sphi 0, %s92
      %s107 = sphi 0, %s93
      %s111 = sphi 0, %s111
      %s113 = sphi 0, %s111
      %s114 = sphi 0, %s113
      %s128 = sphi 0, %s114
      %s134 = sphi 0, %s136
      %s137 = sphi 0, %s134
      %s138 = sphi 0, %s137
      %s154 = sphi 0, %s138
    $region4: #{cnn_block_forward.1} parent=1 // loop_header_branch
      %17 = sbr.rel (%p15) target = $region8
    $region5: #{cnn_block_forward.1} parent=1 // loop_body
      %s19 = ssub.s32 %s14, 1
      %s20 = ssub.s32 %s14, 2
      %s21 = sadd.s32 %s14, 1
      %s22 = ssub.s32 %s14, %s21
      %p23 = scmp.eq.s32.totalorder %s22, 0
      %s25 = sadd.s32 %s24, 1
      %s26 = scalar_select %p23, %s24, %s25
      %p29 = pneg %p23
      %p30 = scmp.eq.s32.totalorder %s14, 1
      %p31 = por %p29, %p30
      %p32 = scmp.ne.s32.totalorder %s24, %s27
      %p33 = scmp.eq.s32.totalorder %s14, 0
      %p34 = por %p32, %p33
      %p35 = scmp.ne.s32.totalorder %s24, %s27
      %p36 = scmp.eq.s32.totalorder %s19, 1
      %p37 = por %p35, %p36
      %p38 = scmp.ne.s32.totalorder %s27, %s28
      %p39 = scmp.eq.s32.totalorder %s19, 0
      %p40 = por %p38, %p39
      %p41 = scmp.ne.s32.totalorder %s27, %s28
      %p42 = scmp.eq.s32.totalorder %s20, 1
      %p43 = por %p41, %p42
      %p45 = scmp.ne.s32.totalorder %s28, %s44
      %p46 = scmp.eq.s32.totalorder %s20, 0
      %p47 = por %p45, %p46
      %s49 = sadd.s32 %s48, 1
      %p52 = scmp.eq.s32.totalorder %s14, 1
      %p53 = scmp.ne.s32.totalorder %s48, %s50
      %p54 = scmp.eq.s32.totalorder %s14, 0
      %p55 = por %p53, %p54
      %p56 = scmp.ne.s32.totalorder %s48, %s50
      %p57 = scmp.eq.s32.totalorder %s19, 1
      %p58 = por %p56, %p57
      %p59 = scmp.ne.s32.totalorder %s50, %s51
      %p60 = scmp.eq.s32.totalorder %s19, 0
      %p61 = por %p59, %p60
      %p62 = scmp.ne.s32.totalorder %s50, %s51
      %p63 = scmp.eq.s32.totalorder %s20, 1
      %p64 = por %p62, %p63
      %p66 = scmp.ne.s32.totalorder %s51, %s65
      %p67 = scmp.eq.s32.totalorder %s20, 0
      %p68 = por %p66, %p67
      %s70 = sadd.s32 %s69, 1
      %p73 = scmp.eq.s32.totalorder %s14, 1
      %p74 = scmp.ne.s32.totalorder %s69, %s71
      %p75 = scmp.eq.s32.totalorder %s14, 0
      %p76 = por %p74, %p75
      %p77 = scmp.ne.s32.totalorder %s69, %s71
      %p78 = scmp.eq.s32.totalorder %s19, 1
      %p79 = por %p77, %p78
      %p80 = scmp.ne.s32.totalorder %s71, %s72
      %p81 = scmp.eq.s32.totalorder %s19, 0
      %p82 = por %p80, %p81
      %p83 = scmp.ne.s32.totalorder %s71, %s72
      %p84 = scmp.eq.s32.totalorder %s20, 1
      %p85 = por %p83, %p84
      %p87 = scmp.ne.s32.totalorder %s72, %s86
      %p88 = scmp.eq.s32.totalorder %s20, 0
      %p89 = por %p87, %p88
      %s91 = sadd.s32 %s90, 1
      %p94 = scmp.eq.s32.totalorder %s14, 1
      %p95 = scmp.ne.s32.totalorder %s90, %s92
      %p96 = scmp.eq.s32.totalorder %s14, 0
      %p97 = por %p95, %p96
      %p98 = scmp.ne.s32.totalorder %s90, %s92
      %p99 = scmp.eq.s32.totalorder %s19, 1
      %p100 = por %p98, %p99
      %p101 = scmp.ne.s32.totalorder %s92, %s93
      %p102 = scmp.eq.s32.totalorder %s19, 0
      %p103 = por %p101, %p102
      %p104 = scmp.ne.s32.totalorder %s92, %s93
      %p105 = scmp.eq.s32.totalorder %s20, 1
      %p106 = por %p104, %p105
      %p108 = scmp.ne.s32.totalorder %s93, %s107
      %p109 = scmp.eq.s32.totalorder %s20, 0
      %p110 = por %p108, %p109
      %s112 = sadd.s32 %s111, 1
      %p115 = scmp.eq.s32.totalorder %s14, 1
      %p116 = scmp.ne.s32.totalorder %s111, %s113
      %p117 = scmp.eq.s32.totalorder %s14, 0
      %p118 = por %p116, %p117
      %p119 = scmp.ne.s32.totalorder %s111, %s113
      %p120 = scmp.eq.s32.totalorder %s19, 1
      %p121 = por %p119, %p120
      %p122 = scmp.ne.s32.totalorder %s113, %s114
      %p123 = scmp.eq.s32.totalorder %s19, 0
      %p124 = por %p122, %p123
      %p125 = scmp.ne.s32.totalorder %s113, %s114
      %p126 = scmp.eq.s32.totalorder %s20, 1
      %p127 = por %p125, %p126
      %p129 = scmp.ne.s32.totalorder %s114, %s128
      %p130 = scmp.eq.s32.totalorder %s20, 0
      %p131 = por %p129, %p130
      %s132 = ssub.s32 %s14, %s21
      %p133 = scmp.eq.s32.totalorder %s132, 0
      %s135 = sadd.s32 %s134, 1
      %s136 = scalar_select %p133, %s134, %s135
      %p139 = pneg %p133
      %p140 = scmp.eq.s32.totalorder %s14, 1
      %p141 = por %p139, %p140
      %p142 = scmp.ne.s32.totalorder %s134, %s137
      %p143 = scmp.eq.s32.totalorder %s14, 0
      %p144 = por %p142, %p143
      %p145 = scmp.ne.s32.totalorder %s134, %s137
      %p146 = scmp.eq.s32.totalorder %s19, 1
      %p147 = por %p145, %p146
      %p148 = scmp.ne.s32.totalorder %s137, %s138
      %p149 = scmp.eq.s32.totalorder %s19, 0
      %p150 = por %p148, %p149
      %p151 = scmp.ne.s32.totalorder %s137, %s138
      %p152 = scmp.eq.s32.totalorder %s20, 1
      %p153 = por %p151, %p152
      %p155 = scmp.ne.s32.totalorder %s138, %s154
      %p156 = scmp.eq.s32.totalorder %s20, 0
      %p157 = por %p155, %p156
      %p158 = scmp.le.s32.totalorder 1, %s14
      %p159 = scmp.lt.s32.totalorder %s14, 3
      %p160 = pnand %p158, %p159
      %p161 = pneg %p160
      // Predicated region
      $region9: #{cnn_block_forward.1} parent=5 // pred_check
        _
      $region10: #{cnn_block_forward.1} parent=5 // pred_check_branch
        %163 = sbr.rel (%p160) target = $region12
      $region11: #{cnn_block_forward.1} parent=5 // pred_region
        %s164 = ssub.s32 %s14, 1
        // Predicated region
        $region13: #{cnn_block_forward.1} parent=11 // pred_check
          %p165 = pneg %p61
        $region14: #{cnn_block_forward.1} parent=11 // pred_check_branch
          %167 = sbr.rel (%p165) target = $region16
        $region15: #{cnn_block_forward.1} parent=11 // pred_region
          _
        $region16: #{cnn_block_forward.1} parent=11 // pred_fallthru
          _
        // Predicated region
        $region17: #{cnn_block_forward.1} parent=11 // pred_check
          %p168 = pneg %p82
        $region18: #{cnn_block_forward.1} parent=11 // pred_check_branch
          %170 = sbr.rel (%p168) target = $region20
        $region19: #{cnn_block_forward.1} parent=11 // pred_region
          _
        $region20: #{cnn_block_forward.1} parent=11 // pred_fallthru
          _
        // Predicated region
        $region21: #{cnn_block_forward.1} parent=11 // pred_check
          %p171 = pneg %p103
        $region22: #{cnn_block_forward.1} parent=11 // pred_check_branch
          %173 = sbr.rel (%p171) target = $region24
        $region23: #{cnn_block_forward.1} parent=11 // pred_region
          _
        $region24: #{cnn_block_forward.1} parent=11 // pred_fallthru
          _
        // Predicated region
        $region25: #{cnn_block_forward.1} parent=11 // pred_check
          %p174 = pneg %p124
        $region26: #{cnn_block_forward.1} parent=11 // pred_check_branch
          %176 = sbr.rel (%p174) target = $region28
        $region27: #{cnn_block_forward.1} parent=11 // pred_region
          _
        $region28: #{cnn_block_forward.1} parent=11 // pred_fallthru
          _
      $region12: #{cnn_block_forward.1} parent=5 // pred_fallthru
        _
      %p177 = scmp.lt.s32.totalorder %s14, 2
      // Predicated region
      $region29: #{cnn_block_forward.1} parent=5 // pred_check
        %p178 = pneg %p177
      $region30: #{cnn_block_forward.1} parent=5 // pred_check_branch
        %180 = sbr.rel (%p178) target = $region32
      $region31: #{cnn_block_forward.1} parent=5 // pred_region
        // Predicated region
        $region33: #{cnn_block_forward.1} parent=31 // pred_check
          %p181 = pneg %p34
        $region34: #{cnn_block_forward.1} parent=31 // pred_check_branch
          %183 = sbr.rel (%p181) target = $region36
        $region35: #{cnn_block_forward.1} parent=31 // pred_region
          %p184 = scmp.lt.s32.totalorder %s14, 1
          %s185 = scalar_select %p184, %s14, 1
          %s186 = smul.addr %s185, 41
          %s187 = smul.addr %s186, 8
          %s188 = scalar_lea.vmem %s0, %s187
        $region36: #{cnn_block_forward.1} parent=31 // pred_fallthru
          _
      $region32: #{cnn_block_forward.1} parent=5 // pred_fallthru
        _
      %p189 = scmp.le.s32.totalorder 1, %s14
      %p190 = scmp.lt.s32.totalorder %s14, 3
      %p191 = pnand %p189, %p190
      %p192 = pneg %p191
      // Predicated region
      $region37: #{cnn_block_forward.1} parent=5 // pred_check
        _
      $region38: #{cnn_block_forward.1} parent=5 // pred_check_branch
        %194 = sbr.rel (%p191) target = $region40
      $region39: #{cnn_block_forward.1} parent=5 // pred_region
        %s195 = ssub.s32 %s14, 1
        %p196 = scmp.lt.s32.totalorder %s19, 1
        %s197 = scalar_select %p196, %s19, 1
        %s198 = smul.addr %s197, 41
        %s199 = smul.addr %s198, 8
        %s200 = scalar_lea.vmem %s0, %s199
        %p201 = pneg %p40
        %p202 = pneg %p37
        %p203 = pneg %p61
        %p204 = pneg %p58
        %p205 = pneg %p82
        %p206 = pneg %p79
        %p207 = pneg %p103
        %p208 = pneg %p100
        %p209 = pneg %p124
        %p210 = pneg %p121
        %p211 = pneg %p150
        %p212 = pneg %p147
        %s213 = sand.u32 %s137, 1
        %s214 = scalar_lea.sflag [#allocation8], %s213
        %s215 = sand.u32 %s137, 1
        %s216 = scalar_lea.vmem [#allocation7], %s215
        %p217 = scmp.lt.s32.totalorder %s19, 1
        %s218 = scalar_select %p217, %s19, 1
        %s219 = smul.addr %s218, 41
        %s220 = smul.addr %s219, 8
        %s221 = scalar_lea.vmem %s0, %s220
        %vm222 = vcmask 523264
        %223 = vst.msk [vmem:[#allocation4] sm:$0xff] %vm222, 0.0
        %224 = vst.msk [vmem:[#allocation4 + $0x8] sm:$0xff] %vm222, 0.0
        %225 = vst.msk [vmem:[#allocation4 + $0x10] sm:$0xff] %vm222, 0.0
        %226 = vst.msk [vmem:[#allocation4 + $0x18] sm:$0xff] %vm222, 0.0
        %227 = vst.msk [vmem:[#allocation4 + $0x20] sm:$0xff] %vm222, 0.0
        %228 = vst.msk [vmem:[#allocation4 + $0x28] sm:$0xff] %vm222, 0.0
        %229 = vst.msk [vmem:[#allocation4 + $0x30] sm:$0xff] %vm222, 0.0
        %230 = vst.msk [vmem:[#allocation4 + $0x38] sm:$0xff] %vm222, 0.0
        %231 = vst.msk [vmem:[#allocation4 + $0x40] sm:$0xff] %vm222, 0.0
        %232 = vst.msk [vmem:[#allocation4 + $0x48] sm:$0xff] %vm222, 0.0
        %233 = vst.msk [vmem:[#allocation4 + $0x50] sm:$0xff] %vm222, 0.0
        %234 = vst.msk [vmem:[#allocation4 + $0x58] sm:$0xff] %vm222, 0.0
        %vm235 = vcmask 521216
        %236 = vst.msk [vmem:[#allocation4 + $0x60] sm:$0x3f] %vm235, 0.0
        %237 = vst.msk [vmem:[#allocation5] sm:$0xff] %vm222, 0.0
        %238 = vst.msk [vmem:[#allocation5 + $0x8] sm:$0xff] %vm222, 0.0
        %239 = vst.msk [vmem:[#allocation5 + $0x10] sm:$0xff] %vm222, 0.0
        %240 = vst.msk [vmem:[#allocation5 + $0x18] sm:$0xff] %vm222, 0.0
        %241 = vst.msk [vmem:[#allocation5 + $0x20] sm:$0x3f] %vm235, 0.0
        %242 = vst.msk [vmem:[#allocation6] sm:$0xff] %vm222, 0.0
        %243 = vst.msk [vmem:[#allocation6 + $0x8] sm:$0xff] %vm222, 0.0
        %vm244 = vcmask 517120
        %245 = vst.msk [vmem:[#allocation6 + $0x10] sm:$0x3] %vm244, 0.0
        %v246 = vld [vmem:[%s221] sm:$0xff]
        %v247 = vld [vmem:[%s221 + $0x8] sm:$0xff]
        %v248 = vld [vmem:[%s221 + $0x10] sm:$0xff]
        %v249 = vld [vmem:[%s221 + $0x18] sm:$0xff]
        %v250 = vld [vmem:[%s221 + $0x20] sm:$0xff]
        %v251 = vld [vmem:[%s221 + $0x28] sm:$0xff]
        %v252 = vld [vmem:[%s221 + $0x30] sm:$0xff]
        %v253 = vld [vmem:[%s221 + $0x38] sm:$0xff]
        %v254 = vld [vmem:[%s221 + $0x40] sm:$0xff]
        %v255 = vld [vmem:[%s221 + $0x48] sm:$0xff]
        %v256 = vld [vmem:[%s221 + $0x50] sm:$0xff]
        %v257 = vld [vmem:[%s221 + $0x58] sm:$0xff]
        %v258 = vld [vmem:[%s221 + $0x60] sm:$0xff]
        %v259 = vld [vmem:[%s221 + $0x68] sm:$0xff]
        %v260 = vld [vmem:[%s221 + $0x70] sm:$0xff]
        %v261 = vld [vmem:[%s221 + $0x78] sm:$0xff]
        %v262 = vld [vmem:[%s221 + $0x80] sm:$0xff]
        %v263 = vld [vmem:[%s221 + $0x88] sm:$0xff]
        %v264 = vld [vmem:[%s221 + $0x90] sm:$0xff]
        %v265 = vld [vmem:[%s221 + $0x98] sm:$0xff]
        %v266 = vld [vmem:[%s221 + $0xa0] sm:$0xff]
        %v267 = vld [vmem:[%s221 + $0xa8] sm:$0xff]
        %v268 = vld [vmem:[%s221 + $0xb0] sm:$0xff]
        %v269 = vld [vmem:[%s221 + $0xb8] sm:$0xff]
        %v270 = vld [vmem:[%s221 + $0xc0] sm:$0xff]
        %v271 = vld [vmem:[%s221 + $0xc8] sm:$0xff]
        %v272 = vld [vmem:[%s221 + $0xd0] sm:$0xff]
        %v273 = vld [vmem:[%s221 + $0xd8] sm:$0xff]
        %v274 = vld [vmem:[%s221 + $0xe0] sm:$0xff]
        %v275 = vld [vmem:[%s221 + $0xe8] sm:$0xff]
        %v276 = vld [vmem:[%s221 + $0xf0] sm:$0xff]
        %v277 = vld [vmem:[%s221 + $0xf8] sm:$0xff]
        %v278 = vld [vmem:[%s221 + $0x100] sm:$0xff]
        %v279 = vld [vmem:[%s221 + $0x108] sm:$0xff]
        %v280 = vld [vmem:[%s221 + $0x110] sm:$0xff]
        %v281 = vld [vmem:[%s221 + $0x118] sm:$0xff]
        %v282 = vld [vmem:[%s1] sm:$0x1]
        %284 = vset.pattern.permute.xlu0 0
        %285 = vperm.xlu0 %284, %v246
        %v286 = vpop.permute.xlu0 %285
        %289 = vset.pattern.permute.xlu0 0
        %290 = vperm.xlu0 %289, %v247
        %v291 = vpop.permute.xlu0 %290
        %294 = vset.pattern.permute.xlu0 0
        %295 = vperm.xlu0 %294, %v248
        %v296 = vpop.permute.xlu0 %295
        %299 = vset.pattern.permute.xlu0 0
        %300 = vperm.xlu0 %299, %v249
        %v301 = vpop.permute.xlu0 %300
        %304 = vset.pattern.permute.xlu0 0
        %305 = vperm.xlu0 %304, %v250
        %v306 = vpop.permute.xlu0 %305
        %309 = vset.pattern.permute.xlu0 0
        %310 = vperm.xlu0 %309, %v251
        %v311 = vpop.permute.xlu0 %310
        %314 = vset.pattern.permute.xlu0 0
        %315 = vperm.xlu0 %314, %v252
        %v316 = vpop.permute.xlu0 %315
        %319 = vset.pattern.permute.xlu0 0
        %320 = vperm.xlu0 %319, %v253
        %v321 = vpop.permute.xlu0 %320
        %324 = vset.pattern.permute.xlu0 0
        %325 = vperm.xlu0 %324, %v254
        %v326 = vpop.permute.xlu0 %325
        %329 = vset.pattern.permute.xlu0 0
        %330 = vperm.xlu0 %329, %v255
        %v331 = vpop.permute.xlu0 %330
        %334 = vset.pattern.permute.xlu0 0
        %335 = vperm.xlu0 %334, %v256
        %v336 = vpop.permute.xlu0 %335
        %339 = vset.pattern.permute.xlu0 0
        %340 = vperm.xlu0 %339, %v257
        %v341 = vpop.permute.xlu0 %340
        %344 = vset.pattern.permute.xlu0 0
        %345 = vperm.xlu0 %344, %v258
        %v346 = vpop.permute.xlu0 %345
        %349 = vset.pattern.permute.xlu0 0
        %350 = vperm.xlu0 %349, %v259
        %v351 = vpop.permute.xlu0 %350
        %354 = vset.pattern.permute.xlu0 0
        %355 = vperm.xlu0 %354, %v260
        %v356 = vpop.permute.xlu0 %355
        %359 = vset.pattern.permute.xlu0 0
        %360 = vperm.xlu0 %359, %v261
        %v361 = vpop.permute.xlu0 %360
        %364 = vset.pattern.permute.xlu0 0
        %365 = vperm.xlu0 %364, %v262
        %v366 = vpop.permute.xlu0 %365
        %369 = vset.pattern.permute.xlu0 0
        %370 = vperm.xlu0 %369, %v263
        %v371 = vpop.permute.xlu0 %370
        %374 = vset.pattern.permute.xlu0 0
        %375 = vperm.xlu0 %374, %v264
        %v376 = vpop.permute.xlu0 %375
        %379 = vset.pattern.permute.xlu0 0
        %380 = vperm.xlu0 %379, %v265
        %v381 = vpop.permute.xlu0 %380
        %384 = vset.pattern.permute.xlu0 0
        %385 = vperm.xlu0 %384, %v266
        %v386 = vpop.permute.xlu0 %385
        %389 = vset.pattern.permute.xlu0 0
        %390 = vperm.xlu0 %389, %v267
        %v391 = vpop.permute.xlu0 %390
        %394 = vset.pattern.permute.xlu0 0
        %395 = vperm.xlu0 %394, %v268
        %v396 = vpop.permute.xlu0 %395
        %399 = vset.pattern.permute.xlu0 0
        %400 = vperm.xlu0 %399, %v269
        %v401 = vpop.permute.xlu0 %400
        %404 = vset.pattern.permute.xlu0 0
        %405 = vperm.xlu0 %404, %v270
        %v406 = vpop.permute.xlu0 %405
        %409 = vset.pattern.permute.xlu0 0
        %410 = vperm.xlu0 %409, %v271
        %v411 = vpop.permute.xlu0 %410
        %414 = vset.pattern.permute.xlu0 0
        %415 = vperm.xlu0 %414, %v272
        %v416 = vpop.permute.xlu0 %415
        %419 = vset.pattern.permute.xlu0 0
        %420 = vperm.xlu0 %419, %v273
        %v421 = vpop.permute.xlu0 %420
        %424 = vset.pattern.permute.xlu0 0
        %425 = vperm.xlu0 %424, %v274
        %v426 = vpop.permute.xlu0 %425
        %429 = vset.pattern.permute.xlu0 0
        %430 = vperm.xlu0 %429, %v275
        %v431 = vpop.permute.xlu0 %430
        %434 = vset.pattern.permute.xlu0 0
        %435 = vperm.xlu0 %434, %v276
        %v436 = vpop.permute.xlu0 %435
        %439 = vset.pattern.permute.xlu0 0
        %440 = vperm.xlu0 %439, %v277
        %v441 = vpop.permute.xlu0 %440
        %444 = vset.pattern.permute.xlu0 0
        %445 = vperm.xlu0 %444, %v278
        %v446 = vpop.permute.xlu0 %445
        %449 = vset.pattern.permute.xlu0 0
        %450 = vperm.xlu0 %449, %v279
        %v451 = vpop.permute.xlu0 %450
        %454 = vset.pattern.permute.xlu0 0
        %455 = vperm.xlu0 %454, %v280
        %v456 = vpop.permute.xlu0 %455
        %459 = vset.pattern.permute.xlu0 0
        %460 = vperm.xlu0 %459, %v281
        %v461 = vpop.permute.xlu0 %460
        %v464 = vperm.slane %v282, 0
        %v466 = vmul.f32 %v286, %v464
        %v467 = vmul.f32 %v291, %v464
        %v468 = vmul.f32 %v296, %v464
        %v469 = vmul.f32 %v301, %v464
        %v470 = vmul.f32 %v306, %v464
        %v471 = vmul.f32 %v311, %v464
        %v472 = vmul.f32 %v316, %v464
        %v473 = vmul.f32 %v321, %v464
        %v474 = vmul.f32 %v326, %v464
        %v475 = vmul.f32 %v331, %v464
        %v476 = vmul.f32 %v336, %v464
        %v477 = vmul.f32 %v341, %v464
        %v478 = vmul.f32 %v346, %v464
        %v479 = vmul.f32 %v351, %v464
        %v480 = vmul.f32 %v356, %v464
        %v481 = vmul.f32 %v361, %v464
        %v482 = vmul.f32 %v366, %v464
        %v483 = vmul.f32 %v371, %v464
        %v484 = vmul.f32 %v376, %v464
        %v485 = vmul.f32 %v381, %v464
        %v486 = vmul.f32 %v386, %v464
        %v487 = vmul.f32 %v391, %v464
        %v488 = vmul.f32 %v396, %v464
        %v489 = vmul.f32 %v401, %v464
        %v490 = vmul.f32 %v406, %v464
        %v491 = vmul.f32 %v411, %v464
        %v492 = vmul.f32 %v416, %v464
        %v493 = vmul.f32 %v421, %v464
        %v494 = vmul.f32 %v426, %v464
        %v495 = vmul.f32 %v431, %v464
        %v496 = vmul.f32 %v436, %v464
        %v497 = vmul.f32 %v441, %v464
        %v498 = vmul.f32 %v446, %v464
        %v499 = vmul.f32 %v451, %v464
        %v500 = vmul.f32 %v456, %v464
        %v501 = vmul.f32 %v461, %v464
        %v502 = vld [vmem:[%s221 + $0x1] sm:$0xff]
        %v503 = vld [vmem:[%s221 + $0x9] sm:$0xff]
        %v504 = vld [vmem:[%s221 + $0x11] sm:$0xff]
        %v505 = vld [vmem:[%s221 + $0x19] sm:$0xff]
        %v506 = vld [vmem:[%s221 + $0x21] sm:$0xff]
        %v507 = vld [vmem:[%s221 + $0x29] sm:$0xff]
        %v508 = vld [vmem:[%s221 + $0x31] sm:$0xff]
        %v509 = vld [vmem:[%s221 + $0x39] sm:$0xff]
        %v510 = vld [vmem:[%s221 + $0x41] sm:$0xff]
        %v511 = vld [vmem:[%s221 + $0x49] sm:$0xff]
        %v512 = vld [vmem:[%s221 + $0x51] sm:$0xff]
        %v513 = vld [vmem:[%s221 + $0x59] sm:$0xff]
        %v514 = vld [vmem:[%s221 + $0x61] sm:$0xff]
        %v515 = vld [vmem:[%s221 + $0x69] sm:$0xff]
        %v516 = vld [vmem:[%s221 + $0x71] sm:$0xff]
        %v517 = vld [vmem:[%s221 + $0x79] sm:$0xff]
        %v518 = vld [vmem:[%s221 + $0x81] sm:$0xff]
        %v519 = vld [vmem:[%s221 + $0x89] sm:$0xff]
        %v520 = vld [vmem:[%s221 + $0x91] sm:$0xff]
        %v521 = vld [vmem:[%s221 + $0x99] sm:$0xff]
        %v522 = vld [vmem:[%s221 + $0xa1] sm:$0xff]
        %v523 = vld [vmem:[%s221 + $0xa9] sm:$0xff]
        %v524 = vld [vmem:[%s221 + $0xb1] sm:$0xff]
        %v525 = vld [vmem:[%s221 + $0xb9] sm:$0xff]
        %v526 = vld [vmem:[%s221 + $0xc1] sm:$0xff]
        %v527 = vld [vmem:[%s221 + $0xc9] sm:$0xff]
        %v528 = vld [vmem:[%s221 + $0xd1] sm:$0xff]
        %v529 = vld [vmem:[%s221 + $0xd9] sm:$0xff]
        %v530 = vld [vmem:[%s221 + $0xe1] sm:$0xff]
        %v531 = vld [vmem:[%s221 + $0xe9] sm:$0xff]
        %v532 = vld [vmem:[%s221 + $0xf1] sm:$0xff]
        %v533 = vld [vmem:[%s221 + $0xf9] sm:$0xff]
        %v534 = vld [vmem:[%s221 + $0x101] sm:$0xff]
        %v535 = vld [vmem:[%s221 + $0x109] sm:$0xff]
        %v536 = vld [vmem:[%s221 + $0x111] sm:$0xff]
        %v537 = vld [vmem:[%s221 + $0x119] sm:$0xff]
        %s538 = scalar_lea.vmem %s1, 1
        %v539 = vld [vmem:[%s538] sm:$0x1]
        %541 = vset.pattern.permute.xlu0 0
        %542 = vperm.xlu0 %541, %v502
        %v543 = vpop.permute.xlu0 %542
        %546 = vset.pattern.permute.xlu0 0
        %547 = vperm.xlu0 %546, %v503
        %v548 = vpop.permute.xlu0 %547
        %551 = vset.pattern.permute.xlu0 0
        %552 = vperm.xlu0 %551, %v504
        %v553 = vpop.permute.xlu0 %552
        %556 = vset.pattern.permute.xlu0 0
        %557 = vperm.xlu0 %556, %v505
        %v558 = vpop.permute.xlu0 %557
        %561 = vset.pattern.permute.xlu0 0
        %562 = vperm.xlu0 %561, %v506
        %v563 = vpop.permute.xlu0 %562
        %566 = vset.pattern.permute.xlu0 0
        %567 = vperm.xlu0 %566, %v507
        %v568 = vpop.permute.xlu0 %567
        %571 = vset.pattern.permute.xlu0 0
        %572 = vperm.xlu0 %571, %v508
        %v573 = vpop.permute.xlu0 %572
        %576 = vset.pattern.permute.xlu0 0
        %577 = vperm.xlu0 %576, %v509
        %v578 = vpop.permute.xlu0 %577
        %581 = vset.pattern.permute.xlu0 0
        %582 = vperm.xlu0 %581, %v510
        %v583 = vpop.permute.xlu0 %582
        %586 = vset.pattern.permute.xlu0 0
        %587 = vperm.xlu0 %586, %v511
        %v588 = vpop.permute.xlu0 %587
        %591 = vset.pattern.permute.xlu0 0
        %592 = vperm.xlu0 %591, %v512
        %v593 = vpop.permute.xlu0 %592
        %596 = vset.pattern.permute.xlu0 0
        %597 = vperm.xlu0 %596, %v513
        %v598 = vpop.permute.xlu0 %597
        %601 = vset.pattern.permute.xlu0 0
        %602 = vperm.xlu0 %601, %v514
        %v603 = vpop.permute.xlu0 %602
        %606 = vset.pattern.permute.xlu0 0
        %607 = vperm.xlu0 %606, %v515
        %v608 = vpop.permute.xlu0 %607
        %611 = vset.pattern.permute.xlu0 0
        %612 = vperm.xlu0 %611, %v516
        %v613 = vpop.permute.xlu0 %612
        %616 = vset.pattern.permute.xlu0 0
        %617 = vperm.xlu0 %616, %v517
        %v618 = vpop.permute.xlu0 %617
        %621 = vset.pattern.permute.xlu0 0
        %622 = vperm.xlu0 %621, %v518
        %v623 = vpop.permute.xlu0 %622
        %626 = vset.pattern.permute.xlu0 0
        %627 = vperm.xlu0 %626, %v519
        %v628 = vpop.permute.xlu0 %627
        %631 = vset.pattern.permute.xlu0 0
        %632 = vperm.xlu0 %631, %v520
        %v633 = vpop.permute.xlu0 %632
        %636 = vset.pattern.permute.xlu0 0
        %637 = vperm.xlu0 %636, %v521
        %v638 = vpop.permute.xlu0 %637
        %641 = vset.pattern.permute.xlu0 0
        %642 = vperm.xlu0 %641, %v522
        %v643 = vpop.permute.xlu0 %642
        %646 = vset.pattern.permute.xlu0 0
        %647 = vperm.xlu0 %646, %v523
        %v648 = vpop.permute.xlu0 %647
        %651 = vset.pattern.permute.xlu0 0
        %652 = vperm.xlu0 %651, %v524
        %v653 = vpop.permute.xlu0 %652
        %656 = vset.pattern.permute.xlu0 0
        %657 = vperm.xlu0 %656, %v525
        %v658 = vpop.permute.xlu0 %657
        %661 = vset.pattern.permute.xlu0 0
        %662 = vperm.xlu0 %661, %v526
        %v663 = vpop.permute.xlu0 %662
        %666 = vset.pattern.permute.xlu0 0
        %667 = vperm.xlu0 %666, %v527
        %v668 = vpop.permute.xlu0 %667
        %671 = vset.pattern.permute.xlu0 0
        %672 = vperm.xlu0 %671, %v528
        %v673 = vpop.permute.xlu0 %672
        %676 = vset.pattern.permute.xlu0 0
        %677 = vperm.xlu0 %676, %v529
        %v678 = vpop.permute.xlu0 %677
        %681 = vset.pattern.permute.xlu0 0
        %682 = vperm.xlu0 %681, %v530
        %v683 = vpop.permute.xlu0 %682
        %686 = vset.pattern.permute.xlu0 0
        %687 = vperm.xlu0 %686, %v531
        %v688 = vpop.permute.xlu0 %687
        %691 = vset.pattern.permute.xlu0 0
        %692 = vperm.xlu0 %691, %v532
        %v693 = vpop.permute.xlu0 %692
        %696 = vset.pattern.permute.xlu0 0
        %697 = vperm.xlu0 %696, %v533
        %v698 = vpop.permute.xlu0 %697
        %701 = vset.pattern.permute.xlu0 0
        %702 = vperm.xlu0 %701, %v534
        %v703 = vpop.permute.xlu0 %702
        %706 = vset.pattern.permute.xlu0 0
        %707 = vperm.xlu0 %706, %v535
        %v708 = vpop.permute.xlu0 %707
        %711 = vset.pattern.permute.xlu0 0
        %712 = vperm.xlu0 %711, %v536
        %v713 = vpop.permute.xlu0 %712
        %716 = vset.pattern.permute.xlu0 0
        %717 = vperm.xlu0 %716, %v537
        %v718 = vpop.permute.xlu0 %717
        %v721 = vperm.slane %v539, 0
        %v723 = vmul.f32 %v543, %v721
        %v724 = vmul.f32 %v548, %v721
        %v725 = vmul.f32 %v553, %v721
        %v726 = vmul.f32 %v558, %v721
        %v727 = vmul.f32 %v563, %v721
        %v728 = vmul.f32 %v568, %v721
        %v729 = vmul.f32 %v573, %v721
        %v730 = vmul.f32 %v578, %v721
        %v731 = vmul.f32 %v583, %v721
        %v732 = vmul.f32 %v588, %v721
        %v733 = vmul.f32 %v593, %v721
        %v734 = vmul.f32 %v598, %v721
        %v735 = vmul.f32 %v603, %v721
        %v736 = vmul.f32 %v608, %v721
        %v737 = vmul.f32 %v613, %v721
        %v738 = vmul.f32 %v618, %v721
        %v739 = vmul.f32 %v623, %v721
        %v740 = vmul.f32 %v628, %v721
        %v741 = vmul.f32 %v633, %v721
        %v742 = vmul.f32 %v638, %v721
        %v743 = vmul.f32 %v643, %v721
        %v744 = vmul.f32 %v648, %v721
        %v745 = vmul.f32 %v653, %v721
        %v746 = vmul.f32 %v658, %v721
        %v747 = vmul.f32 %v663, %v721
        %v748 = vmul.f32 %v668, %v721
        %v749 = vmul.f32 %v673, %v721
        %v750 = vmul.f32 %v678, %v721
        %v751 = vmul.f32 %v683, %v721
        %v752 = vmul.f32 %v688, %v721
        %v753 = vmul.f32 %v693, %v721
        %v754 = vmul.f32 %v698, %v721
        %v755 = vmul.f32 %v703, %v721
        %v756 = vmul.f32 %v708, %v721
        %v757 = vmul.f32 %v713, %v721
        %v758 = vmul.f32 %v718, %v721
        %v759 = vadd.f32 %v466, %v723
        %v760 = vadd.f32 %v467, %v724
        %v761 = vadd.f32 %v468, %v725
        %v762 = vadd.f32 %v469, %v726
        %v763 = vadd.f32 %v470, %v727
        %v764 = vadd.f32 %v471, %v728
        %v765 = vadd.f32 %v472, %v729
        %v766 = vadd.f32 %v473, %v730
        %v767 = vadd.f32 %v474, %v731
        %v768 = vadd.f32 %v475, %v732
        %v769 = vadd.f32 %v476, %v733
        %v770 = vadd.f32 %v477, %v734
        %v771 = vadd.f32 %v478, %v735
        %v772 = vadd.f32 %v479, %v736
        %v773 = vadd.f32 %v480, %v737
        %v774 = vadd.f32 %v481, %v738
        %v775 = vadd.f32 %v482, %v739
        %v776 = vadd.f32 %v483, %v740
        %v777 = vadd.f32 %v484, %v741
        %v778 = vadd.f32 %v485, %v742
        %v779 = vadd.f32 %v486, %v743
        %v780 = vadd.f32 %v487, %v744
        %v781 = vadd.f32 %v488, %v745
        %v782 = vadd.f32 %v489, %v746
        %v783 = vadd.f32 %v490, %v747
        %v784 = vadd.f32 %v491, %v748
        %v785 = vadd.f32 %v492, %v749
        %v786 = vadd.f32 %v493, %v750
        %v787 = vadd.f32 %v494, %v751
        %v788 = vadd.f32 %v495, %v752
        %v789 = vadd.f32 %v496, %v753
        %v790 = vadd.f32 %v497, %v754
        %v791 = vadd.f32 %v498, %v755
        %v792 = vadd.f32 %v499, %v756
        %v793 = vadd.f32 %v500, %v757
        %v794 = vadd.f32 %v501, %v758
        %v795 = vld [vmem:[%s221 + $0x2] sm:$0xff]
        %v796 = vld [vmem:[%s221 + $0xa] sm:$0xff]
        %v797 = vld [vmem:[%s221 + $0x12] sm:$0xff]
        %v798 = vld [vmem:[%s221 + $0x1a] sm:$0xff]
        %v799 = vld [vmem:[%s221 + $0x22] sm:$0xff]
        %v800 = vld [vmem:[%s221 + $0x2a] sm:$0xff]
        %v801 = vld [vmem:[%s221 + $0x32] sm:$0xff]
        %v802 = vld [vmem:[%s221 + $0x3a] sm:$0xff]
        %v803 = vld [vmem:[%s221 + $0x42] sm:$0xff]
        %v804 = vld [vmem:[%s221 + $0x4a] sm:$0xff]
        %v805 = vld [vmem:[%s221 + $0x52] sm:$0xff]
        %v806 = vld [vmem:[%s221 + $0x5a] sm:$0xff]
        %v807 = vld [vmem:[%s221 + $0x62] sm:$0xff]
        %v808 = vld [vmem:[%s221 + $0x6a] sm:$0xff]
        %v809 = vld [vmem:[%s221 + $0x72] sm:$0xff]
        %v810 = vld [vmem:[%s221 + $0x7a] sm:$0xff]
        %v811 = vld [vmem:[%s221 + $0x82] sm:$0xff]
        %v812 = vld [vmem:[%s221 + $0x8a] sm:$0xff]
        %v813 = vld [vmem:[%s221 + $0x92] sm:$0xff]
        %v814 = vld [vmem:[%s221 + $0x9a] sm:$0xff]
        %v815 = vld [vmem:[%s221 + $0xa2] sm:$0xff]
        %v816 = vld [vmem:[%s221 + $0xaa] sm:$0xff]
        %v817 = vld [vmem:[%s221 + $0xb2] sm:$0xff]
        %v818 = vld [vmem:[%s221 + $0xba] sm:$0xff]
        %v819 = vld [vmem:[%s221 + $0xc2] sm:$0xff]
        %v820 = vld [vmem:[%s221 + $0xca] sm:$0xff]
        %v821 = vld [vmem:[%s221 + $0xd2] sm:$0xff]
        %v822 = vld [vmem:[%s221 + $0xda] sm:$0xff]
        %v823 = vld [vmem:[%s221 + $0xe2] sm:$0xff]
        %v824 = vld [vmem:[%s221 + $0xea] sm:$0xff]
        %v825 = vld [vmem:[%s221 + $0xf2] sm:$0xff]
        %v826 = vld [vmem:[%s221 + $0xfa] sm:$0xff]
        %v827 = vld [vmem:[%s221 + $0x102] sm:$0xff]
        %v828 = vld [vmem:[%s221 + $0x10a] sm:$0xff]
        %v829 = vld [vmem:[%s221 + $0x112] sm:$0xff]
        %v830 = vld [vmem:[%s221 + $0x11a] sm:$0xff]
        %s831 = scalar_lea.vmem %s1, 2
        %v832 = vld [vmem:[%s831] sm:$0x1]
        %834 = vset.pattern.permute.xlu0 0
        %835 = vperm.xlu0 %834, %v795
        %v836 = vpop.permute.xlu0 %835
        %839 = vset.pattern.permute.xlu0 0
        %840 = vperm.xlu0 %839, %v796
        %v841 = vpop.permute.xlu0 %840
        %844 = vset.pattern.permute.xlu0 0
        %845 = vperm.xlu0 %844, %v797
        %v846 = vpop.permute.xlu0 %845
        %849 = vset.pattern.permute.xlu0 0
        %850 = vperm.xlu0 %849, %v798
        %v851 = vpop.permute.xlu0 %850
        %854 = vset.pattern.permute.xlu0 0
        %855 = vperm.xlu0 %854, %v799
        %v856 = vpop.permute.xlu0 %855
        %859 = vset.pattern.permute.xlu0 0
        %860 = vperm.xlu0 %859, %v800
        %v861 = vpop.permute.xlu0 %860
        %864 = vset.pattern.permute.xlu0 0
        %865 = vperm.xlu0 %864, %v801
        %v866 = vpop.permute.xlu0 %865
        %869 = vset.pattern.permute.xlu0 0
        %870 = vperm.xlu0 %869, %v802
        %v871 = vpop.permute.xlu0 %870
        %874 = vset.pattern.permute.xlu0 0
        %875 = vperm.xlu0 %874, %v803
        %v876 = vpop.permute.xlu0 %875
        %879 = vset.pattern.permute.xlu0 0
        %880 = vperm.xlu0 %879, %v804
        %v881 = vpop.permute.xlu0 %880
        %884 = vset.pattern.permute.xlu0 0
        %885 = vperm.xlu0 %884, %v805
        %v886 = vpop.permute.xlu0 %885
        %889 = vset.pattern.permute.xlu0 0
        %890 = vperm.xlu0 %889, %v806
        %v891 = vpop.permute.xlu0 %890
        %894 = vset.pattern.permute.xlu0 0
        %895 = vperm.xlu0 %894, %v807
        %v896 = vpop.permute.xlu0 %895
        %899 = vset.pattern.permute.xlu0 0
        %900 = vperm.xlu0 %899, %v808
        %v901 = vpop.permute.xlu0 %900
        %904 = vset.pattern.permute.xlu0 0
        %905 = vperm.xlu0 %904, %v809
        %v906 = vpop.permute.xlu0 %905
        %909 = vset.pattern.permute.xlu0 0
        %910 = vperm.xlu0 %909, %v810
        %v911 = vpop.permute.xlu0 %910
        %914 = vset.pattern.permute.xlu0 0
        %915 = vperm.xlu0 %914, %v811
        %v916 = vpop.permute.xlu0 %915
        %919 = vset.pattern.permute.xlu0 0
        %920 = vperm.xlu0 %919, %v812
        %v921 = vpop.permute.xlu0 %920
        %924 = vset.pattern.permute.xlu0 0
        %925 = vperm.xlu0 %924, %v813
        %v926 = vpop.permute.xlu0 %925
        %929 = vset.pattern.permute.xlu0 0
        %930 = vperm.xlu0 %929, %v814
        %v931 = vpop.permute.xlu0 %930
        %934 = vset.pattern.permute.xlu0 0
        %935 = vperm.xlu0 %934, %v815
        %v936 = vpop.permute.xlu0 %935
        %939 = vset.pattern.permute.xlu0 0
        %940 = vperm.xlu0 %939, %v816
        %v941 = vpop.permute.xlu0 %940
        %944 = vset.pattern.permute.xlu0 0
        %945 = vperm.xlu0 %944, %v817
        %v946 = vpop.permute.xlu0 %945
        %949 = vset.pattern.permute.xlu0 0
        %950 = vperm.xlu0 %949, %v818
        %v951 = vpop.permute.xlu0 %950
        %954 = vset.pattern.permute.xlu0 0
        %955 = vperm.xlu0 %954, %v819
        %v956 = vpop.permute.xlu0 %955
        %959 = vset.pattern.permute.xlu0 0
        %960 = vperm.xlu0 %959, %v820
        %v961 = vpop.permute.xlu0 %960
        %964 = vset.pattern.permute.xlu0 0
        %965 = vperm.xlu0 %964, %v821
        %v966 = vpop.permute.xlu0 %965
        %969 = vset.pattern.permute.xlu0 0
        %970 = vperm.xlu0 %969, %v822
        %v971 = vpop.permute.xlu0 %970
        %974 = vset.pattern.permute.xlu0 0
        %975 = vperm.xlu0 %974, %v823
        %v976 = vpop.permute.xlu0 %975
        %979 = vset.pattern.permute.xlu0 0
        %980 = vperm.xlu0 %979, %v824
        %v981 = vpop.permute.xlu0 %980
        %984 = vset.pattern.permute.xlu0 0
        %985 = vperm.xlu0 %984, %v825
        %v986 = vpop.permute.xlu0 %985
        %989 = vset.pattern.permute.xlu0 0
        %990 = vperm.xlu0 %989, %v826
        %v991 = vpop.permute.xlu0 %990
        %994 = vset.pattern.permute.xlu0 0
        %995 = vperm.xlu0 %994, %v827
        %v996 = vpop.permute.xlu0 %995
        %999 = vset.pattern.permute.xlu0 0
        %1000 = vperm.xlu0 %999, %v828
        %v1001 = vpop.permute.xlu0 %1000
        %1004 = vset.pattern.permute.xlu0 0
        %1005 = vperm.xlu0 %1004, %v829
        %v1006 = vpop.permute.xlu0 %1005
        %1009 = vset.pattern.permute.xlu0 0
        %1010 = vperm.xlu0 %1009, %v830
        %v1011 = vpop.permute.xlu0 %1010
        %v1014 = vperm.slane %v832, 0
        %v1016 = vmul.f32 %v836, %v1014
        %v1017 = vmul.f32 %v841, %v1014
        %v1018 = vmul.f32 %v846, %v1014
        %v1019 = vmul.f32 %v851, %v1014
        %v1020 = vmul.f32 %v856, %v1014
        %v1021 = vmul.f32 %v861, %v1014
        %v1022 = vmul.f32 %v866, %v1014
        %v1023 = vmul.f32 %v871, %v1014
        %v1024 = vmul.f32 %v876, %v1014
        %v1025 = vmul.f32 %v881, %v1014
        %v1026 = vmul.f32 %v886, %v1014
        %v1027 = vmul.f32 %v891, %v1014
        %v1028 = vmul.f32 %v896, %v1014
        %v1029 = vmul.f32 %v901, %v1014
        %v1030 = vmul.f32 %v906, %v1014
        %v1031 = vmul.f32 %v911, %v1014
        %v1032 = vmul.f32 %v916, %v1014
        %v1033 = vmul.f32 %v921, %v1014
        %v1034 = vmul.f32 %v926, %v1014
        %v1035 = vmul.f32 %v931, %v1014
        %v1036 = vmul.f32 %v936, %v1014
        %v1037 = vmul.f32 %v941, %v1014
        %v1038 = vmul.f32 %v946, %v1014
        %v1039 = vmul.f32 %v951, %v1014
        %v1040 = vmul.f32 %v956, %v1014
        %v1041 = vmul.f32 %v961, %v1014
        %v1042 = vmul.f32 %v966, %v1014
        %v1043 = vmul.f32 %v971, %v1014
        %v1044 = vmul.f32 %v976, %v1014
        %v1045 = vmul.f32 %v981, %v1014
        %v1046 = vmul.f32 %v986, %v1014
        %v1047 = vmul.f32 %v991, %v1014
        %v1048 = vmul.f32 %v996, %v1014
        %v1049 = vmul.f32 %v1001, %v1014
        %v1050 = vmul.f32 %v1006, %v1014
        %v1051 = vmul.f32 %v1011, %v1014
        %v1052 = vadd.f32 %v759, %v1016
        %v1053 = vadd.f32 %v760, %v1017
        %v1054 = vadd.f32 %v761, %v1018
        %v1055 = vadd.f32 %v762, %v1019
        %v1056 = vadd.f32 %v763, %v1020
        %v1057 = vadd.f32 %v764, %v1021
        %v1058 = vadd.f32 %v765, %v1022
        %v1059 = vadd.f32 %v766, %v1023
        %v1060 = vadd.f32 %v767, %v1024
        %v1061 = vadd.f32 %v768, %v1025
        %v1062 = vadd.f32 %v769, %v1026
        %v1063 = vadd.f32 %v770, %v1027
        %v1064 = vadd.f32 %v771, %v1028
        %v1065 = vadd.f32 %v772, %v1029
        %v1066 = vadd.f32 %v773, %v1030
        %v1067 = vadd.f32 %v774, %v1031
        %v1068 = vadd.f32 %v775, %v1032
        %v1069 = vadd.f32 %v776, %v1033
        %v1070 = vadd.f32 %v777, %v1034
        %v1071 = vadd.f32 %v778, %v1035
        %v1072 = vadd.f32 %v779, %v1036
        %v1073 = vadd.f32 %v780, %v1037
        %v1074 = vadd.f32 %v781, %v1038
        %v1075 = vadd.f32 %v782, %v1039
        %v1076 = vadd.f32 %v783, %v1040
        %v1077 = vadd.f32 %v784, %v1041
        %v1078 = vadd.f32 %v785, %v1042
        %v1079 = vadd.f32 %v786, %v1043
        %v1080 = vadd.f32 %v787, %v1044
        %v1081 = vadd.f32 %v788, %v1045
        %v1082 = vadd.f32 %v789, %v1046
        %v1083 = vadd.f32 %v790, %v1047
        %v1084 = vadd.f32 %v791, %v1048
        %v1085 = vadd.f32 %v792, %v1049
        %v1086 = vadd.f32 %v793, %v1050
        %v1087 = vadd.f32 %v794, %v1051
        %v1088 = vld [vmem:[%s221 + $0x12] sm:$0xff]
        %v1089 = vld [vmem:[%s221 + $0x1a] sm:$0xff]
        %v1090 = vld [vmem:[%s221 + $0x22] sm:$0xff]
        %v1091 = vld [vmem:[%s221 + $0x2a] sm:$0xff]
        %v1092 = vld [vmem:[%s221 + $0x32] sm:$0xff]
        %v1093 = vld [vmem:[%s221 + $0x3a] sm:$0xff]
        %v1094 = vld [vmem:[%s221 + $0x42] sm:$0xff]
        %v1095 = vld [vmem:[%s221 + $0x4a] sm:$0xff]
        %v1096 = vld [vmem:[%s221 + $0x52] sm:$0xff]
        %v1097 = vld [vmem:[%s221 + $0x5a] sm:$0xff]
        %v1098 = vld [vmem:[%s221 + $0x62] sm:$0xff]
        %v1099 = vld [vmem:[%s221 + $0x6a] sm:$0xff]
        %v1100 = vld [vmem:[%s221 + $0x72] sm:$0xff]
        %v1101 = vld [vmem:[%s221 + $0x7a] sm:$0xff]
        %v1102 = vld [vmem:[%s221 + $0x82] sm:$0xff]
        %v1103 = vld [vmem:[%s221 + $0x8a] sm:$0xff]
        %v1104 = vld [vmem:[%s221 + $0x92] sm:$0xff]
        %v1105 = vld [vmem:[%s221 + $0x9a] sm:$0xff]
        %v1106 = vld [vmem:[%s221 + $0xa2] sm:$0xff]
        %v1107 = vld [vmem:[%s221 + $0xaa] sm:$0xff]
        %v1108 = vld [vmem:[%s221 + $0xb2] sm:$0xff]
        %v1109 = vld [vmem:[%s221 + $0xba] sm:$0xff]
        %v1110 = vld [vmem:[%s221 + $0xc2] sm:$0xff]
        %v1111 = vld [vmem:[%s221 + $0xca] sm:$0xff]
        %v1112 = vld [vmem:[%s221 + $0xd2] sm:$0xff]
        %v1113 = vld [vmem:[%s221 + $0xda] sm:$0xff]
        %v1114 = vld [vmem:[%s221 + $0xe2] sm:$0xff]
        %v1115 = vld [vmem:[%s221 + $0xea] sm:$0xff]
        %v1116 = vld [vmem:[%s221 + $0xf2] sm:$0xff]
        %v1117 = vld [vmem:[%s221 + $0xfa] sm:$0xff]
        %v1118 = vld [vmem:[%s221 + $0x102] sm:$0xff]
        %v1119 = vld [vmem:[%s221 + $0x10a] sm:$0xff]
        %v1120 = vld [vmem:[%s221 + $0x112] sm:$0xff]
        %v1121 = vld [vmem:[%s221 + $0x11a] sm:$0xff]
        %v1122 = vld [vmem:[%s221 + $0x122] sm:$0xff]
        %v1123 = vld [vmem:[%s221 + $0x12a] sm:$0xff]
        %s1124 = scalar_lea.vmem %s1, 3
        %v1125 = vld [vmem:[%s1124] sm:$0x1]
        %1127 = vset.pattern.permute.xlu0 0
        %1128 = vperm.xlu0 %1127, %v1088
        %v1129 = vpop.permute.xlu0 %1128
        %1132 = vset.pattern.permute.xlu0 0
        %1133 = vperm.xlu0 %1132, %v1089
        %v1134 = vpop.permute.xlu0 %1133
        %1137 = vset.pattern.permute.xlu0 0
        %1138 = vperm.xlu0 %1137, %v1090
        %v1139 = vpop.permute.xlu0 %1138
        %1142 = vset.pattern.permute.xlu0 0
        %1143 = vperm.xlu0 %1142, %v1091
        %v1144 = vpop.permute.xlu0 %1143
        %1147 = vset.pattern.permute.xlu0 0
        %1148 = vperm.xlu0 %1147, %v1092
        %v1149 = vpop.permute.xlu0 %1148
        %1152 = vset.pattern.permute.xlu0 0
        %1153 = vperm.xlu0 %1152, %v1093
        %v1154 = vpop.permute.xlu0 %1153
        %1157 = vset.pattern.permute.xlu0 0
        %1158 = vperm.xlu0 %1157, %v1094
        %v1159 = vpop.permute.xlu0 %1158
        %1162 = vset.pattern.permute.xlu0 0
        %1163 = vperm.xlu0 %1162, %v1095
        %v1164 = vpop.permute.xlu0 %1163
        %1167 = vset.pattern.permute.xlu0 0
        %1168 = vperm.xlu0 %1167, %v1096
        %v1169 = vpop.permute.xlu0 %1168
        %1172 = vset.pattern.permute.xlu0 0
        %1173 = vperm.xlu0 %1172, %v1097
        %v1174 = vpop.permute.xlu0 %1173
        %1177 = vset.pattern.permute.xlu0 0
        %1178 = vperm.xlu0 %1177, %v1098
        %v1179 = vpop.permute.xlu0 %1178
        %1182 = vset.pattern.permute.xlu0 0
        %1183 = vperm.xlu0 %1182, %v1099
        %v1184 = vpop.permute.xlu0 %1183
        %1187 = vset.pattern.permute.xlu0 0
        %1188 = vperm.xlu0 %1187, %v1100
        %v1189 = vpop.permute.xlu0 %1188
        %1192 = vset.pattern.permute.xlu0 0
        %1193 = vperm.xlu0 %1192, %v1101
        %v1194 = vpop.permute.xlu0 %1193
        %1197 = vset.pattern.permute.xlu0 0
        %1198 = vperm.xlu0 %1197, %v1102
        %v1199 = vpop.permute.xlu0 %1198
        %1202 = vset.pattern.permute.xlu0 0
        %1203 = vperm.xlu0 %1202, %v1103
        %v1204 = vpop.permute.xlu0 %1203
        %1207 = vset.pattern.permute.xlu0 0
        %1208 = vperm.xlu0 %1207, %v1104
        %v1209 = vpop.permute.xlu0 %1208
        %1212 = vset.pattern.permute.xlu0 0
        %1213 = vperm.xlu0 %1212, %v1105
        %v1214 = vpop.permute.xlu0 %1213
        %1217 = vset.pattern.permute.xlu0 0
        %1218 = vperm.xlu0 %1217, %v1106
        %v1219 = vpop.permute.xlu0 %1218
        %1222 = vset.pattern.permute.xlu0 0
        %1223 = vperm.xlu0 %1222, %v1107
        %v1224 = vpop.permute.xlu0 %1223
        %1227 = vset.pattern.permute.xlu0 0
        %1228 = vperm.xlu0 %1227, %v1108
        %v1229 = vpop.permute.xlu0 %1228
        %1232 = vset.pattern.permute.xlu0 0
        %1233 = vperm.xlu0 %1232, %v1109
        %v1234 = vpop.permute.xlu0 %1233
        %1237 = vset.pattern.permute.xlu0 0
        %1238 = vperm.xlu0 %1237, %v1110
        %v1239 = vpop.permute.xlu0 %1238
        %1242 = vset.pattern.permute.xlu0 0
        %1243 = vperm.xlu0 %1242, %v1111
        %v1244 = vpop.permute.xlu0 %1243
        %1247 = vset.pattern.permute.xlu0 0
        %1248 = vperm.xlu0 %1247, %v1112
        %v1249 = vpop.permute.xlu0 %1248
        %1252 = vset.pattern.permute.xlu0 0
        %1253 = vperm.xlu0 %1252, %v1113
        %v1254 = vpop.permute.xlu0 %1253
        %1257 = vset.pattern.permute.xlu0 0
        %1258 = vperm.xlu0 %1257, %v1114
        %v1259 = vpop.permute.xlu0 %1258
        %1262 = vset.pattern.permute.xlu0 0
        %1263 = vperm.xlu0 %1262, %v1115
        %v1264 = vpop.permute.xlu0 %1263
        %1267 = vset.pattern.permute.xlu0 0
        %1268 = vperm.xlu0 %1267, %v1116
        %v1269 = vpop.permute.xlu0 %1268
        %1272 = vset.pattern.permute.xlu0 0
        %1273 = vperm.xlu0 %1272, %v1117
        %v1274 = vpop.permute.xlu0 %1273
        %1277 = vset.pattern.permute.xlu0 0
        %1278 = vperm.xlu0 %1277, %v1118
        %v1279 = vpop.permute.xlu0 %1278
        %1282 = vset.pattern.permute.xlu0 0
        %1283 = vperm.xlu0 %1282, %v1119
        %v1284 = vpop.permute.xlu0 %1283
        %1287 = vset.pattern.permute.xlu0 0
        %1288 = vperm.xlu0 %1287, %v1120
        %v1289 = vpop.permute.xlu0 %1288
        %1292 = vset.pattern.permute.xlu0 0
        %1293 = vperm.xlu0 %1292, %v1121
        %v1294 = vpop.permute.xlu0 %1293
        %1297 = vset.pattern.permute.xlu0 0
        %1298 = vperm.xlu0 %1297, %v1122
        %v1299 = vpop.permute.xlu0 %1298
        %1302 = vset.pattern.permute.xlu0 0
        %1303 = vperm.xlu0 %1302, %v1123
        %v1304 = vpop.permute.xlu0 %1303
        %v1307 = vperm.slane %v1125, 0
        %v1309 = vmul.f32 %v1129, %v1307
        %v1310 = vmul.f32 %v1134, %v1307
        %v1311 = vmul.f32 %v1139, %v1307
        %v1312 = vmul.f32 %v1144, %v1307
        %v1313 = vmul.f32 %v1149, %v1307
        %v1314 = vmul.f32 %v1154, %v1307
        %v1315 = vmul.f32 %v1159, %v1307
        %v1316 = vmul.f32 %v1164, %v1307
        %v1317 = vmul.f32 %v1169, %v1307
        %v1318 = vmul.f32 %v1174, %v1307
        %v1319 = vmul.f32 %v1179, %v1307
        %v1320 = vmul.f32 %v1184, %v1307
        %v1321 = vmul.f32 %v1189, %v1307
        %v1322 = vmul.f32 %v1194, %v1307
        %v1323 = vmul.f32 %v1199, %v1307
        %v1324 = vmul.f32 %v1204, %v1307
        %v1325 = vmul.f32 %v1209, %v1307
        %v1326 = vmul.f32 %v1214, %v1307
        %v1327 = vmul.f32 %v1219, %v1307
        %v1328 = vmul.f32 %v1224, %v1307
        %v1329 = vmul.f32 %v1229, %v1307
        %v1330 = vmul.f32 %v1234, %v1307
        %v1331 = vmul.f32 %v1239, %v1307
        %v1332 = vmul.f32 %v1244, %v1307
        %v1333 = vmul.f32 %v1249, %v1307
        %v1334 = vmul.f32 %v1254, %v1307
        %v1335 = vmul.f32 %v1259, %v1307
        %v1336 = vmul.f32 %v1264, %v1307
        %v1337 = vmul.f32 %v1269, %v1307
        %v1338 = vmul.f32 %v1274, %v1307
        %v1339 = vmul.f32 %v1279, %v1307
        %v1340 = vmul.f32 %v1284, %v1307
        %v1341 = vmul.f32 %v1289, %v1307
        %v1342 = vmul.f32 %v1294, %v1307
        %v1343 = vmul.f32 %v1299, %v1307
        %v1344 = vmul.f32 %v1304, %v1307
        %v1345 = vadd.f32 %v1052, %v1309
        %v1346 = vadd.f32 %v1053, %v1310
        %v1347 = vadd.f32 %v1054, %v1311
        %v1348 = vadd.f32 %v1055, %v1312
        %v1349 = vadd.f32 %v1056, %v1313
        %v1350 = vadd.f32 %v1057, %v1314
        %v1351 = vadd.f32 %v1058, %v1315
        %v1352 = vadd.f32 %v1059, %v1316
        %v1353 = vadd.f32 %v1060, %v1317
        %v1354 = vadd.f32 %v1061, %v1318
        %v1355 = vadd.f32 %v1062, %v1319
        %v1356 = vadd.f32 %v1063, %v1320
        %v1357 = vadd.f32 %v1064, %v1321
        %v1358 = vadd.f32 %v1065, %v1322
        %v1359 = vadd.f32 %v1066, %v1323
        %v1360 = vadd.f32 %v1067, %v1324
        %v1361 = vadd.f32 %v1068, %v1325
        %v1362 = vadd.f32 %v1069, %v1326
        %v1363 = vadd.f32 %v1070, %v1327
        %v1364 = vadd.f32 %v1071, %v1328
        %v1365 = vadd.f32 %v1072, %v1329
        %v1366 = vadd.f32 %v1073, %v1330
        %v1367 = vadd.f32 %v1074, %v1331
        %v1368 = vadd.f32 %v1075, %v1332
        %v1369 = vadd.f32 %v1076, %v1333
        %v1370 = vadd.f32 %v1077, %v1334
        %v1371 = vadd.f32 %v1078, %v1335
        %v1372 = vadd.f32 %v1079, %v1336
        %v1373 = vadd.f32 %v1080, %v1337
        %v1374 = vadd.f32 %v1081, %v1338
        %v1375 = vadd.f32 %v1082, %v1339
        %v1376 = vadd.f32 %v1083, %v1340
        %v1377 = vadd.f32 %v1084, %v1341
        %v1378 = vadd.f32 %v1085, %v1342
        %v1379 = vadd.f32 %v1086, %v1343
        %v1380 = vadd.f32 %v1087, %v1344
        %v1381 = vld [vmem:[%s221 + $0x13] sm:$0xff]
        %v1382 = vld [vmem:[%s221 + $0x1b] sm:$0xff]
        %v1383 = vld [vmem:[%s221 + $0x23] sm:$0xff]
        %v1384 = vld [vmem:[%s221 + $0x2b] sm:$0xff]
        %v1385 = vld [vmem:[%s221 + $0x33] sm:$0xff]
        %v1386 = vld [vmem:[%s221 + $0x3b] sm:$0xff]
        %v1387 = vld [vmem:[%s221 + $0x43] sm:$0xff]
        %v1388 = vld [vmem:[%s221 + $0x4b] sm:$0xff]
        %v1389 = vld [vmem:[%s221 + $0x53] sm:$0xff]
        %v1390 = vld [vmem:[%s221 + $0x5b] sm:$0xff]
        %v1391 = vld [vmem:[%s221 + $0x63] sm:$0xff]
        %v1392 = vld [vmem:[%s221 + $0x6b] sm:$0xff]
        %v1393 = vld [vmem:[%s221 + $0x73] sm:$0xff]
        %v1394 = vld [vmem:[%s221 + $0x7b] sm:$0xff]
        %v1395 = vld [vmem:[%s221 + $0x83] sm:$0xff]
        %v1396 = vld [vmem:[%s221 + $0x8b] sm:$0xff]
        %v1397 = vld [vmem:[%s221 + $0x93] sm:$0xff]
        %v1398 = vld [vmem:[%s221 + $0x9b] sm:$0xff]
        %v1399 = vld [vmem:[%s221 + $0xa3] sm:$0xff]
        %v1400 = vld [vmem:[%s221 + $0xab] sm:$0xff]
        %v1401 = vld [vmem:[%s221 + $0xb3] sm:$0xff]
        %v1402 = vld [vmem:[%s221 + $0xbb] sm:$0xff]
        %v1403 = vld [vmem:[%s221 + $0xc3] sm:$0xff]
        %v1404 = vld [vmem:[%s221 + $0xcb] sm:$0xff]
        %v1405 = vld [vmem:[%s221 + $0xd3] sm:$0xff]
        %v1406 = vld [vmem:[%s221 + $0xdb] sm:$0xff]
        %v1407 = vld [vmem:[%s221 + $0xe3] sm:$0xff]
        %v1408 = vld [vmem:[%s221 + $0xeb] sm:$0xff]
        %v1409 = vld [vmem:[%s221 + $0xf3] sm:$0xff]
        %v1410 = vld [vmem:[%s221 + $0xfb] sm:$0xff]
        %v1411 = vld [vmem:[%s221 + $0x103] sm:$0xff]
        %v1412 = vld [vmem:[%s221 + $0x10b] sm:$0xff]
        %v1413 = vld [vmem:[%s221 + $0x113] sm:$0xff]
        %v1414 = vld [vmem:[%s221 + $0x11b] sm:$0xff]
        %v1415 = vld [vmem:[%s221 + $0x123] sm:$0xff]
        %v1416 = vld [vmem:[%s221 + $0x12b] sm:$0xff]
        %s1417 = scalar_lea.vmem %s1, 4
        %v1418 = vld [vmem:[%s1417] sm:$0x1]
        %1420 = vset.pattern.permute.xlu0 0
        %1421 = vperm.xlu0 %1420, %v1381
        %v1422 = vpop.permute.xlu0 %1421
        %1425 = vset.pattern.permute.xlu0 0
        %1426 = vperm.xlu0 %1425, %v1382
        %v1427 = vpop.permute.xlu0 %1426
        %1430 = vset.pattern.permute.xlu0 0
        %1431 = vperm.xlu0 %1430, %v1383
        %v1432 = vpop.permute.xlu0 %1431
        %1435 = vset.pattern.permute.xlu0 0
        %1436 = vperm.xlu0 %1435, %v1384
        %v1437 = vpop.permute.xlu0 %1436
        %1440 = vset.pattern.permute.xlu0 0
        %1441 = vperm.xlu0 %1440, %v1385
        %v1442 = vpop.permute.xlu0 %1441
        %1445 = vset.pattern.permute.xlu0 0
        %1446 = vperm.xlu0 %1445, %v1386
        %v1447 = vpop.permute.xlu0 %1446
        %1450 = vset.pattern.permute.xlu0 0
        %1451 = vperm.xlu0 %1450, %v1387
        %v1452 = vpop.permute.xlu0 %1451
        %1455 = vset.pattern.permute.xlu0 0
        %1456 = vperm.xlu0 %1455, %v1388
        %v1457 = vpop.permute.xlu0 %1456
        %1460 = vset.pattern.permute.xlu0 0
        %1461 = vperm.xlu0 %1460, %v1389
        %v1462 = vpop.permute.xlu0 %1461
        %1465 = vset.pattern.permute.xlu0 0
        %1466 = vperm.xlu0 %1465, %v1390
        %v1467 = vpop.permute.xlu0 %1466
        %1470 = vset.pattern.permute.xlu0 0
        %1471 = vperm.xlu0 %1470, %v1391
        %v1472 = vpop.permute.xlu0 %1471
        %1475 = vset.pattern.permute.xlu0 0
        %1476 = vperm.xlu0 %1475, %v1392
        %v1477 = vpop.permute.xlu0 %1476
        %1480 = vset.pattern.permute.xlu0 0
        %1481 = vperm.xlu0 %1480, %v1393
        %v1482 = vpop.permute.xlu0 %1481
        %1485 = vset.pattern.permute.xlu0 0
        %1486 = vperm.xlu0 %1485, %v1394
        %v1487 = vpop.permute.xlu0 %1486
        %1490 = vset.pattern.permute.xlu0 0
        %1491 = vperm.xlu0 %1490, %v1395
        %v1492 = vpop.permute.xlu0 %1491
        %1495 = vset.pattern.permute.xlu0 0
        %1496 = vperm.xlu0 %1495, %v1396
        %v1497 = vpop.permute.xlu0 %1496
        %1500 = vset.pattern.permute.xlu0 0
        %1501 = vperm.xlu0 %1500, %v1397
        %v1502 = vpop.permute.xlu0 %1501
        %1505 = vset.pattern.permute.xlu0 0
        %1506 = vperm.xlu0 %1505, %v1398
        %v1507 = vpop.permute.xlu0 %1506
        %1510 = vset.pattern.permute.xlu0 0
        %1511 = vperm.xlu0 %1510, %v1399
        %v1512 = vpop.permute.xlu0 %1511
        %1515 = vset.pattern.permute.xlu0 0
        %1516 = vperm.xlu0 %1515, %v1400
        %v1517 = vpop.permute.xlu0 %1516
        %1520 = vset.pattern.permute.xlu0 0
        %1521 = vperm.xlu0 %1520, %v1401
        %v1522 = vpop.permute.xlu0 %1521
        %1525 = vset.pattern.permute.xlu0 0
        %1526 = vperm.xlu0 %1525, %v1402
        %v1527 = vpop.permute.xlu0 %1526
        %1530 = vset.pattern.permute.xlu0 0
        %1531 = vperm.xlu0 %1530, %v1403
        %v1532 = vpop.permute.xlu0 %1531
        %1535 = vset.pattern.permute.xlu0 0
        %1536 = vperm.xlu0 %1535, %v1404
        %v1537 = vpop.permute.xlu0 %1536
        %1540 = vset.pattern.permute.xlu0 0
        %1541 = vperm.xlu0 %1540, %v1405
        %v1542 = vpop.permute.xlu0 %1541
        %1545 = vset.pattern.permute.xlu0 0
        %1546 = vperm.xlu0 %1545, %v1406
        %v1547 = vpop.permute.xlu0 %1546
        %1550 = vset.pattern.permute.xlu0 0
        %1551 = vperm.xlu0 %1550, %v1407
        %v1552 = vpop.permute.xlu0 %1551
        %1555 = vset.pattern.permute.xlu0 0
        %1556 = vperm.xlu0 %1555, %v1408
        %v1557 = vpop.permute.xlu0 %1556
        %1560 = vset.pattern.permute.xlu0 0
        %1561 = vperm.xlu0 %1560, %v1409
        %v1562 = vpop.permute.xlu0 %1561
        %1565 = vset.pattern.permute.xlu0 0
        %1566 = vperm.xlu0 %1565, %v1410
        %v1567 = vpop.permute.xlu0 %1566
        %1570 = vset.pattern.permute.xlu0 0
        %1571 = vperm.xlu0 %1570, %v1411
        %v1572 = vpop.permute.xlu0 %1571
        %1575 = vset.pattern.permute.xlu0 0
        %1576 = vperm.xlu0 %1575, %v1412
        %v1577 = vpop.permute.xlu0 %1576
        %1580 = vset.pattern.permute.xlu0 0
        %1581 = vperm.xlu0 %1580, %v1413
        %v1582 = vpop.permute.xlu0 %1581
        %1585 = vset.pattern.permute.xlu0 0
        %1586 = vperm.xlu0 %1585, %v1414
        %v1587 = vpop.permute.xlu0 %1586
        %1590 = vset.pattern.permute.xlu0 0
        %1591 = vperm.xlu0 %1590, %v1415
        %v1592 = vpop.permute.xlu0 %1591
        %1595 = vset.pattern.permute.xlu0 0
        %1596 = vperm.xlu0 %1595, %v1416
        %v1597 = vpop.permute.xlu0 %1596
        %v1600 = vperm.slane %v1418, 0
        %v1602 = vmul.f32 %v1422, %v1600
        %v1603 = vmul.f32 %v1427, %v1600
        %v1604 = vmul.f32 %v1432, %v1600
        %v1605 = vmul.f32 %v1437, %v1600
        %v1606 = vmul.f32 %v1442, %v1600
        %v1607 = vmul.f32 %v1447, %v1600
        %v1608 = vmul.f32 %v1452, %v1600
        %v1609 = vmul.f32 %v1457, %v1600
        %v1610 = vmul.f32 %v1462, %v1600
        %v1611 = vmul.f32 %v1467, %v1600
        %v1612 = vmul.f32 %v1472, %v1600
        %v1613 = vmul.f32 %v1477, %v1600
        %v1614 = vmul.f32 %v1482, %v1600
        %v1615 = vmul.f32 %v1487, %v1600
        %v1616 = vmul.f32 %v1492, %v1600
        %v1617 = vmul.f32 %v1497, %v1600
        %v1618 = vmul.f32 %v1502, %v1600
        %v1619 = vmul.f32 %v1507, %v1600
        %v1620 = vmul.f32 %v1512, %v1600
        %v1621 = vmul.f32 %v1517, %v1600
        %v1622 = vmul.f32 %v1522, %v1600
        %v1623 = vmul.f32 %v1527, %v1600
        %v1624 = vmul.f32 %v1532, %v1600
        %v1625 = vmul.f32 %v1537, %v1600
        %v1626 = vmul.f32 %v1542, %v1600
        %v1627 = vmul.f32 %v1547, %v1600
        %v1628 = vmul.f32 %v1552, %v1600
        %v1629 = vmul.f32 %v1557, %v1600
        %v1630 = vmul.f32 %v1562, %v1600
        %v1631 = vmul.f32 %v1567, %v1600
        %v1632 = vmul.f32 %v1572, %v1600
        %v1633 = vmul.f32 %v1577, %v1600
        %v1634 = vmul.f32 %v1582, %v1600
        %v1635 = vmul.f32 %v1587, %v1600
        %v1636 = vmul.f32 %v1592, %v1600
        %v1637 = vmul.f32 %v1597, %v1600
        %v1638 = vadd.f32 %v1345, %v1602
        %v1639 = vadd.f32 %v1346, %v1603
        %v1640 = vadd.f32 %v1347, %v1604
        %v1641 = vadd.f32 %v1348, %v1605
        %v1642 = vadd.f32 %v1349, %v1606
        %v1643 = vadd.f32 %v1350, %v1607
        %v1644 = vadd.f32 %v1351, %v1608
        %v1645 = vadd.f32 %v1352, %v1609
        %v1646 = vadd.f32 %v1353, %v1610
        %v1647 = vadd.f32 %v1354, %v1611
        %v1648 = vadd.f32 %v1355, %v1612
        %v1649 = vadd.f32 %v1356, %v1613
        %v1650 = vadd.f32 %v1357, %v1614
        %v1651 = vadd.f32 %v1358, %v1615
        %v1652 = vadd.f32 %v1359, %v1616
        %v1653 = vadd.f32 %v1360, %v1617
        %v1654 = vadd.f32 %v1361, %v1618
        %v1655 = vadd.f32 %v1362, %v1619
        %v1656 = vadd.f32 %v1363, %v1620
        %v1657 = vadd.f32 %v1364, %v1621
        %v1658 = vadd.f32 %v1365, %v1622
        %v1659 = vadd.f32 %v1366, %v1623
        %v1660 = vadd.f32 %v1367, %v1624
        %v1661 = vadd.f32 %v1368, %v1625
        %v1662 = vadd.f32 %v1369, %v1626
        %v1663 = vadd.f32 %v1370, %v1627
        %v1664 = vadd.f32 %v1371, %v1628
        %v1665 = vadd.f32 %v1372, %v1629
        %v1666 = vadd.f32 %v1373, %v1630
        %v1667 = vadd.f32 %v1374, %v1631
        %v1668 = vadd.f32 %v1375, %v1632
        %v1669 = vadd.f32 %v1376, %v1633
        %v1670 = vadd.f32 %v1377, %v1634
        %v1671 = vadd.f32 %v1378, %v1635
        %v1672 = vadd.f32 %v1379, %v1636
        %v1673 = vadd.f32 %v1380, %v1637
        %v1674 = vld [vmem:[%s221 + $0x14] sm:$0xff]
        %v1675 = vld [vmem:[%s221 + $0x1c] sm:$0xff]
        %v1676 = vld [vmem:[%s221 + $0x24] sm:$0xff]
        %v1677 = vld [vmem:[%s221 + $0x2c] sm:$0xff]
        %v1678 = vld [vmem:[%s221 + $0x34] sm:$0xff]
        %v1679 = vld [vmem:[%s221 + $0x3c] sm:$0xff]
        %v1680 = vld [vmem:[%s221 + $0x44] sm:$0xff]
        %v1681 = vld [vmem:[%s221 + $0x4c] sm:$0xff]
        %v1682 = vld [vmem:[%s221 + $0x54] sm:$0xff]
        %v1683 = vld [vmem:[%s221 + $0x5c] sm:$0xff]
        %v1684 = vld [vmem:[%s221 + $0x64] sm:$0xff]
        %v1685 = vld [vmem:[%s221 + $0x6c] sm:$0xff]
        %v1686 = vld [vmem:[%s221 + $0x74] sm:$0xff]
        %v1687 = vld [vmem:[%s221 + $0x7c] sm:$0xff]
        %v1688 = vld [vmem:[%s221 + $0x84] sm:$0xff]
        %v1689 = vld [vmem:[%s221 + $0x8c] sm:$0xff]
        %v1690 = vld [vmem:[%s221 + $0x94] sm:$0xff]
        %v1691 = vld [vmem:[%s221 + $0x9c] sm:$0xff]
        %v1692 = vld [vmem:[%s221 + $0xa4] sm:$0xff]
        %v1693 = vld [vmem:[%s221 + $0xac] sm:$0xff]
        %v1694 = vld [vmem:[%s221 + $0xb4] sm:$0xff]
        %v1695 = vld [vmem:[%s221 + $0xbc] sm:$0xff]
        %v1696 = vld [vmem:[%s221 + $0xc4] sm:$0xff]
        %v1697 = vld [vmem:[%s221 + $0xcc] sm:$0xff]
        %v1698 = vld [vmem:[%s221 + $0xd4] sm:$0xff]
        %v1699 = vld [vmem:[%s221 + $0xdc] sm:$0xff]
        %v1700 = vld [vmem:[%s221 + $0xe4] sm:$0xff]
        %v1701 = vld [vmem:[%s221 + $0xec] sm:$0xff]
        %v1702 = vld [vmem:[%s221 + $0xf4] sm:$0xff]
        %v1703 = vld [vmem:[%s221 + $0xfc] sm:$0xff]
        %v1704 = vld [vmem:[%s221 + $0x104] sm:$0xff]
        %v1705 = vld [vmem:[%s221 + $0x10c] sm:$0xff]
        %v1706 = vld [vmem:[%s221 + $0x114] sm:$0xff]
        %v1707 = vld [vmem:[%s221 + $0x11c] sm:$0xff]
        %v1708 = vld [vmem:[%s221 + $0x124] sm:$0xff]
        %v1709 = vld [vmem:[%s221 + $0x12c] sm:$0xff]
        %s1710 = scalar_lea.vmem %s1, 5
        %v1711 = vld [vmem:[%s1710] sm:$0x1]
        %1713 = vset.pattern.permute.xlu0 0
        %1714 = vperm.xlu0 %1713, %v1674
        %v1715 = vpop.permute.xlu0 %1714
        %1718 = vset.pattern.permute.xlu0 0
        %1719 = vperm.xlu0 %1718, %v1675
        %v1720 = vpop.permute.xlu0 %1719
        %1723 = vset.pattern.permute.xlu0 0
        %1724 = vperm.xlu0 %1723, %v1676
        %v1725 = vpop.permute.xlu0 %1724
        %1728 = vset.pattern.permute.xlu0 0
        %1729 = vperm.xlu0 %1728, %v1677
        %v1730 = vpop.permute.xlu0 %1729
        %1733 = vset.pattern.permute.xlu0 0
        %1734 = vperm.xlu0 %1733, %v1678
        %v1735 = vpop.permute.xlu0 %1734
        %1738 = vset.pattern.permute.xlu0 0
        %1739 = vperm.xlu0 %1738, %v1679
        %v1740 = vpop.permute.xlu0 %1739
        %1743 = vset.pattern.permute.xlu0 0
        %1744 = vperm.xlu0 %1743, %v1680
        %v1745 = vpop.permute.xlu0 %1744
        %1748 = vset.pattern.permute.xlu0 0
        %1749 = vperm.xlu0 %1748, %v1681
        %v1750 = vpop.permute.xlu0 %1749
        %1753 = vset.pattern.permute.xlu0 0
        %1754 = vperm.xlu0 %1753, %v1682
        %v1755 = vpop.permute.xlu0 %1754
        %1758 = vset.pattern.permute.xlu0 0
        %1759 = vperm.xlu0 %1758, %v1683
        %v1760 = vpop.permute.xlu0 %1759
        %1763 = vset.pattern.permute.xlu0 0
        %1764 = vperm.xlu0 %1763, %v1684
        %v1765 = vpop.permute.xlu0 %1764
        %1768 = vset.pattern.permute.xlu0 0
        %1769 = vperm.xlu0 %1768, %v1685
        %v1770 = vpop.permute.xlu0 %1769
        %1773 = vset.pattern.permute.xlu0 0
        %1774 = vperm.xlu0 %1773, %v1686
        %v1775 = vpop.permute.xlu0 %1774
        %1778 = vset.pattern.permute.xlu0 0
        %1779 = vperm.xlu0 %1778, %v1687
        %v1780 = vpop.permute.xlu0 %1779
        %1783 = vset.pattern.permute.xlu0 0
        %1784 = vperm.xlu0 %1783, %v1688
        %v1785 = vpop.permute.xlu0 %1784
        %1788 = vset.pattern.permute.xlu0 0
        %1789 = vperm.xlu0 %1788, %v1689
        %v1790 = vpop.permute.xlu0 %1789
        %1793 = vset.pattern.permute.xlu0 0
        %1794 = vperm.xlu0 %1793, %v1690
        %v1795 = vpop.permute.xlu0 %1794
        %1798 = vset.pattern.permute.xlu0 0
        %1799 = vperm.xlu0 %1798, %v1691
        %v1800 = vpop.permute.xlu0 %1799
        %1803 = vset.pattern.permute.xlu0 0
        %1804 = vperm.xlu0 %1803, %v1692
        %v1805 = vpop.permute.xlu0 %1804
        %1808 = vset.pattern.permute.xlu0 0
        %1809 = vperm.xlu0 %1808, %v1693
        %v1810 = vpop.permute.xlu0 %1809
        %1813 = vset.pattern.permute.xlu0 0
        %1814 = vperm.xlu0 %1813, %v1694
        %v1815 = vpop.permute.xlu0 %1814
        %1818 = vset.pattern.permute.xlu0 0
        %1819 = vperm.xlu0 %1818, %v1695
        %v1820 = vpop.permute.xlu0 %1819
        %1823 = vset.pattern.permute.xlu0 0
        %1824 = vperm.xlu0 %1823, %v1696
        %v1825 = vpop.permute.xlu0 %1824
        %1828 = vset.pattern.permute.xlu0 0
        %1829 = vperm.xlu0 %1828, %v1697
        %v1830 = vpop.permute.xlu0 %1829
        %1833 = vset.pattern.permute.xlu0 0
        %1834 = vperm.xlu0 %1833, %v1698
        %v1835 = vpop.permute.xlu0 %1834
        %1838 = vset.pattern.permute.xlu0 0
        %1839 = vperm.xlu0 %1838, %v1699
        %v1840 = vpop.permute.xlu0 %1839
        %1843 = vset.pattern.permute.xlu0 0
        %1844 = vperm.xlu0 %1843, %v1700
        %v1845 = vpop.permute.xlu0 %1844
        %1848 = vset.pattern.permute.xlu0 0
        %1849 = vperm.xlu0 %1848, %v1701
        %v1850 = vpop.permute.xlu0 %1849
        %1853 = vset.pattern.permute.xlu0 0
        %1854 = vperm.xlu0 %1853, %v1702
        %v1855 = vpop.permute.xlu0 %1854
        %1858 = vset.pattern.permute.xlu0 0
        %1859 = vperm.xlu0 %1858, %v1703
        %v1860 = vpop.permute.xlu0 %1859
        %1863 = vset.pattern.permute.xlu0 0
        %1864 = vperm.xlu0 %1863, %v1704
        %v1865 = vpop.permute.xlu0 %1864
        %1868 = vset.pattern.permute.xlu0 0
        %1869 = vperm.xlu0 %1868, %v1705
        %v1870 = vpop.permute.xlu0 %1869
        %1873 = vset.pattern.permute.xlu0 0
        %1874 = vperm.xlu0 %1873, %v1706
        %v1875 = vpop.permute.xlu0 %1874
        %1878 = vset.pattern.permute.xlu0 0
        %1879 = vperm.xlu0 %1878, %v1707
        %v1880 = vpop.permute.xlu0 %1879
        %1883 = vset.pattern.permute.xlu0 0
        %1884 = vperm.xlu0 %1883, %v1708
        %v1885 = vpop.permute.xlu0 %1884
        %1888 = vset.pattern.permute.xlu0 0
        %1889 = vperm.xlu0 %1888, %v1709
        %v1890 = vpop.permute.xlu0 %1889
        %v1893 = vperm.slane %v1711, 0
        %v1895 = vmul.f32 %v1715, %v1893
        %v1896 = vmul.f32 %v1720, %v1893
        %v1897 = vmul.f32 %v1725, %v1893
        %v1898 = vmul.f32 %v1730, %v1893
        %v1899 = vmul.f32 %v1735, %v1893
        %v1900 = vmul.f32 %v1740, %v1893
        %v1901 = vmul.f32 %v1745, %v1893
        %v1902 = vmul.f32 %v1750, %v1893
        %v1903 = vmul.f32 %v1755, %v1893
        %v1904 = vmul.f32 %v1760, %v1893
        %v1905 = vmul.f32 %v1765, %v1893
        %v1906 = vmul.f32 %v1770, %v1893
        %v1907 = vmul.f32 %v1775, %v1893
        %v1908 = vmul.f32 %v1780, %v1893
        %v1909 = vmul.f32 %v1785, %v1893
        %v1910 = vmul.f32 %v1790, %v1893
        %v1911 = vmul.f32 %v1795, %v1893
        %v1912 = vmul.f32 %v1800, %v1893
        %v1913 = vmul.f32 %v1805, %v1893
        %v1914 = vmul.f32 %v1810, %v1893
        %v1915 = vmul.f32 %v1815, %v1893
        %v1916 = vmul.f32 %v1820, %v1893
        %v1917 = vmul.f32 %v1825, %v1893
        %v1918 = vmul.f32 %v1830, %v1893
        %v1919 = vmul.f32 %v1835, %v1893
        %v1920 = vmul.f32 %v1840, %v1893
        %v1921 = vmul.f32 %v1845, %v1893
        %v1922 = vmul.f32 %v1850, %v1893
        %v1923 = vmul.f32 %v1855, %v1893
        %v1924 = vmul.f32 %v1860, %v1893
        %v1925 = vmul.f32 %v1865, %v1893
        %v1926 = vmul.f32 %v1870, %v1893
        %v1927 = vmul.f32 %v1875, %v1893
        %v1928 = vmul.f32 %v1880, %v1893
        %v1929 = vmul.f32 %v1885, %v1893
        %v1930 = vmul.f32 %v1890, %v1893
        %v1931 = vadd.f32 %v1638, %v1895
        %v1932 = vadd.f32 %v1639, %v1896
        %v1933 = vadd.f32 %v1640, %v1897
        %v1934 = vadd.f32 %v1641, %v1898
        %v1935 = vadd.f32 %v1642, %v1899
        %v1936 = vadd.f32 %v1643, %v1900
        %v1937 = vadd.f32 %v1644, %v1901
        %v1938 = vadd.f32 %v1645, %v1902
        %v1939 = vadd.f32 %v1646, %v1903
        %v1940 = vadd.f32 %v1647, %v1904
        %v1941 = vadd.f32 %v1648, %v1905
        %v1942 = vadd.f32 %v1649, %v1906
        %v1943 = vadd.f32 %v1650, %v1907
        %v1944 = vadd.f32 %v1651, %v1908
        %v1945 = vadd.f32 %v1652, %v1909
        %v1946 = vadd.f32 %v1653, %v1910
        %v1947 = vadd.f32 %v1654, %v1911
        %v1948 = vadd.f32 %v1655, %v1912
        %v1949 = vadd.f32 %v1656, %v1913
        %v1950 = vadd.f32 %v1657, %v1914
        %v1951 = vadd.f32 %v1658, %v1915
        %v1952 = vadd.f32 %v1659, %v1916
        %v1953 = vadd.f32 %v1660, %v1917
        %v1954 = vadd.f32 %v1661, %v1918
        %v1955 = vadd.f32 %v1662, %v1919
        %v1956 = vadd.f32 %v1663, %v1920
        %v1957 = vadd.f32 %v1664, %v1921
        %v1958 = vadd.f32 %v1665, %v1922
        %v1959 = vadd.f32 %v1666, %v1923
        %v1960 = vadd.f32 %v1667, %v1924
        %v1961 = vadd.f32 %v1668, %v1925
        %v1962 = vadd.f32 %v1669, %v1926
        %v1963 = vadd.f32 %v1670, %v1927
        %v1964 = vadd.f32 %v1671, %v1928
        %v1965 = vadd.f32 %v1672, %v1929
        %v1966 = vadd.f32 %v1673, %v1930
        %v1967 = vld [vmem:[%s221 + $0x24] sm:$0xff]
        %v1968 = vld [vmem:[%s221 + $0x2c] sm:$0xff]
        %v1969 = vld [vmem:[%s221 + $0x34] sm:$0xff]
        %v1970 = vld [vmem:[%s221 + $0x3c] sm:$0xff]
        %v1971 = vld [vmem:[%s221 + $0x44] sm:$0xff]
        %v1972 = vld [vmem:[%s221 + $0x4c] sm:$0xff]
        %v1973 = vld [vmem:[%s221 + $0x54] sm:$0xff]
        %v1974 = vld [vmem:[%s221 + $0x5c] sm:$0xff]
        %v1975 = vld [vmem:[%s221 + $0x64] sm:$0xff]
        %v1976 = vld [vmem:[%s221 + $0x6c] sm:$0xff]
        %v1977 = vld [vmem:[%s221 + $0x74] sm:$0xff]
        %v1978 = vld [vmem:[%s221 + $0x7c] sm:$0xff]
        %v1979 = vld [vmem:[%s221 + $0x84] sm:$0xff]
        %v1980 = vld [vmem:[%s221 + $0x8c] sm:$0xff]
        %v1981 = vld [vmem:[%s221 + $0x94] sm:$0xff]
        %v1982 = vld [vmem:[%s221 + $0x9c] sm:$0xff]
        %v1983 = vld [vmem:[%s221 + $0xa4] sm:$0xff]
        %v1984 = vld [vmem:[%s221 + $0xac] sm:$0xff]
        %v1985 = vld [vmem:[%s221 + $0xb4] sm:$0xff]
        %v1986 = vld [vmem:[%s221 + $0xbc] sm:$0xff]
        %v1987 = vld [vmem:[%s221 + $0xc4] sm:$0xff]
        %v1988 = vld [vmem:[%s221 + $0xcc] sm:$0xff]
        %v1989 = vld [vmem:[%s221 + $0xd4] sm:$0xff]
        %v1990 = vld [vmem:[%s221 + $0xdc] sm:$0xff]
        %v1991 = vld [vmem:[%s221 + $0xe4] sm:$0xff]
        %v1992 = vld [vmem:[%s221 + $0xec] sm:$0xff]
        %v1993 = vld [vmem:[%s221 + $0xf4] sm:$0xff]
        %v1994 = vld [vmem:[%s221 + $0xfc] sm:$0xff]
        %v1995 = vld [vmem:[%s221 + $0x104] sm:$0xff]
        %v1996 = vld [vmem:[%s221 + $0x10c] sm:$0xff]
        %v1997 = vld [vmem:[%s221 + $0x114] sm:$0xff]
        %v1998 = vld [vmem:[%s221 + $0x11c] sm:$0xff]
        %v1999 = vld [vmem:[%s221 + $0x124] sm:$0xff]
        %v2000 = vld [vmem:[%s221 + $0x12c] sm:$0xff]
        %v2001 = vld [vmem:[%s221 + $0x134] sm:$0xff]
        %v2002 = vld [vmem:[%s221 + $0x13c] sm:$0xff]
        %s2003 = scalar_lea.vmem %s1, 6
        %v2004 = vld [vmem:[%s2003] sm:$0x1]
        %2006 = vset.pattern.permute.xlu0 0
        %2007 = vperm.xlu0 %2006, %v1967
        %v2008 = vpop.permute.xlu0 %2007
        %2011 = vset.pattern.permute.xlu0 0
        %2012 = vperm.xlu0 %2011, %v1968
        %v2013 = vpop.permute.xlu0 %2012
        %2016 = vset.pattern.permute.xlu0 0
        %2017 = vperm.xlu0 %2016, %v1969
        %v2018 = vpop.permute.xlu0 %2017
        %2021 = vset.pattern.permute.xlu0 0
        %2022 = vperm.xlu0 %2021, %v1970
        %v2023 = vpop.permute.xlu0 %2022
        %2026 = vset.pattern.permute.xlu0 0
        %2027 = vperm.xlu0 %2026, %v1971
        %v2028 = vpop.permute.xlu0 %2027
        %2031 = vset.pattern.permute.xlu0 0
        %2032 = vperm.xlu0 %2031, %v1972
        %v2033 = vpop.permute.xlu0 %2032
        %2036 = vset.pattern.permute.xlu0 0
        %2037 = vperm.xlu0 %2036, %v1973
        %v2038 = vpop.permute.xlu0 %2037
        %2041 = vset.pattern.permute.xlu0 0
        %2042 = vperm.xlu0 %2041, %v1974
        %v2043 = vpop.permute.xlu0 %2042
        %2046 = vset.pattern.permute.xlu0 0
        %2047 = vperm.xlu0 %2046, %v1975
        %v2048 = vpop.permute.xlu0 %2047
        %2051 = vset.pattern.permute.xlu0 0
        %2052 = vperm.xlu0 %2051, %v1976
        %v2053 = vpop.permute.xlu0 %2052
        %2056 = vset.pattern.permute.xlu0 0
        %2057 = vperm.xlu0 %2056, %v1977
        %v2058 = vpop.permute.xlu0 %2057
        %2061 = vset.pattern.permute.xlu0 0
        %2062 = vperm.xlu0 %2061, %v1978
        %v2063 = vpop.permute.xlu0 %2062
        %2066 = vset.pattern.permute.xlu0 0
        %2067 = vperm.xlu0 %2066, %v1979
        %v2068 = vpop.permute.xlu0 %2067
        %2071 = vset.pattern.permute.xlu0 0
        %2072 = vperm.xlu0 %2071, %v1980
        %v2073 = vpop.permute.xlu0 %2072
        %2076 = vset.pattern.permute.xlu0 0
        %2077 = vperm.xlu0 %2076, %v1981
        %v2078 = vpop.permute.xlu0 %2077
        %2081 = vset.pattern.permute.xlu0 0
        %2082 = vperm.xlu0 %2081, %v1982
        %v2083 = vpop.permute.xlu0 %2082
        %2086 = vset.pattern.permute.xlu0 0
        %2087 = vperm.xlu0 %2086, %v1983
        %v2088 = vpop.permute.xlu0 %2087
        %2091 = vset.pattern.permute.xlu0 0
        %2092 = vperm.xlu0 %2091, %v1984
        %v2093 = vpop.permute.xlu0 %2092
        %2096 = vset.pattern.permute.xlu0 0
        %2097 = vperm.xlu0 %2096, %v1985
        %v2098 = vpop.permute.xlu0 %2097
        %2101 = vset.pattern.permute.xlu0 0
        %2102 = vperm.xlu0 %2101, %v1986
        %v2103 = vpop.permute.xlu0 %2102
        %2106 = vset.pattern.permute.xlu0 0
        %2107 = vperm.xlu0 %2106, %v1987
        %v2108 = vpop.permute.xlu0 %2107
        %2111 = vset.pattern.permute.xlu0 0
        %2112 = vperm.xlu0 %2111, %v1988
        %v2113 = vpop.permute.xlu0 %2112
        %2116 = vset.pattern.permute.xlu0 0
        %2117 = vperm.xlu0 %2116, %v1989
        %v2118 = vpop.permute.xlu0 %2117
        %2121 = vset.pattern.permute.xlu0 0
        %2122 = vperm.xlu0 %2121, %v1990
        %v2123 = vpop.permute.xlu0 %2122
        %2126 = vset.pattern.permute.xlu0 0
        %2127 = vperm.xlu0 %2126, %v1991
        %v2128 = vpop.permute.xlu0 %2127
        %2131 = vset.pattern.permute.xlu0 0
        %2132 = vperm.xlu0 %2131, %v1992
        %v2133 = vpop.permute.xlu0 %2132
        %2136 = vset.pattern.permute.xlu0 0
        %2137 = vperm.xlu0 %2136, %v1993
        %v2138 = vpop.permute.xlu0 %2137
        %2141 = vset.pattern.permute.xlu0 0
        %2142 = vperm.xlu0 %2141, %v1994
        %v2143 = vpop.permute.xlu0 %2142
        %2146 = vset.pattern.permute.xlu0 0
        %2147 = vperm.xlu0 %2146, %v1995
        %v2148 = vpop.permute.xlu0 %2147
        %2151 = vset.pattern.permute.xlu0 0
        %2152 = vperm.xlu0 %2151, %v1996
        %v2153 = vpop.permute.xlu0 %2152
        %2156 = vset.pattern.permute.xlu0 0
        %2157 = vperm.xlu0 %2156, %v1997
        %v2158 = vpop.permute.xlu0 %2157
        %2161 = vset.pattern.permute.xlu0 0
        %2162 = vperm.xlu0 %2161, %v1998
        %v2163 = vpop.permute.xlu0 %2162
        %2166 = vset.pattern.permute.xlu0 0
        %2167 = vperm.xlu0 %2166, %v1999
        %v2168 = vpop.permute.xlu0 %2167
        %2171 = vset.pattern.permute.xlu0 0
        %2172 = vperm.xlu0 %2171, %v2000
        %v2173 = vpop.permute.xlu0 %2172
        %2176 = vset.pattern.permute.xlu0 0
        %2177 = vperm.xlu0 %2176, %v2001
        %v2178 = vpop.permute.xlu0 %2177
        %2181 = vset.pattern.permute.xlu0 0
        %2182 = vperm.xlu0 %2181, %v2002
        %v2183 = vpop.permute.xlu0 %2182
        %v2186 = vperm.slane %v2004, 0
        %v2188 = vmul.f32 %v2008, %v2186
        %v2189 = vmul.f32 %v2013, %v2186
        %v2190 = vmul.f32 %v2018, %v2186
        %v2191 = vmul.f32 %v2023, %v2186
        %v2192 = vmul.f32 %v2028, %v2186
        %v2193 = vmul.f32 %v2033, %v2186
        %v2194 = vmul.f32 %v2038, %v2186
        %v2195 = vmul.f32 %v2043, %v2186
        %v2196 = vmul.f32 %v2048, %v2186
        %v2197 = vmul.f32 %v2053, %v2186
        %v2198 = vmul.f32 %v2058, %v2186
        %v2199 = vmul.f32 %v2063, %v2186
        %v2200 = vmul.f32 %v2068, %v2186
        %v2201 = vmul.f32 %v2073, %v2186
        %v2202 = vmul.f32 %v2078, %v2186
        %v2203 = vmul.f32 %v2083, %v2186
        %v2204 = vmul.f32 %v2088, %v2186
        %v2205 = vmul.f32 %v2093, %v2186
        %v2206 = vmul.f32 %v2098, %v2186
        %v2207 = vmul.f32 %v2103, %v2186
        %v2208 = vmul.f32 %v2108, %v2186
        %v2209 = vmul.f32 %v2113, %v2186
        %v2210 = vmul.f32 %v2118, %v2186
        %v2211 = vmul.f32 %v2123, %v2186
        %v2212 = vmul.f32 %v2128, %v2186
        %v2213 = vmul.f32 %v2133, %v2186
        %v2214 = vmul.f32 %v2138, %v2186
        %v2215 = vmul.f32 %v2143, %v2186
        %v2216 = vmul.f32 %v2148, %v2186
        %v2217 = vmul.f32 %v2153, %v2186
        %v2218 = vmul.f32 %v2158, %v2186
        %v2219 = vmul.f32 %v2163, %v2186
        %v2220 = vmul.f32 %v2168, %v2186
        %v2221 = vmul.f32 %v2173, %v2186
        %v2222 = vmul.f32 %v2178, %v2186
        %v2223 = vmul.f32 %v2183, %v2186
        %v2224 = vadd.f32 %v1931, %v2188
        %v2225 = vadd.f32 %v1932, %v2189
        %v2226 = vadd.f32 %v1933, %v2190
        %v2227 = vadd.f32 %v1934, %v2191
        %v2228 = vadd.f32 %v1935, %v2192
        %v2229 = vadd.f32 %v1936, %v2193
        %v2230 = vadd.f32 %v1937, %v2194
        %v2231 = vadd.f32 %v1938, %v2195
        %v2232 = vadd.f32 %v1939, %v2196
        %v2233 = vadd.f32 %v1940, %v2197
        %v2234 = vadd.f32 %v1941, %v2198
        %v2235 = vadd.f32 %v1942, %v2199
        %v2236 = vadd.f32 %v1943, %v2200
        %v2237 = vadd.f32 %v1944, %v2201
        %v2238 = vadd.f32 %v1945, %v2202
        %v2239 = vadd.f32 %v1946, %v2203
        %v2240 = vadd.f32 %v1947, %v2204
        %v2241 = vadd.f32 %v1948, %v2205
        %v2242 = vadd.f32 %v1949, %v2206
        %v2243 = vadd.f32 %v1950, %v2207
        %v2244 = vadd.f32 %v1951, %v2208
        %v2245 = vadd.f32 %v1952, %v2209
        %v2246 = vadd.f32 %v1953, %v2210
        %v2247 = vadd.f32 %v1954, %v2211
        %v2248 = vadd.f32 %v1955, %v2212
        %v2249 = vadd.f32 %v1956, %v2213
        %v2250 = vadd.f32 %v1957, %v2214
        %v2251 = vadd.f32 %v1958, %v2215
        %v2252 = vadd.f32 %v1959, %v2216
        %v2253 = vadd.f32 %v1960, %v2217
        %v2254 = vadd.f32 %v1961, %v2218
        %v2255 = vadd.f32 %v1962, %v2219
        %v2256 = vadd.f32 %v1963, %v2220
        %v2257 = vadd.f32 %v1964, %v2221
        %v2258 = vadd.f32 %v1965, %v2222
        %v2259 = vadd.f32 %v1966, %v2223
        %v2260 = vld [vmem:[%s221 + $0x25] sm:$0xff]
        %v2261 = vld [vmem:[%s221 + $0x2d] sm:$0xff]
        %v2262 = vld [vmem:[%s221 + $0x35] sm:$0xff]
        %v2263 = vld [vmem:[%s221 + $0x3d] sm:$0xff]
        %v2264 = vld [vmem:[%s221 + $0x45] sm:$0xff]
        %v2265 = vld [vmem:[%s221 + $0x4d] sm:$0xff]
        %v2266 = vld [vmem:[%s221 + $0x55] sm:$0xff]
        %v2267 = vld [vmem:[%s221 + $0x5d] sm:$0xff]
        %v2268 = vld [vmem:[%s221 + $0x65] sm:$0xff]
        %v2269 = vld [vmem:[%s221 + $0x6d] sm:$0xff]
        %v2270 = vld [vmem:[%s221 + $0x75] sm:$0xff]
        %v2271 = vld [vmem:[%s221 + $0x7d] sm:$0xff]
        %v2272 = vld [vmem:[%s221 + $0x85] sm:$0xff]
        %v2273 = vld [vmem:[%s221 + $0x8d] sm:$0xff]
        %v2274 = vld [vmem:[%s221 + $0x95] sm:$0xff]
        %v2275 = vld [vmem:[%s221 + $0x9d] sm:$0xff]
        %v2276 = vld [vmem:[%s221 + $0xa5] sm:$0xff]
        %v2277 = vld [vmem:[%s221 + $0xad] sm:$0xff]
        %v2278 = vld [vmem:[%s221 + $0xb5] sm:$0xff]
        %v2279 = vld [vmem:[%s221 + $0xbd] sm:$0xff]
        %v2280 = vld [vmem:[%s221 + $0xc5] sm:$0xff]
        %v2281 = vld [vmem:[%s221 + $0xcd] sm:$0xff]
        %v2282 = vld [vmem:[%s221 + $0xd5] sm:$0xff]
        %v2283 = vld [vmem:[%s221 + $0xdd] sm:$0xff]
        %v2284 = vld [vmem:[%s221 + $0xe5] sm:$0xff]
        %v2285 = vld [vmem:[%s221 + $0xed] sm:$0xff]
        %v2286 = vld [vmem:[%s221 + $0xf5] sm:$0xff]
        %v2287 = vld [vmem:[%s221 + $0xfd] sm:$0xff]
        %v2288 = vld [vmem:[%s221 + $0x105] sm:$0xff]
        %v2289 = vld [vmem:[%s221 + $0x10d] sm:$0xff]
        %v2290 = vld [vmem:[%s221 + $0x115] sm:$0xff]
        %v2291 = vld [vmem:[%s221 + $0x11d] sm:$0xff]
        %v2292 = vld [vmem:[%s221 + $0x125] sm:$0xff]
        %v2293 = vld [vmem:[%s221 + $0x12d] sm:$0xff]
        %v2294 = vld [vmem:[%s221 + $0x135] sm:$0xff]
        %v2295 = vld [vmem:[%s221 + $0x13d] sm:$0xff]
        %s2296 = scalar_lea.vmem %s1, 7
        %v2297 = vld [vmem:[%s2296] sm:$0x1]
        %2299 = vset.pattern.permute.xlu0 0
        %2300 = vperm.xlu0 %2299, %v2260
        %v2301 = vpop.permute.xlu0 %2300
        %2304 = vset.pattern.permute.xlu0 0
        %2305 = vperm.xlu0 %2304, %v2261
        %v2306 = vpop.permute.xlu0 %2305
        %2309 = vset.pattern.permute.xlu0 0
        %2310 = vperm.xlu0 %2309, %v2262
        %v2311 = vpop.permute.xlu0 %2310
        %2314 = vset.pattern.permute.xlu0 0
        %2315 = vperm.xlu0 %2314, %v2263
        %v2316 = vpop.permute.xlu0 %2315
        %2319 = vset.pattern.permute.xlu0 0
        %2320 = vperm.xlu0 %2319, %v2264
        %v2321 = vpop.permute.xlu0 %2320
        %2324 = vset.pattern.permute.xlu0 0
        %2325 = vperm.xlu0 %2324, %v2265
        %v2326 = vpop.permute.xlu0 %2325
        %2329 = vset.pattern.permute.xlu0 0
        %2330 = vperm.xlu0 %2329, %v2266
        %v2331 = vpop.permute.xlu0 %2330
        %2334 = vset.pattern.permute.xlu0 0
        %2335 = vperm.xlu0 %2334, %v2267
        %v2336 = vpop.permute.xlu0 %2335
        %2339 = vset.pattern.permute.xlu0 0
        %2340 = vperm.xlu0 %2339, %v2268
        %v2341 = vpop.permute.xlu0 %2340
        %2344 = vset.pattern.permute.xlu0 0
        %2345 = vperm.xlu0 %2344, %v2269
        %v2346 = vpop.permute.xlu0 %2345
        %2349 = vset.pattern.permute.xlu0 0
        %2350 = vperm.xlu0 %2349, %v2270
        %v2351 = vpop.permute.xlu0 %2350
        %2354 = vset.pattern.permute.xlu0 0
        %2355 = vperm.xlu0 %2354, %v2271
        %v2356 = vpop.permute.xlu0 %2355
        %2359 = vset.pattern.permute.xlu0 0
        %2360 = vperm.xlu0 %2359, %v2272
        %v2361 = vpop.permute.xlu0 %2360
        %2364 = vset.pattern.permute.xlu0 0
        %2365 = vperm.xlu0 %2364, %v2273
        %v2366 = vpop.permute.xlu0 %2365
        %2369 = vset.pattern.permute.xlu0 0
        %2370 = vperm.xlu0 %2369, %v2274
        %v2371 = vpop.permute.xlu0 %2370
        %2374 = vset.pattern.permute.xlu0 0
        %2375 = vperm.xlu0 %2374, %v2275
        %v2376 = vpop.permute.xlu0 %2375
        %2379 = vset.pattern.permute.xlu0 0
        %2380 = vperm.xlu0 %2379, %v2276
        %v2381 = vpop.permute.xlu0 %2380
        %2384 = vset.pattern.permute.xlu0 0
        %2385 = vperm.xlu0 %2384, %v2277
        %v2386 = vpop.permute.xlu0 %2385
        %2389 = vset.pattern.permute.xlu0 0
        %2390 = vperm.xlu0 %2389, %v2278
        %v2391 = vpop.permute.xlu0 %2390
        %2394 = vset.pattern.permute.xlu0 0
        %2395 = vperm.xlu0 %2394, %v2279
        %v2396 = vpop.permute.xlu0 %2395
        %2399 = vset.pattern.permute.xlu0 0
        %2400 = vperm.xlu0 %2399, %v2280
        %v2401 = vpop.permute.xlu0 %2400
        %2404 = vset.pattern.permute.xlu0 0
        %2405 = vperm.xlu0 %2404, %v2281
        %v2406 = vpop.permute.xlu0 %2405
        %2409 = vset.pattern.permute.xlu0 0
        %2410 = vperm.xlu0 %2409, %v2282
        %v2411 = vpop.permute.xlu0 %2410
        %2414 = vset.pattern.permute.xlu0 0
        %2415 = vperm.xlu0 %2414, %v2283
        %v2416 = vpop.permute.xlu0 %2415
        %2419 = vset.pattern.permute.xlu0 0
        %2420 = vperm.xlu0 %2419, %v2284
        %v2421 = vpop.permute.xlu0 %2420
        %2424 = vset.pattern.permute.xlu0 0
        %2425 = vperm.xlu0 %2424, %v2285
        %v2426 = vpop.permute.xlu0 %2425
        %2429 = vset.pattern.permute.xlu0 0
        %2430 = vperm.xlu0 %2429, %v2286
        %v2431 = vpop.permute.xlu0 %2430
        %2434 = vset.pattern.permute.xlu0 0
        %2435 = vperm.xlu0 %2434, %v2287
        %v2436 = vpop.permute.xlu0 %2435
        %2439 = vset.pattern.permute.xlu0 0
        %2440 = vperm.xlu0 %2439, %v2288
        %v2441 = vpop.permute.xlu0 %2440
        %2444 = vset.pattern.permute.xlu0 0
        %2445 = vperm.xlu0 %2444, %v2289
        %v2446 = vpop.permute.xlu0 %2445
        %2449 = vset.pattern.permute.xlu0 0
        %2450 = vperm.xlu0 %2449, %v2290
        %v2451 = vpop.permute.xlu0 %2450
        %2454 = vset.pattern.permute.xlu0 0
        %2455 = vperm.xlu0 %2454, %v2291
        %v2456 = vpop.permute.xlu0 %2455
        %2459 = vset.pattern.permute.xlu0 0
        %2460 = vperm.xlu0 %2459, %v2292
        %v2461 = vpop.permute.xlu0 %2460
        %2464 = vset.pattern.permute.xlu0 0
        %2465 = vperm.xlu0 %2464, %v2293
        %v2466 = vpop.permute.xlu0 %2465
        %2469 = vset.pattern.permute.xlu0 0
        %2470 = vperm.xlu0 %2469, %v2294
        %v2471 = vpop.permute.xlu0 %2470
        %2474 = vset.pattern.permute.xlu0 0
        %2475 = vperm.xlu0 %2474, %v2295
        %v2476 = vpop.permute.xlu0 %2475
        %v2479 = vperm.slane %v2297, 0
        %v2481 = vmul.f32 %v2301, %v2479
        %v2482 = vmul.f32 %v2306, %v2479
        %v2483 = vmul.f32 %v2311, %v2479
        %v2484 = vmul.f32 %v2316, %v2479
        %v2485 = vmul.f32 %v2321, %v2479
        %v2486 = vmul.f32 %v2326, %v2479
        %v2487 = vmul.f32 %v2331, %v2479
        %v2488 = vmul.f32 %v2336, %v2479
        %v2489 = vmul.f32 %v2341, %v2479
        %v2490 = vmul.f32 %v2346, %v2479
        %v2491 = vmul.f32 %v2351, %v2479
        %v2492 = vmul.f32 %v2356, %v2479
        %v2493 = vmul.f32 %v2361, %v2479
        %v2494 = vmul.f32 %v2366, %v2479
        %v2495 = vmul.f32 %v2371, %v2479
        %v2496 = vmul.f32 %v2376, %v2479
        %v2497 = vmul.f32 %v2381, %v2479
        %v2498 = vmul.f32 %v2386, %v2479
        %v2499 = vmul.f32 %v2391, %v2479
        %v2500 = vmul.f32 %v2396, %v2479
        %v2501 = vmul.f32 %v2401, %v2479
        %v2502 = vmul.f32 %v2406, %v2479
        %v2503 = vmul.f32 %v2411, %v2479
        %v2504 = vmul.f32 %v2416, %v2479
        %v2505 = vmul.f32 %v2421, %v2479
        %v2506 = vmul.f32 %v2426, %v2479
        %v2507 = vmul.f32 %v2431, %v2479
        %v2508 = vmul.f32 %v2436, %v2479
        %v2509 = vmul.f32 %v2441, %v2479
        %v2510 = vmul.f32 %v2446, %v2479
        %v2511 = vmul.f32 %v2451, %v2479
        %v2512 = vmul.f32 %v2456, %v2479
        %v2513 = vmul.f32 %v2461, %v2479
        %v2514 = vmul.f32 %v2466, %v2479
        %v2515 = vmul.f32 %v2471, %v2479
        %v2516 = vmul.f32 %v2476, %v2479
        %v2517 = vadd.f32 %v2224, %v2481
        %v2518 = vadd.f32 %v2225, %v2482
        %v2519 = vadd.f32 %v2226, %v2483
        %v2520 = vadd.f32 %v2227, %v2484
        %v2521 = vadd.f32 %v2228, %v2485
        %v2522 = vadd.f32 %v2229, %v2486
        %v2523 = vadd.f32 %v2230, %v2487
        %v2524 = vadd.f32 %v2231, %v2488
        %v2525 = vadd.f32 %v2232, %v2489
        %v2526 = vadd.f32 %v2233, %v2490
        %v2527 = vadd.f32 %v2234, %v2491
        %v2528 = vadd.f32 %v2235, %v2492
        %v2529 = vadd.f32 %v2236, %v2493
        %v2530 = vadd.f32 %v2237, %v2494
        %v2531 = vadd.f32 %v2238, %v2495
        %v2532 = vadd.f32 %v2239, %v2496
        %v2533 = vadd.f32 %v2240, %v2497
        %v2534 = vadd.f32 %v2241, %v2498
        %v2535 = vadd.f32 %v2242, %v2499
        %v2536 = vadd.f32 %v2243, %v2500
        %v2537 = vadd.f32 %v2244, %v2501
        %v2538 = vadd.f32 %v2245, %v2502
        %v2539 = vadd.f32 %v2246, %v2503
        %v2540 = vadd.f32 %v2247, %v2504
        %v2541 = vadd.f32 %v2248, %v2505
        %v2542 = vadd.f32 %v2249, %v2506
        %v2543 = vadd.f32 %v2250, %v2507
        %v2544 = vadd.f32 %v2251, %v2508
        %v2545 = vadd.f32 %v2252, %v2509
        %v2546 = vadd.f32 %v2253, %v2510
        %v2547 = vadd.f32 %v2254, %v2511
        %v2548 = vadd.f32 %v2255, %v2512
        %v2549 = vadd.f32 %v2256, %v2513
        %v2550 = vadd.f32 %v2257, %v2514
        %v2551 = vadd.f32 %v2258, %v2515
        %v2552 = vadd.f32 %v2259, %v2516
        %v2553 = vld [vmem:[%s221 + $0x26] sm:$0xff]
        %v2554 = vld [vmem:[%s221 + $0x2e] sm:$0xff]
        %v2555 = vld [vmem:[%s221 + $0x36] sm:$0xff]
        %v2556 = vld [vmem:[%s221 + $0x3e] sm:$0xff]
        %v2557 = vld [vmem:[%s221 + $0x46] sm:$0xff]
        %v2558 = vld [vmem:[%s221 + $0x4e] sm:$0xff]
        %v2559 = vld [vmem:[%s221 + $0x56] sm:$0xff]
        %v2560 = vld [vmem:[%s221 + $0x5e] sm:$0xff]
        %v2561 = vld [vmem:[%s221 + $0x66] sm:$0xff]
        %v2562 = vld [vmem:[%s221 + $0x6e] sm:$0xff]
        %v2563 = vld [vmem:[%s221 + $0x76] sm:$0xff]
        %v2564 = vld [vmem:[%s221 + $0x7e] sm:$0xff]
        %v2565 = vld [vmem:[%s221 + $0x86] sm:$0xff]
        %v2566 = vld [vmem:[%s221 + $0x8e] sm:$0xff]
        %v2567 = vld [vmem:[%s221 + $0x96] sm:$0xff]
        %v2568 = vld [vmem:[%s221 + $0x9e] sm:$0xff]
        %v2569 = vld [vmem:[%s221 + $0xa6] sm:$0xff]
        %v2570 = vld [vmem:[%s221 + $0xae] sm:$0xff]
        %v2571 = vld [vmem:[%s221 + $0xb6] sm:$0xff]
        %v2572 = vld [vmem:[%s221 + $0xbe] sm:$0xff]
        %v2573 = vld [vmem:[%s221 + $0xc6] sm:$0xff]
        %v2574 = vld [vmem:[%s221 + $0xce] sm:$0xff]
        %v2575 = vld [vmem:[%s221 + $0xd6] sm:$0xff]
        %v2576 = vld [vmem:[%s221 + $0xde] sm:$0xff]
        %v2577 = vld [vmem:[%s221 + $0xe6] sm:$0xff]
        %v2578 = vld [vmem:[%s221 + $0xee] sm:$0xff]
        %v2579 = vld [vmem:[%s221 + $0xf6] sm:$0xff]
        %v2580 = vld [vmem:[%s221 + $0xfe] sm:$0xff]
        %v2581 = vld [vmem:[%s221 + $0x106] sm:$0xff]
        %v2582 = vld [vmem:[%s221 + $0x10e] sm:$0xff]
        %v2583 = vld [vmem:[%s221 + $0x116] sm:$0xff]
        %v2584 = vld [vmem:[%s221 + $0x11e] sm:$0xff]
        %v2585 = vld [vmem:[%s221 + $0x126] sm:$0xff]
        %v2586 = vld [vmem:[%s221 + $0x12e] sm:$0xff]
        %v2587 = vld [vmem:[%s221 + $0x136] sm:$0xff]
        %v2588 = vld [vmem:[%s221 + $0x13e] sm:$0xff]
        %s2589 = scalar_lea.vmem %s1, 8
        %v2590 = vld [vmem:[%s2589] sm:$0x1]
        %2592 = vset.pattern.permute.xlu0 0
        %2593 = vperm.xlu0 %2592, %v2553
        %v2594 = vpop.permute.xlu0 %2593
        %2597 = vset.pattern.permute.xlu0 0
        %2598 = vperm.xlu0 %2597, %v2554
        %v2599 = vpop.permute.xlu0 %2598
        %2602 = vset.pattern.permute.xlu0 0
        %2603 = vperm.xlu0 %2602, %v2555
        %v2604 = vpop.permute.xlu0 %2603
        %2607 = vset.pattern.permute.xlu0 0
        %2608 = vperm.xlu0 %2607, %v2556
        %v2609 = vpop.permute.xlu0 %2608
        %2612 = vset.pattern.permute.xlu0 0
        %2613 = vperm.xlu0 %2612, %v2557
        %v2614 = vpop.permute.xlu0 %2613
        %2617 = vset.pattern.permute.xlu0 0
        %2618 = vperm.xlu0 %2617, %v2558
        %v2619 = vpop.permute.xlu0 %2618
        %2622 = vset.pattern.permute.xlu0 0
        %2623 = vperm.xlu0 %2622, %v2559
        %v2624 = vpop.permute.xlu0 %2623
        %2627 = vset.pattern.permute.xlu0 0
        %2628 = vperm.xlu0 %2627, %v2560
        %v2629 = vpop.permute.xlu0 %2628
        %2632 = vset.pattern.permute.xlu0 0
        %2633 = vperm.xlu0 %2632, %v2561
        %v2634 = vpop.permute.xlu0 %2633
        %2637 = vset.pattern.permute.xlu0 0
        %2638 = vperm.xlu0 %2637, %v2562
        %v2639 = vpop.permute.xlu0 %2638
        %2642 = vset.pattern.permute.xlu0 0
        %2643 = vperm.xlu0 %2642, %v2563
        %v2644 = vpop.permute.xlu0 %2643
        %2647 = vset.pattern.permute.xlu0 0
        %2648 = vperm.xlu0 %2647, %v2564
        %v2649 = vpop.permute.xlu0 %2648
        %2652 = vset.pattern.permute.xlu0 0
        %2653 = vperm.xlu0 %2652, %v2565
        %v2654 = vpop.permute.xlu0 %2653
        %2657 = vset.pattern.permute.xlu0 0
        %2658 = vperm.xlu0 %2657, %v2566
        %v2659 = vpop.permute.xlu0 %2658
        %2662 = vset.pattern.permute.xlu0 0
        %2663 = vperm.xlu0 %2662, %v2567
        %v2664 = vpop.permute.xlu0 %2663
        %2667 = vset.pattern.permute.xlu0 0
        %2668 = vperm.xlu0 %2667, %v2568
        %v2669 = vpop.permute.xlu0 %2668
        %2672 = vset.pattern.permute.xlu0 0
        %2673 = vperm.xlu0 %2672, %v2569
        %v2674 = vpop.permute.xlu0 %2673
        %2677 = vset.pattern.permute.xlu0 0
        %2678 = vperm.xlu0 %2677, %v2570
        %v2679 = vpop.permute.xlu0 %2678
        %2682 = vset.pattern.permute.xlu0 0
        %2683 = vperm.xlu0 %2682, %v2571
        %v2684 = vpop.permute.xlu0 %2683
        %2687 = vset.pattern.permute.xlu0 0
        %2688 = vperm.xlu0 %2687, %v2572
        %v2689 = vpop.permute.xlu0 %2688
        %2692 = vset.pattern.permute.xlu0 0
        %2693 = vperm.xlu0 %2692, %v2573
        %v2694 = vpop.permute.xlu0 %2693
        %2697 = vset.pattern.permute.xlu0 0
        %2698 = vperm.xlu0 %2697, %v2574
        %v2699 = vpop.permute.xlu0 %2698
        %2702 = vset.pattern.permute.xlu0 0
        %2703 = vperm.xlu0 %2702, %v2575
        %v2704 = vpop.permute.xlu0 %2703
        %2707 = vset.pattern.permute.xlu0 0
        %2708 = vperm.xlu0 %2707, %v2576
        %v2709 = vpop.permute.xlu0 %2708
        %2712 = vset.pattern.permute.xlu0 0
        %2713 = vperm.xlu0 %2712, %v2577
        %v2714 = vpop.permute.xlu0 %2713
        %2717 = vset.pattern.permute.xlu0 0
        %2718 = vperm.xlu0 %2717, %v2578
        %v2719 = vpop.permute.xlu0 %2718
        %2722 = vset.pattern.permute.xlu0 0
        %2723 = vperm.xlu0 %2722, %v2579
        %v2724 = vpop.permute.xlu0 %2723
        %2727 = vset.pattern.permute.xlu0 0
        %2728 = vperm.xlu0 %2727, %v2580
        %v2729 = vpop.permute.xlu0 %2728
        %2732 = vset.pattern.permute.xlu0 0
        %2733 = vperm.xlu0 %2732, %v2581
        %v2734 = vpop.permute.xlu0 %2733
        %2737 = vset.pattern.permute.xlu0 0
        %2738 = vperm.xlu0 %2737, %v2582
        %v2739 = vpop.permute.xlu0 %2738
        %2742 = vset.pattern.permute.xlu0 0
        %2743 = vperm.xlu0 %2742, %v2583
        %v2744 = vpop.permute.xlu0 %2743
        %2747 = vset.pattern.permute.xlu0 0
        %2748 = vperm.xlu0 %2747, %v2584
        %v2749 = vpop.permute.xlu0 %2748
        %2752 = vset.pattern.permute.xlu0 0
        %2753 = vperm.xlu0 %2752, %v2585
        %v2754 = vpop.permute.xlu0 %2753
        %2757 = vset.pattern.permute.xlu0 0
        %2758 = vperm.xlu0 %2757, %v2586
        %v2759 = vpop.permute.xlu0 %2758
        %2762 = vset.pattern.permute.xlu0 0
        %2763 = vperm.xlu0 %2762, %v2587
        %v2764 = vpop.permute.xlu0 %2763
        %2767 = vset.pattern.permute.xlu0 0
        %2768 = vperm.xlu0 %2767, %v2588
        %v2769 = vpop.permute.xlu0 %2768
        %v2772 = vperm.slane %v2590, 0
        %v2774 = vmul.f32 %v2594, %v2772
        %v2775 = vmul.f32 %v2599, %v2772
        %v2776 = vmul.f32 %v2604, %v2772
        %v2777 = vmul.f32 %v2609, %v2772
        %v2778 = vmul.f32 %v2614, %v2772
        %v2779 = vmul.f32 %v2619, %v2772
        %v2780 = vmul.f32 %v2624, %v2772
        %v2781 = vmul.f32 %v2629, %v2772
        %v2782 = vmul.f32 %v2634, %v2772
        %v2783 = vmul.f32 %v2639, %v2772
        %v2784 = vmul.f32 %v2644, %v2772
        %v2785 = vmul.f32 %v2649, %v2772
        %v2786 = vmul.f32 %v2654, %v2772
        %v2787 = vmul.f32 %v2659, %v2772
        %v2788 = vmul.f32 %v2664, %v2772
        %v2789 = vmul.f32 %v2669, %v2772
        %v2790 = vmul.f32 %v2674, %v2772
        %v2791 = vmul.f32 %v2679, %v2772
        %v2792 = vmul.f32 %v2684, %v2772
        %v2793 = vmul.f32 %v2689, %v2772
        %v2794 = vmul.f32 %v2694, %v2772
        %v2795 = vmul.f32 %v2699, %v2772
        %v2796 = vmul.f32 %v2704, %v2772
        %v2797 = vmul.f32 %v2709, %v2772
        %v2798 = vmul.f32 %v2714, %v2772
        %v2799 = vmul.f32 %v2719, %v2772
        %v2800 = vmul.f32 %v2724, %v2772
        %v2801 = vmul.f32 %v2729, %v2772
        %v2802 = vmul.f32 %v2734, %v2772
        %v2803 = vmul.f32 %v2739, %v2772
        %v2804 = vmul.f32 %v2744, %v2772
        %v2805 = vmul.f32 %v2749, %v2772
        %v2806 = vmul.f32 %v2754, %v2772
        %v2807 = vmul.f32 %v2759, %v2772
        %v2808 = vmul.f32 %v2764, %v2772
        %v2809 = vmul.f32 %v2769, %v2772
        %v2810 = vadd.f32 %v2517, %v2774
        %v2811 = vadd.f32 %v2518, %v2775
        %v2812 = vadd.f32 %v2519, %v2776
        %v2813 = vadd.f32 %v2520, %v2777
        %v2814 = vadd.f32 %v2521, %v2778
        %v2815 = vadd.f32 %v2522, %v2779
        %v2816 = vadd.f32 %v2523, %v2780
        %v2817 = vadd.f32 %v2524, %v2781
        %v2818 = vadd.f32 %v2525, %v2782
        %v2819 = vadd.f32 %v2526, %v2783
        %v2820 = vadd.f32 %v2527, %v2784
        %v2821 = vadd.f32 %v2528, %v2785
        %v2822 = vadd.f32 %v2529, %v2786
        %v2823 = vadd.f32 %v2530, %v2787
        %v2824 = vadd.f32 %v2531, %v2788
        %v2825 = vadd.f32 %v2532, %v2789
        %v2826 = vadd.f32 %v2533, %v2790
        %v2827 = vadd.f32 %v2534, %v2791
        %v2828 = vadd.f32 %v2535, %v2792
        %v2829 = vadd.f32 %v2536, %v2793
        %v2830 = vadd.f32 %v2537, %v2794
        %v2831 = vadd.f32 %v2538, %v2795
        %v2832 = vadd.f32 %v2539, %v2796
        %v2833 = vadd.f32 %v2540, %v2797
        %v2834 = vadd.f32 %v2541, %v2798
        %v2835 = vadd.f32 %v2542, %v2799
        %v2836 = vadd.f32 %v2543, %v2800
        %v2837 = vadd.f32 %v2544, %v2801
        %v2838 = vadd.f32 %v2545, %v2802
        %v2839 = vadd.f32 %v2546, %v2803
        %v2840 = vadd.f32 %v2547, %v2804
        %v2841 = vadd.f32 %v2548, %v2805
        %v2842 = vadd.f32 %v2549, %v2806
        %v2843 = vadd.f32 %v2550, %v2807
        %v2844 = vadd.f32 %v2551, %v2808
        %v2845 = vadd.f32 %v2552, %v2809
        %v2846 = vld [vmem:[%s3] sm:$0x1]
        %v2848 = vperm.slane %v2846, 0
        %v2850 = vmul.f32 %v2810, %v2848
        %v2851 = vmul.f32 %v2811, %v2848
        %v2852 = vmul.f32 %v2812, %v2848
        %v2853 = vmul.f32 %v2813, %v2848
        %v2854 = vmul.f32 %v2814, %v2848
        %v2855 = vmul.f32 %v2815, %v2848
        %v2856 = vmul.f32 %v2816, %v2848
        %v2857 = vmul.f32 %v2817, %v2848
        %v2858 = vmul.f32 %v2818, %v2848
        %v2859 = vmul.f32 %v2819, %v2848
        %v2860 = vmul.f32 %v2820, %v2848
        %v2861 = vmul.f32 %v2821, %v2848
        %v2862 = vmul.f32 %v2822, %v2848
        %v2863 = vmul.f32 %v2823, %v2848
        %v2864 = vmul.f32 %v2824, %v2848
        %v2865 = vmul.f32 %v2825, %v2848
        %v2866 = vmul.f32 %v2826, %v2848
        %v2867 = vmul.f32 %v2827, %v2848
        %v2868 = vmul.f32 %v2828, %v2848
        %v2869 = vmul.f32 %v2829, %v2848
        %v2870 = vmul.f32 %v2830, %v2848
        %v2871 = vmul.f32 %v2831, %v2848
        %v2872 = vmul.f32 %v2832, %v2848
        %v2873 = vmul.f32 %v2833, %v2848
        %v2874 = vmul.f32 %v2834, %v2848
        %v2875 = vmul.f32 %v2835, %v2848
        %v2876 = vmul.f32 %v2836, %v2848
        %v2877 = vmul.f32 %v2837, %v2848
        %v2878 = vmul.f32 %v2838, %v2848
        %v2879 = vmul.f32 %v2839, %v2848
        %v2880 = vmul.f32 %v2840, %v2848
        %v2881 = vmul.f32 %v2841, %v2848
        %v2882 = vmul.f32 %v2842, %v2848
        %v2883 = vmul.f32 %v2843, %v2848
        %v2884 = vmul.f32 %v2844, %v2848
        %v2885 = vmul.f32 %v2845, %v2848
        %v2886 = vld [vmem:[%s4] sm:$0x1]
        %v2888 = vperm.slane %v2886, 0
        %v2890 = vadd.f32 %v2850, %v2888
        %v2891 = vadd.f32 %v2851, %v2888
        %v2892 = vadd.f32 %v2852, %v2888
        %v2893 = vadd.f32 %v2853, %v2888
        %v2894 = vadd.f32 %v2854, %v2888
        %v2895 = vadd.f32 %v2855, %v2888
        %v2896 = vadd.f32 %v2856, %v2888
        %v2897 = vadd.f32 %v2857, %v2888
        %v2898 = vadd.f32 %v2858, %v2888
        %v2899 = vadd.f32 %v2859, %v2888
        %v2900 = vadd.f32 %v2860, %v2888
        %v2901 = vadd.f32 %v2861, %v2888
        %v2902 = vadd.f32 %v2862, %v2888
        %v2903 = vadd.f32 %v2863, %v2888
        %v2904 = vadd.f32 %v2864, %v2888
        %v2905 = vadd.f32 %v2865, %v2888
        %v2906 = vadd.f32 %v2866, %v2888
        %v2907 = vadd.f32 %v2867, %v2888
        %v2908 = vadd.f32 %v2868, %v2888
        %v2909 = vadd.f32 %v2869, %v2888
        %v2910 = vadd.f32 %v2870, %v2888
        %v2911 = vadd.f32 %v2871, %v2888
        %v2912 = vadd.f32 %v2872, %v2888
        %v2913 = vadd.f32 %v2873, %v2888
        %v2914 = vadd.f32 %v2874, %v2888
        %v2915 = vadd.f32 %v2875, %v2888
        %v2916 = vadd.f32 %v2876, %v2888
        %v2917 = vadd.f32 %v2877, %v2888
        %v2918 = vadd.f32 %v2878, %v2888
        %v2919 = vadd.f32 %v2879, %v2888
        %v2920 = vadd.f32 %v2880, %v2888
        %v2921 = vadd.f32 %v2881, %v2888
        %v2922 = vadd.f32 %v2882, %v2888
        %v2923 = vadd.f32 %v2883, %v2888
        %v2924 = vadd.f32 %v2884, %v2888
        %v2925 = vadd.f32 %v2885, %v2888
        %v2926 = vmax.f32 %v2890, 0.0
        %v2927 = vmax.f32 %v2891, 0.0
        %v2928 = vmax.f32 %v2892, 0.0
        %v2929 = vmax.f32 %v2893, 0.0
        %v2930 = vmax.f32 %v2894, 0.0
        %v2931 = vmax.f32 %v2895, 0.0
        %v2932 = vmax.f32 %v2896, 0.0
        %v2933 = vmax.f32 %v2897, 0.0
        %v2934 = vmax.f32 %v2898, 0.0
        %v2935 = vmax.f32 %v2899, 0.0
        %v2936 = vmax.f32 %v2900, 0.0
        %v2937 = vmax.f32 %v2901, 0.0
        %v2938 = vmax.f32 %v2902, 0.0
        %v2939 = vmax.f32 %v2903, 0.0
        %v2940 = vmax.f32 %v2904, 0.0
        %v2941 = vmax.f32 %v2905, 0.0
        %v2942 = vmax.f32 %v2906, 0.0
        %v2943 = vmax.f32 %v2907, 0.0
        %v2944 = vmax.f32 %v2908, 0.0
        %v2945 = vmax.f32 %v2909, 0.0
        %v2946 = vmax.f32 %v2910, 0.0
        %v2947 = vmax.f32 %v2911, 0.0
        %v2948 = vmax.f32 %v2912, 0.0
        %v2949 = vmax.f32 %v2913, 0.0
        %v2950 = vmax.f32 %v2914, 0.0
        %v2951 = vmax.f32 %v2915, 0.0
        %v2952 = vmax.f32 %v2916, 0.0
        %v2953 = vmax.f32 %v2917, 0.0
        %v2954 = vmax.f32 %v2918, 0.0
        %v2955 = vmax.f32 %v2919, 0.0
        %v2956 = vmax.f32 %v2920, 0.0
        %v2957 = vmax.f32 %v2921, 0.0
        %v2958 = vmax.f32 %v2922, 0.0
        %v2959 = vmax.f32 %v2923, 0.0
        %v2960 = vmax.f32 %v2924, 0.0
        %v2961 = vmax.f32 %v2925, 0.0
        %2962 = vst.msk [vmem:[#allocation2] sm:$0xff] %vm222, %v2926
        %2963 = vst.msk [vmem:[#allocation2 + $0x8] sm:$0xff] %vm222, %v2927
        %2964 = vst.msk [vmem:[#allocation2 + $0x10] sm:$0xff] %vm222, %v2928
        %2965 = vst.msk [vmem:[#allocation2 + $0x18] sm:$0xff] %vm222, %v2929
        %2966 = vst.msk [vmem:[#allocation2 + $0x20] sm:$0xff] %vm222, %v2930
        %2967 = vst.msk [vmem:[#allocation2 + $0x28] sm:$0xff] %vm222, %v2931
        %2968 = vst.msk [vmem:[#allocation2 + $0x30] sm:$0xff] %vm222, %v2932
        %2969 = vst.msk [vmem:[#allocation2 + $0x38] sm:$0xff] %vm222, %v2933
        %2970 = vst.msk [vmem:[#allocation2 + $0x40] sm:$0xff] %vm222, %v2934
        %2971 = vst.msk [vmem:[#allocation2 + $0x48] sm:$0xff] %vm222, %v2935
        %2972 = vst.msk [vmem:[#allocation2 + $0x50] sm:$0xff] %vm222, %v2936
        %2973 = vst.msk [vmem:[#allocation2 + $0x58] sm:$0xff] %vm222, %v2937
        %2974 = vst.msk [vmem:[#allocation2 + $0x60] sm:$0xff] %vm222, %v2938
        %2975 = vst.msk [vmem:[#allocation2 + $0x68] sm:$0xff] %vm222, %v2939
        %2976 = vst.msk [vmem:[#allocation2 + $0x70] sm:$0xff] %vm222, %v2940
        %2977 = vst.msk [vmem:[#allocation2 + $0x78] sm:$0xff] %vm222, %v2941
        %2978 = vst.msk [vmem:[#allocation2 + $0x80] sm:$0xff] %vm222, %v2942
        %2979 = vst.msk [vmem:[#allocation2 + $0x88] sm:$0xff] %vm222, %v2943
        %2980 = vst.msk [vmem:[#allocation2 + $0x90] sm:$0xff] %vm222, %v2944
        %2981 = vst.msk [vmem:[#allocation2 + $0x98] sm:$0xff] %vm222, %v2945
        %2982 = vst.msk [vmem:[#allocation2 + $0xa0] sm:$0xff] %vm222, %v2946
        %2983 = vst.msk [vmem:[#allocation2 + $0xa8] sm:$0xff] %vm222, %v2947
        %2984 = vst.msk [vmem:[#allocation2 + $0xb0] sm:$0xff] %vm222, %v2948
        %2985 = vst.msk [vmem:[#allocation2 + $0xb8] sm:$0xff] %vm222, %v2949
        %2986 = vst.msk [vmem:[#allocation2 + $0xc0] sm:$0xff] %vm222, %v2950
        %2987 = vst.msk [vmem:[#allocation2 + $0xc8] sm:$0xff] %vm222, %v2951
        %2988 = vst.msk [vmem:[#allocation2 + $0xd0] sm:$0xff] %vm222, %v2952
        %2989 = vst.msk [vmem:[#allocation2 + $0xd8] sm:$0xff] %vm222, %v2953
        %2990 = vst.msk [vmem:[#allocation2 + $0xe0] sm:$0xff] %vm222, %v2954
        %2991 = vst.msk [vmem:[#allocation2 + $0xe8] sm:$0xff] %vm222, %v2955
        %2992 = vst.msk [vmem:[#allocation2 + $0xf0] sm:$0xff] %vm222, %v2956
        %2993 = vst.msk [vmem:[#allocation2 + $0xf8] sm:$0xff] %vm222, %v2957
        %2994 = vst.msk [vmem:[#allocation2 + $0x100] sm:$0xff] %vm222, %v2958
        %2995 = vst.msk [vmem:[#allocation2 + $0x108] sm:$0xff] %vm222, %v2959
        %2996 = vst.msk [vmem:[#allocation2 + $0x110] sm:$0xff] %vm222, %v2960
        %2997 = vst.msk [vmem:[#allocation2 + $0x118] sm:$0xff] %vm222, %v2961
        %v2998 = vld [vmem:[#allocation2] ss:$2 sm:$0xff]
        %s2999 = scalar_lea.vmem [#allocation2], 1
        %v3000 = vld [vmem:[%s2999] ss:$2 sm:$0xff]
        %s3001 = scalar_lea.vmem [#allocation2], 18
        %v3002 = vld [vmem:[%s3001] ss:$2 sm:$0xff]
        %s3003 = scalar_lea.vmem [#allocation2], 19
        %v3004 = vld [vmem:[%s3003] ss:$2 sm:$0xff]
        %v3005 = vmax.f32 %v2998, %v3000
        %v3006 = vmax.f32 %v3002, %v3004
        %v3007 = vmax.f32 %v3005, %v3006
        %3008 = vst.msk [vmem:[#allocation4 + $0xb] sm:$0xff] %vm222, %v3007
        %s3009 = scalar_lea.vmem [#allocation2], 36
        %v3010 = vld [vmem:[%s3009] ss:$2 sm:$0xff]
        %s3011 = scalar_lea.vmem [#allocation2], 37
        %v3012 = vld [vmem:[%s3011] ss:$2 sm:$0xff]
        %s3013 = scalar_lea.vmem [#allocation2], 54
        %v3014 = vld [vmem:[%s3013] ss:$2 sm:$0xff]
        %s3015 = scalar_lea.vmem [#allocation2], 55
        %v3016 = vld [vmem:[%s3015] ss:$2 sm:$0xff]
        %v3017 = vmax.f32 %v3010, %v3012
        %v3018 = vmax.f32 %v3014, %v3016
        %v3019 = vmax.f32 %v3017, %v3018
        %3020 = vst.msk [vmem:[#allocation4 + $0x15] sm:$0xff] %vm222, %v3019
        %s3021 = scalar_lea.vmem [#allocation2], 72
        %v3022 = vld [vmem:[%s3021] ss:$2 sm:$0xff]
        %s3023 = scalar_lea.vmem [#allocation2], 73
        %v3024 = vld [vmem:[%s3023] ss:$2 sm:$0xff]
        %s3025 = scalar_lea.vmem [#allocation2], 90
        %v3026 = vld [vmem:[%s3025] ss:$2 sm:$0xff]
        %s3027 = scalar_lea.vmem [#allocation2], 91
        %v3028 = vld [vmem:[%s3027] ss:$2 sm:$0xff]
        %v3029 = vmax.f32 %v3022, %v3024
        %v3030 = vmax.f32 %v3026, %v3028
        %v3031 = vmax.f32 %v3029, %v3030
        %3032 = vst.msk [vmem:[#allocation4 + $0x1f] sm:$0xff] %vm222, %v3031
        %s3033 = scalar_lea.vmem [#allocation2], 108
        %v3034 = vld [vmem:[%s3033] ss:$2 sm:$0xff]
        %s3035 = scalar_lea.vmem [#allocation2], 109
        %v3036 = vld [vmem:[%s3035] ss:$2 sm:$0xff]
        %s3037 = scalar_lea.vmem [#allocation2], 126
        %v3038 = vld [vmem:[%s3037] ss:$2 sm:$0xff]
        %s3039 = scalar_lea.vmem [#allocation2], 127
        %v3040 = vld [vmem:[%s3039] ss:$2 sm:$0xff]
        %v3041 = vmax.f32 %v3034, %v3036
        %v3042 = vmax.f32 %v3038, %v3040
        %v3043 = vmax.f32 %v3041, %v3042
        %3044 = vst.msk [vmem:[#allocation4 + $0x29] sm:$0xff] %vm222, %v3043
        %s3045 = scalar_lea.vmem [#allocation2], 144
        %v3046 = vld [vmem:[%s3045] ss:$2 sm:$0xff]
        %s3047 = scalar_lea.vmem [#allocation2], 145
        %v3048 = vld [vmem:[%s3047] ss:$2 sm:$0xff]
        %s3049 = scalar_lea.vmem [#allocation2], 162
        %v3050 = vld [vmem:[%s3049] ss:$2 sm:$0xff]
        %s3051 = scalar_lea.vmem [#allocation2], 163
        %v3052 = vld [vmem:[%s3051] ss:$2 sm:$0xff]
        %v3053 = vmax.f32 %v3046, %v3048
        %v3054 = vmax.f32 %v3050, %v3052
        %v3055 = vmax.f32 %v3053, %v3054
        %3056 = vst.msk [vmem:[#allocation4 + $0x33] sm:$0xff] %vm222, %v3055
        %s3057 = scalar_lea.vmem [#allocation2], 180
        %v3058 = vld [vmem:[%s3057] ss:$2 sm:$0xff]
        %s3059 = scalar_lea.vmem [#allocation2], 181
        %v3060 = vld [vmem:[%s3059] ss:$2 sm:$0xff]
        %s3061 = scalar_lea.vmem [#allocation2], 198
        %v3062 = vld [vmem:[%s3061] ss:$2 sm:$0xff]
        %s3063 = scalar_lea.vmem [#allocation2], 199
        %v3064 = vld [vmem:[%s3063] ss:$2 sm:$0xff]
        %v3065 = vmax.f32 %v3058, %v3060
        %v3066 = vmax.f32 %v3062, %v3064
        %v3067 = vmax.f32 %v3065, %v3066
        %3068 = vst.msk [vmem:[#allocation4 + $0x3d] sm:$0xff] %vm222, %v3067
        %s3069 = scalar_lea.vmem [#allocation2], 216
        %v3070 = vld [vmem:[%s3069] ss:$2 sm:$0xff]
        %s3071 = scalar_lea.vmem [#allocation2], 217
        %v3072 = vld [vmem:[%s3071] ss:$2 sm:$0xff]
        %s3073 = scalar_lea.vmem [#allocation2], 234
        %v3074 = vld [vmem:[%s3073] ss:$2 sm:$0xff]
        %s3075 = scalar_lea.vmem [#allocation2], 235
        %v3076 = vld [vmem:[%s3075] ss:$2 sm:$0xff]
        %v3077 = vmax.f32 %v3070, %v3072
        %v3078 = vmax.f32 %v3074, %v3076
        %v3079 = vmax.f32 %v3077, %v3078
        %3080 = vst.msk [vmem:[#allocation4 + $0x47] sm:$0xff] %vm222, %v3079
        %s3081 = scalar_lea.vmem [#allocation2], 252
        %v3082 = vld [vmem:[%s3081] ss:$2 sm:$0xff]
        %s3083 = scalar_lea.vmem [#allocation2], 253
        %v3084 = vld [vmem:[%s3083] ss:$2 sm:$0xff]
        %s3085 = scalar_lea.vmem [#allocation2], 270
        %v3086 = vld [vmem:[%s3085] ss:$2 sm:$0xff]
        %s3087 = scalar_lea.vmem [#allocation2], 271
        %v3088 = vld [vmem:[%s3087] ss:$2 sm:$0xff]
        %v3089 = vmax.f32 %v3082, %v3084
        %v3090 = vmax.f32 %v3086, %v3088
        %v3091 = vmax.f32 %v3089, %v3090
        %3092 = vst.msk [vmem:[#allocation4 + $0x51] sm:$0xff] %vm222, %v3091
        %v3093 = vld [vmem:[%s2] sm:$0xff]
        %v3094 = vld [vmem:[%s2 + $0x8] sm:$0xff]
        %v3095 = vld [vmem:[%s2 + $0x10] sm:$0xff]
        %v3096 = vld [vmem:[%s2 + $0x18] sm:$0xff]
        %v3097 = vld [vmem:[%s2 + $0x20] sm:$0xff]
        %v3098 = vld [vmem:[%s2 + $0x28] sm:$0xff]
        %v3099 = vld [vmem:[%s2 + $0x30] sm:$0xff]
        %v3100 = vld [vmem:[%s2 + $0x38] sm:$0xff]
        %v3101 = vld [vmem:[%s2 + $0x40] sm:$0xff]
        %v3102 = vld [vmem:[%s2 + $0x48] sm:$0xff]
        %v3103 = vld [vmem:[%s2 + $0x50] sm:$0xff]
        %v3104 = vld [vmem:[%s2 + $0x58] sm:$0xff]
        %v3105 = vld [vmem:[%s2 + $0x60] sm:$0xff]
        %v3106 = vld [vmem:[%s2 + $0x68] sm:$0xff]
        %v3107 = vld [vmem:[%s2 + $0x70] sm:$0xff]
        %v3108 = vld [vmem:[%s2 + $0x78] sm:$0xff]
        %v3109 = vld [vmem:[%s2 + $0x80] sm:$0xff]
        %v3110 = vld [vmem:[%s2 + $0x88] sm:$0xff]
        %v3111 = vld [vmem:[%s2 + $0x90] sm:$0xff]
        %v3112 = vld [vmem:[%s2 + $0x98] sm:$0xff]
        %v3113 = vld [vmem:[%s2 + $0xa0] sm:$0xff]
        %v3114 = vld [vmem:[%s2 + $0xa8] sm:$0xff]
        %v3115 = vld [vmem:[%s2 + $0xb0] sm:$0xff]
        %v3116 = vld [vmem:[%s2 + $0xb8] sm:$0xff]
        %v3117 = vld [vmem:[%s2 + $0xc0] sm:$0xff]
        %v3118 = vld [vmem:[%s2 + $0xc8] sm:$0xff]
        %v3119 = vld [vmem:[%s2 + $0xd0] sm:$0xff]
        %v3120 = vld [vmem:[%s2 + $0xd8] sm:$0xff]
        %v3121 = vld [vmem:[%s2 + $0xe0] sm:$0xff]
        %v3122 = vld [vmem:[%s2 + $0xe8] sm:$0xff]
        %v3123 = vld [vmem:[%s2 + $0xf0] sm:$0xff]
        %v3124 = vld [vmem:[%s2 + $0xf8] sm:$0xff]
        %v3125 = vld [vmem:[%s2 + $0x100] sm:$0xff]
        %v3126 = vld [vmem:[%s2 + $0x108] sm:$0xff]
        %v3127 = vld [vmem:[%s2 + $0x110] sm:$0xff]
        %v3128 = vld [vmem:[%s2 + $0x118] sm:$0xff]
        %v3129 = vld [vmem:[%s2 + $0x120] sm:$0xff]
        %v3130 = vld [vmem:[%s2 + $0x128] sm:$0xff]
        %v3131 = vld [vmem:[%s2 + $0x130] sm:$0xff]
        %v3132 = vld [vmem:[%s2 + $0x138] sm:$0xff]
        %v3133 = vld [vmem:[%s2 + $0x140] sm:$0xff]
        %v3134 = vld [vmem:[%s2 + $0x148] sm:$0xff]
        %v3135 = vld [vmem:[%s2 + $0x150] sm:$0xff]
        %v3136 = vld [vmem:[%s2 + $0x158] sm:$0xff]
        %v3137 = vld [vmem:[%s2 + $0x160] sm:$0xff]
        %v3138 = vld [vmem:[%s2 + $0x168] sm:$0xff]
        %v3139 = vld [vmem:[%s2 + $0x170] sm:$0xff]
        %v3140 = vld [vmem:[%s2 + $0x178] sm:$0xff]
        %v3141 = vld [vmem:[%s2 + $0x180] sm:$0xff]
        %v3142 = vld [vmem:[%s2 + $0x188] sm:$0xff]
        %v3143 = vld [vmem:[%s2 + $0x190] sm:$0xff]
        %v3144 = vld [vmem:[%s2 + $0x198] sm:$0xff]
        %v3145 = vld [vmem:[%s2 + $0x1a0] sm:$0xff]
        %v3146 = vld [vmem:[%s2 + $0x1a8] sm:$0xff]
        %v3147 = vld [vmem:[%s2 + $0x1b0] sm:$0xff]
        %v3148 = vld [vmem:[%s2 + $0x1b8] sm:$0xff]
        %v3149 = vld [vmem:[%s2 + $0x1c0] sm:$0xff]
        %v3150 = vld [vmem:[%s2 + $0x1c8] sm:$0xff]
        %v3151 = vld [vmem:[%s2 + $0x1d0] sm:$0xff]
        %v3152 = vld [vmem:[%s2 + $0x1d8] sm:$0xff]
        %v3153 = vld [vmem:[%s2 + $0x1e0] sm:$0xff]
        %v3154 = vld [vmem:[%s2 + $0x1e8] sm:$0xff]
        %v3155 = vld [vmem:[%s2 + $0x1f0] sm:$0xff]
        %v3156 = vld [vmem:[%s2 + $0x1f8] sm:$0xff]
        %v3157 = vld [vmem:[%s2 + $0x200] sm:$0xff]
        %v3158 = vld [vmem:[%s2 + $0x208] sm:$0xff]
        %v3159 = vld [vmem:[%s2 + $0x210] sm:$0xff]
        %v3160 = vld [vmem:[%s2 + $0x218] sm:$0xff]
        %v3161 = vld [vmem:[%s2 + $0x220] sm:$0xff]
        %v3162 = vld [vmem:[%s2 + $0x228] sm:$0xff]
        %v3163 = vld [vmem:[%s2 + $0x230] sm:$0xff]
        %v3164 = vld [vmem:[%s2 + $0x238] sm:$0xff]
        %s3165 = scalar_lea.vmem %s3, 1
        %v3166 = vld [vmem:[%s3165] sm:$0x1]
        %s3167 = scalar_lea.vmem %s4, 1
        %v3168 = vld [vmem:[%s3167] sm:$0x1]
        %v3169 = vld [vmem:[#allocation4] sm:$0xff]
        %v3170 = vld [vmem:[#allocation4 + $0x8] sm:$0xff]
        %v3171 = vld [vmem:[#allocation4 + $0x10] sm:$0xff]
        %v3172 = vld [vmem:[#allocation4 + $0x18] sm:$0xff]
        %v3173 = vld [vmem:[#allocation4 + $0x20] sm:$0xff]
        %v3174 = vld [vmem:[#allocation4 + $0x28] sm:$0xff]
        %v3175 = vld [vmem:[#allocation4 + $0x30] sm:$0xff]
        %v3176 = vld [vmem:[#allocation4 + $0x38] sm:$0xff]
        %v3177 = vld [vmem:[#allocation4 + $0x40] sm:$0xff]
        %v3178 = vld [vmem:[#allocation4 + $0x48] sm:$0xff]
        %3179 = vst.msk [vmem:[#allocation3] sm:$0xff] %vm222, %v3169
        %3180 = vst.msk [vmem:[#allocation3 + $0x28] sm:$0xff] %vm222, %v3170
        %3181 = vst.msk [vmem:[#allocation3 + $0x50] sm:$0xff] %vm222, %v3171
        %3182 = vst.msk [vmem:[#allocation3 + $0x78] sm:$0xff] %vm222, %v3172
        %3183 = vst.msk [vmem:[#allocation3 + $0xa0] sm:$0xff] %vm222, %v3173
        %3184 = vst.msk [vmem:[#allocation3 + $0xc8] sm:$0xff] %vm222, %v3174
        %3185 = vst.msk [vmem:[#allocation3 + $0xf0] sm:$0xff] %vm222, %v3175
        %3186 = vst.msk [vmem:[#allocation3 + $0x118] sm:$0xff] %vm222, %v3176
        %3187 = vst.msk [vmem:[#allocation3 + $0x140] sm:$0xff] %vm222, %v3177
        %3188 = vst.msk [vmem:[#allocation3 + $0x168] sm:$0xff] %vm222, %v3178
        %v3189 = vld [vmem:[#allocation4 + $0x1] sm:$0xff]
        %v3190 = vld [vmem:[#allocation4 + $0x9] sm:$0xff]
        %v3191 = vld [vmem:[#allocation4 + $0x11] sm:$0xff]
        %v3192 = vld [vmem:[#allocation4 + $0x19] sm:$0xff]
        %v3193 = vld [vmem:[#allocation4 + $0x21] sm:$0xff]
        %v3194 = vld [vmem:[#allocation4 + $0x29] sm:$0xff]
        %v3195 = vld [vmem:[#allocation4 + $0x31] sm:$0xff]
        %v3196 = vld [vmem:[#allocation4 + $0x39] sm:$0xff]
        %v3197 = vld [vmem:[#allocation4 + $0x41] sm:$0xff]
        %v3198 = vld [vmem:[#allocation4 + $0x49] sm:$0xff]
        %3209 = vrot.lane.b32.xlu0 %v3189, 64
        %v3210 = vpop.permute.xlu0 %3209
        %3211 = vrot.lane.b32.xlu0 %v3190, 64
        %v3212 = vpop.permute.xlu0 %3211
        %3213 = vrot.lane.b32.xlu0 %v3191, 64
        %v3214 = vpop.permute.xlu0 %3213
        %3215 = vrot.lane.b32.xlu0 %v3192, 64
        %v3216 = vpop.permute.xlu0 %3215
        %3217 = vrot.lane.b32.xlu0 %v3193, 64
        %v3218 = vpop.permute.xlu0 %3217
        %3219 = vrot.lane.b32.xlu0 %v3194, 64
        %v3220 = vpop.permute.xlu0 %3219
        %3221 = vrot.lane.b32.xlu0 %v3195, 64
        %v3222 = vpop.permute.xlu0 %3221
        %3223 = vrot.lane.b32.xlu0 %v3196, 64
        %v3224 = vpop.permute.xlu0 %3223
        %3225 = vrot.lane.b32.xlu0 %v3197, 64
        %v3226 = vpop.permute.xlu0 %3225
        %3227 = vrot.lane.b32.xlu0 %v3198, 64
        %v3228 = vpop.permute.xlu0 %3227
        %vm3239 = vcmask 1048064
        %3240 = vst.msk [vmem:[#allocation3] sm:$0xff] %vm3239, %v3210
        %3241 = vst.msk [vmem:[#allocation3 + $0x28] sm:$0xff] %vm3239, %v3212
        %3242 = vst.msk [vmem:[#allocation3 + $0x50] sm:$0xff] %vm3239, %v3214
        %3243 = vst.msk [vmem:[#allocation3 + $0x78] sm:$0xff] %vm3239, %v3216
        %3244 = vst.msk [vmem:[#allocation3 + $0xa0] sm:$0xff] %vm3239, %v3218
        %3245 = vst.msk [vmem:[#allocation3 + $0xc8] sm:$0xff] %vm3239, %v3220
        %3246 = vst.msk [vmem:[#allocation3 + $0xf0] sm:$0xff] %vm3239, %v3222
        %3247 = vst.msk [vmem:[#allocation3 + $0x118] sm:$0xff] %vm3239, %v3224
        %3248 = vst.msk [vmem:[#allocation3 + $0x140] sm:$0xff] %vm3239, %v3226
        %3249 = vst.msk [vmem:[#allocation3 + $0x168] sm:$0xff] %vm3239, %v3228
        %v3250 = vld [vmem:[#allocation4 + $0x2] sm:$0xff]
        %v3251 = vld [vmem:[#allocation4 + $0xa] sm:$0xff]
        %v3252 = vld [vmem:[#allocation4 + $0x12] sm:$0xff]
        %v3253 = vld [vmem:[#allocation4 + $0x1a] sm:$0xff]
        %v3254 = vld [vmem:[#allocation4 + $0x22] sm:$0xff]
        %v3255 = vld [vmem:[#allocation4 + $0x2a] sm:$0xff]
        %v3256 = vld [vmem:[#allocation4 + $0x32] sm:$0xff]
        %v3257 = vld [vmem:[#allocation4 + $0x3a] sm:$0xff]
        %v3258 = vld [vmem:[#allocation4 + $0x42] sm:$0xff]
        %v3259 = vld [vmem:[#allocation4 + $0x4a] sm:$0xff]
        %3260 = vst.msk [vmem:[#allocation3 + $0x8] sm:$0xff] %vm222, %v3250
        %3261 = vst.msk [vmem:[#allocation3 + $0x30] sm:$0xff] %vm222, %v3251
        %3262 = vst.msk [vmem:[#allocation3 + $0x58] sm:$0xff] %vm222, %v3252
        %3263 = vst.msk [vmem:[#allocation3 + $0x80] sm:$0xff] %vm222, %v3253
        %3264 = vst.msk [vmem:[#allocation3 + $0xa8] sm:$0xff] %vm222, %v3254
        %3265 = vst.msk [vmem:[#allocation3 + $0xd0] sm:$0xff] %vm222, %v3255
        %3266 = vst.msk [vmem:[#allocation3 + $0xf8] sm:$0xff] %vm222, %v3256
        %3267 = vst.msk [vmem:[#allocation3 + $0x120] sm:$0xff] %vm222, %v3257
        %3268 = vst.msk [vmem:[#allocation3 + $0x148] sm:$0xff] %vm222, %v3258
        %3269 = vst.msk [vmem:[#allocation3 + $0x170] sm:$0xff] %vm222, %v3259
        %v3270 = vld [vmem:[#allocation4 + $0xa] sm:$0xff]
        %v3271 = vld [vmem:[#allocation4 + $0x12] sm:$0xff]
        %v3272 = vld [vmem:[#allocation4 + $0x1a] sm:$0xff]
        %v3273 = vld [vmem:[#allocation4 + $0x22] sm:$0xff]
        %v3274 = vld [vmem:[#allocation4 + $0x2a] sm:$0xff]
        %v3275 = vld [vmem:[#allocation4 + $0x32] sm:$0xff]
        %v3276 = vld [vmem:[#allocation4 + $0x3a] sm:$0xff]
        %v3277 = vld [vmem:[#allocation4 + $0x42] sm:$0xff]
        %v3278 = vld [vmem:[#allocation4 + $0x4a] sm:$0xff]
        %v3279 = vld [vmem:[#allocation4 + $0x52] sm:$0xff]
        %3290 = vrot.lane.b32.xlu0 %v3270, 64
        %v3291 = vpop.permute.xlu0 %3290
        %3292 = vrot.lane.b32.xlu0 %v3271, 64
        %v3293 = vpop.permute.xlu0 %3292
        %3294 = vrot.lane.b32.xlu0 %v3272, 64
        %v3295 = vpop.permute.xlu0 %3294
        %3296 = vrot.lane.b32.xlu0 %v3273, 64
        %v3297 = vpop.permute.xlu0 %3296
        %3298 = vrot.lane.b32.xlu0 %v3274, 64
        %v3299 = vpop.permute.xlu0 %3298
        %3300 = vrot.lane.b32.xlu0 %v3275, 64
        %v3301 = vpop.permute.xlu0 %3300
        %3302 = vrot.lane.b32.xlu0 %v3276, 64
        %v3303 = vpop.permute.xlu0 %3302
        %3304 = vrot.lane.b32.xlu0 %v3277, 64
        %v3305 = vpop.permute.xlu0 %3304
        %3306 = vrot.lane.b32.xlu0 %v3278, 64
        %v3307 = vpop.permute.xlu0 %3306
        %3308 = vrot.lane.b32.xlu0 %v3279, 64
        %v3309 = vpop.permute.xlu0 %3308
        %3320 = vst.msk [vmem:[#allocation3 + $0x8] sm:$0xff] %vm3239, %v3291
        %3321 = vst.msk [vmem:[#allocation3 + $0x30] sm:$0xff] %vm3239, %v3293
        %3322 = vst.msk [vmem:[#allocation3 + $0x58] sm:$0xff] %vm3239, %v3295
        %3323 = vst.msk [vmem:[#allocation3 + $0x80] sm:$0xff] %vm3239, %v3297
        %3324 = vst.msk [vmem:[#allocation3 + $0xa8] sm:$0xff] %vm3239, %v3299
        %3325 = vst.msk [vmem:[#allocation3 + $0xd0] sm:$0xff] %vm3239, %v3301
        %3326 = vst.msk [vmem:[#allocation3 + $0xf8] sm:$0xff] %vm3239, %v3303
        %3327 = vst.msk [vmem:[#allocation3 + $0x120] sm:$0xff] %vm3239, %v3305
        %3328 = vst.msk [vmem:[#allocation3 + $0x148] sm:$0xff] %vm3239, %v3307
        %3329 = vst.msk [vmem:[#allocation3 + $0x170] sm:$0xff] %vm3239, %v3309
        %v3330 = vld [vmem:[#allocation4 + $0xb] sm:$0xff]
        %v3331 = vld [vmem:[#allocation4 + $0x13] sm:$0xff]
        %v3332 = vld [vmem:[#allocation4 + $0x1b] sm:$0xff]
        %v3333 = vld [vmem:[#allocation4 + $0x23] sm:$0xff]
        %v3334 = vld [vmem:[#allocation4 + $0x2b] sm:$0xff]
        %v3335 = vld [vmem:[#allocation4 + $0x33] sm:$0xff]
        %v3336 = vld [vmem:[#allocation4 + $0x3b] sm:$0xff]
        %v3337 = vld [vmem:[#allocation4 + $0x43] sm:$0xff]
        %v3338 = vld [vmem:[#allocation4 + $0x4b] sm:$0xff]
        %v3339 = vld [vmem:[#allocation4 + $0x53] sm:$0xff]
        %3340 = vst.msk [vmem:[#allocation3 + $0x10] sm:$0xff] %vm222, %v3330
        %3341 = vst.msk [vmem:[#allocation3 + $0x38] sm:$0xff] %vm222, %v3331
        %3342 = vst.msk [vmem:[#allocation3 + $0x60] sm:$0xff] %vm222, %v3332
        %3343 = vst.msk [vmem:[#allocation3 + $0x88] sm:$0xff] %vm222, %v3333
        %3344 = vst.msk [vmem:[#allocation3 + $0xb0] sm:$0xff] %vm222, %v3334
        %3345 = vst.msk [vmem:[#allocation3 + $0xd8] sm:$0xff] %vm222, %v3335
        %3346 = vst.msk [vmem:[#allocation3 + $0x100] sm:$0xff] %vm222, %v3336
        %3347 = vst.msk [vmem:[#allocation3 + $0x128] sm:$0xff] %vm222, %v3337
        %3348 = vst.msk [vmem:[#allocation3 + $0x150] sm:$0xff] %vm222, %v3338
        %3349 = vst.msk [vmem:[#allocation3 + $0x178] sm:$0xff] %vm222, %v3339
        %v3350 = vld [vmem:[#allocation4 + $0xc] sm:$0xff]
        %v3351 = vld [vmem:[#allocation4 + $0x14] sm:$0xff]
        %v3352 = vld [vmem:[#allocation4 + $0x1c] sm:$0xff]
        %v3353 = vld [vmem:[#allocation4 + $0x24] sm:$0xff]
        %v3354 = vld [vmem:[#allocation4 + $0x2c] sm:$0xff]
        %v3355 = vld [vmem:[#allocation4 + $0x34] sm:$0xff]
        %v3356 = vld [vmem:[#allocation4 + $0x3c] sm:$0xff]
        %v3357 = vld [vmem:[#allocation4 + $0x44] sm:$0xff]
        %v3358 = vld [vmem:[#allocation4 + $0x4c] sm:$0xff]
        %v3359 = vld [vmem:[#allocation4 + $0x54] sm:$0xff]
        %3370 = vrot.lane.b32.xlu0 %v3350, 64
        %v3371 = vpop.permute.xlu0 %3370
        %3372 = vrot.lane.b32.xlu0 %v3351, 64
        %v3373 = vpop.permute.xlu0 %3372
        %3374 = vrot.lane.b32.xlu0 %v3352, 64
        %v3375 = vpop.permute.xlu0 %3374
        %3376 = vrot.lane.b32.xlu0 %v3353, 64
        %v3377 = vpop.permute.xlu0 %3376
        %3378 = vrot.lane.b32.xlu0 %v3354, 64
        %v3379 = vpop.permute.xlu0 %3378
        %3380 = vrot.lane.b32.xlu0 %v3355, 64
        %v3381 = vpop.permute.xlu0 %3380
        %3382 = vrot.lane.b32.xlu0 %v3356, 64
        %v3383 = vpop.permute.xlu0 %3382
        %3384 = vrot.lane.b32.xlu0 %v3357, 64
        %v3385 = vpop.permute.xlu0 %3384
        %3386 = vrot.lane.b32.xlu0 %v3358, 64
        %v3387 = vpop.permute.xlu0 %3386
        %3388 = vrot.lane.b32.xlu0 %v3359, 64
        %v3389 = vpop.permute.xlu0 %3388
        %3400 = vst.msk [vmem:[#allocation3 + $0x10] sm:$0xff] %vm3239, %v3371
        %3401 = vst.msk [vmem:[#allocation3 + $0x38] sm:$0xff] %vm3239, %v3373
        %3402 = vst.msk [vmem:[#allocation3 + $0x60] sm:$0xff] %vm3239, %v3375
        %3403 = vst.msk [vmem:[#allocation3 + $0x88] sm:$0xff] %vm3239, %v3377
        %3404 = vst.msk [vmem:[#allocation3 + $0xb0] sm:$0xff] %vm3239, %v3379
        %3405 = vst.msk [vmem:[#allocation3 + $0xd8] sm:$0xff] %vm3239, %v3381
        %3406 = vst.msk [vmem:[#allocation3 + $0x100] sm:$0xff] %vm3239, %v3383
        %3407 = vst.msk [vmem:[#allocation3 + $0x128] sm:$0xff] %vm3239, %v3385
        %3408 = vst.msk [vmem:[#allocation3 + $0x150] sm:$0xff] %vm3239, %v3387
        %3409 = vst.msk [vmem:[#allocation3 + $0x178] sm:$0xff] %vm3239, %v3389
        %v3410 = vld [vmem:[#allocation4 + $0x14] sm:$0xff]
        %v3411 = vld [vmem:[#allocation4 + $0x1c] sm:$0xff]
        %v3412 = vld [vmem:[#allocation4 + $0x24] sm:$0xff]
        %v3413 = vld [vmem:[#allocation4 + $0x2c] sm:$0xff]
        %v3414 = vld [vmem:[#allocation4 + $0x34] sm:$0xff]
        %v3415 = vld [vmem:[#allocation4 + $0x3c] sm:$0xff]
        %v3416 = vld [vmem:[#allocation4 + $0x44] sm:$0xff]
        %v3417 = vld [vmem:[#allocation4 + $0x4c] sm:$0xff]
        %v3418 = vld [vmem:[#allocation4 + $0x54] sm:$0xff]
        %v3419 = vld [vmem:[#allocation4 + $0x5c] sm:$0xff]
        %3420 = vst.msk [vmem:[#allocation3 + $0x18] sm:$0xff] %vm222, %v3410
        %3421 = vst.msk [vmem:[#allocation3 + $0x40] sm:$0xff] %vm222, %v3411
        %3422 = vst.msk [vmem:[#allocation3 + $0x68] sm:$0xff] %vm222, %v3412
        %3423 = vst.msk [vmem:[#allocation3 + $0x90] sm:$0xff] %vm222, %v3413
        %3424 = vst.msk [vmem:[#allocation3 + $0xb8] sm:$0xff] %vm222, %v3414
        %3425 = vst.msk [vmem:[#allocation3 + $0xe0] sm:$0xff] %vm222, %v3415
        %3426 = vst.msk [vmem:[#allocation3 + $0x108] sm:$0xff] %vm222, %v3416
        %3427 = vst.msk [vmem:[#allocation3 + $0x130] sm:$0xff] %vm222, %v3417
        %3428 = vst.msk [vmem:[#allocation3 + $0x158] sm:$0xff] %vm222, %v3418
        %3429 = vst.msk [vmem:[#allocation3 + $0x180] sm:$0xff] %vm222, %v3419
        %v3430 = vld [vmem:[#allocation4 + $0x15] sm:$0xff]
        %v3431 = vld [vmem:[#allocation4 + $0x1d] sm:$0xff]
        %v3432 = vld [vmem:[#allocation4 + $0x25] sm:$0xff]
        %v3433 = vld [vmem:[#allocation4 + $0x2d] sm:$0xff]
        %v3434 = vld [vmem:[#allocation4 + $0x35] sm:$0xff]
        %v3435 = vld [vmem:[#allocation4 + $0x3d] sm:$0xff]
        %v3436 = vld [vmem:[#allocation4 + $0x45] sm:$0xff]
        %v3437 = vld [vmem:[#allocation4 + $0x4d] sm:$0xff]
        %v3438 = vld [vmem:[#allocation4 + $0x55] sm:$0xff]
        %v3439 = vld [vmem:[#allocation4 + $0x5d] sm:$0xff]
        %3450 = vrot.lane.b32.xlu0 %v3430, 64
        %v3451 = vpop.permute.xlu0 %3450
        %3452 = vrot.lane.b32.xlu0 %v3431, 64
        %v3453 = vpop.permute.xlu0 %3452
        %3454 = vrot.lane.b32.xlu0 %v3432, 64
        %v3455 = vpop.permute.xlu0 %3454
        %3456 = vrot.lane.b32.xlu0 %v3433, 64
        %v3457 = vpop.permute.xlu0 %3456
        %3458 = vrot.lane.b32.xlu0 %v3434, 64
        %v3459 = vpop.permute.xlu0 %3458
        %3460 = vrot.lane.b32.xlu0 %v3435, 64
        %v3461 = vpop.permute.xlu0 %3460
        %3462 = vrot.lane.b32.xlu0 %v3436, 64
        %v3463 = vpop.permute.xlu0 %3462
        %3464 = vrot.lane.b32.xlu0 %v3437, 64
        %v3465 = vpop.permute.xlu0 %3464
        %3466 = vrot.lane.b32.xlu0 %v3438, 64
        %v3467 = vpop.permute.xlu0 %3466
        %3468 = vrot.lane.b32.xlu0 %v3439, 64
        %v3469 = vpop.permute.xlu0 %3468
        %3480 = vst.msk [vmem:[#allocation3 + $0x18] sm:$0xff] %vm3239, %v3451
        %3481 = vst.msk [vmem:[#allocation3 + $0x40] sm:$0xff] %vm3239, %v3453
        %3482 = vst.msk [vmem:[#allocation3 + $0x68] sm:$0xff] %vm3239, %v3455
        %3483 = vst.msk [vmem:[#allocation3 + $0x90] sm:$0xff] %vm3239, %v3457
        %3484 = vst.msk [vmem:[#allocation3 + $0xb8] sm:$0xff] %vm3239, %v3459
        %3485 = vst.msk [vmem:[#allocation3 + $0xe0] sm:$0xff] %vm3239, %v3461
        %3486 = vst.msk [vmem:[#allocation3 + $0x108] sm:$0xff] %vm3239, %v3463
        %3487 = vst.msk [vmem:[#allocation3 + $0x130] sm:$0xff] %vm3239, %v3465
        %3488 = vst.msk [vmem:[#allocation3 + $0x158] sm:$0xff] %vm3239, %v3467
        %3489 = vst.msk [vmem:[#allocation3 + $0x180] sm:$0xff] %vm3239, %v3469
        %v3490 = vld [vmem:[#allocation4 + $0x16] sm:$0xff]
        %v3491 = vld [vmem:[#allocation4 + $0x1e] sm:$0xff]
        %v3492 = vld [vmem:[#allocation4 + $0x26] sm:$0xff]
        %v3493 = vld [vmem:[#allocation4 + $0x2e] sm:$0xff]
        %v3494 = vld [vmem:[#allocation4 + $0x36] sm:$0xff]
        %v3495 = vld [vmem:[#allocation4 + $0x3e] sm:$0xff]
        %v3496 = vld [vmem:[#allocation4 + $0x46] sm:$0xff]
        %v3497 = vld [vmem:[#allocation4 + $0x4e] sm:$0xff]
        %v3498 = vld [vmem:[#allocation4 + $0x56] sm:$0xff]
        %v3499 = vld [vmem:[#allocation4 + $0x5e] sm:$0xff]
        %3500 = vst.msk [vmem:[#allocation3 + $0x20] sm:$0xff] %vm222, %v3490
        %3501 = vst.msk [vmem:[#allocation3 + $0x48] sm:$0xff] %vm222, %v3491
        %3502 = vst.msk [vmem:[#allocation3 + $0x70] sm:$0xff] %vm222, %v3492
        %3503 = vst.msk [vmem:[#allocation3 + $0x98] sm:$0xff] %vm222, %v3493
        %3504 = vst.msk [vmem:[#allocation3 + $0xc0] sm:$0xff] %vm222, %v3494
        %3505 = vst.msk [vmem:[#allocation3 + $0xe8] sm:$0xff] %vm222, %v3495
        %3506 = vst.msk [vmem:[#allocation3 + $0x110] sm:$0xff] %vm222, %v3496
        %3507 = vst.msk [vmem:[#allocation3 + $0x138] sm:$0xff] %vm222, %v3497
        %3508 = vst.msk [vmem:[#allocation3 + $0x160] sm:$0xff] %vm222, %v3498
        %3509 = vst.msk [vmem:[#allocation3 + $0x188] sm:$0xff] %vm222, %v3499
        %v3510 = vld [vmem:[#allocation3] sm:$0xff]
        %v3511 = vld [vmem:[#allocation3 + $0x8] sm:$0xff]
        %v3512 = vld [vmem:[#allocation3 + $0x10] sm:$0xff]
        %v3513 = vld [vmem:[#allocation3 + $0x18] sm:$0xff]
        %v3514 = vld [vmem:[#allocation3 + $0x20] sm:$0xff]
        %v3515 = vld [vmem:[#allocation3 + $0x28] sm:$0xff]
        %v3516 = vld [vmem:[#allocation3 + $0x30] sm:$0xff]
        %v3517 = vld [vmem:[#allocation3 + $0x38] sm:$0xff]
        %v3518 = vld [vmem:[#allocation3 + $0x40] sm:$0xff]
        %v3519 = vld [vmem:[#allocation3 + $0x48] sm:$0xff]
        %v3520 = vld [vmem:[#allocation3 + $0x50] sm:$0xff]
        %v3521 = vld [vmem:[#allocation3 + $0x58] sm:$0xff]
        %v3522 = vld [vmem:[#allocation3 + $0x60] sm:$0xff]
        %v3523 = vld [vmem:[#allocation3 + $0x68] sm:$0xff]
        %v3524 = vld [vmem:[#allocation3 + $0x70] sm:$0xff]
        %v3525 = vld [vmem:[#allocation3 + $0x78] sm:$0xff]
        %v3526 = vld [vmem:[#allocation3 + $0x80] sm:$0xff]
        %v3527 = vld [vmem:[#allocation3 + $0x88] sm:$0xff]
        %v3528 = vld [vmem:[#allocation3 + $0x90] sm:$0xff]
        %v3529 = vld [vmem:[#allocation3 + $0x98] sm:$0xff]
        %v3530 = vld [vmem:[#allocation3 + $0xa0] sm:$0xff]
        %v3531 = vld [vmem:[#allocation3 + $0xa8] sm:$0xff]
        %v3532 = vld [vmem:[#allocation3 + $0xb0] sm:$0xff]
        %v3533 = vld [vmem:[#allocation3 + $0xb8] sm:$0xff]
        %v3534 = vld [vmem:[#allocation3 + $0xc0] sm:$0xff]
        %v3535 = vld [vmem:[#allocation3 + $0xc8] sm:$0xff]
        %v3536 = vld [vmem:[#allocation3 + $0xd0] sm:$0xff]
        %v3537 = vld [vmem:[#allocation3 + $0xd8] sm:$0xff]
        %v3538 = vld [vmem:[#allocation3 + $0xe0] sm:$0xff]
        %v3539 = vld [vmem:[#allocation3 + $0xe8] sm:$0xff]
        %v3540 = vld [vmem:[#allocation3 + $0xf0] sm:$0xff]
        %v3541 = vld [vmem:[#allocation3 + $0xf8] sm:$0xff]
        %v3542 = vld [vmem:[#allocation3 + $0x100] sm:$0xff]
        %v3543 = vld [vmem:[#allocation3 + $0x108] sm:$0xff]
        %v3544 = vld [vmem:[#allocation3 + $0x110] sm:$0xff]
        %v3545 = vld [vmem:[#allocation3 + $0x118] sm:$0xff]
        %v3546 = vld [vmem:[#allocation3 + $0x120] sm:$0xff]
        %v3547 = vld [vmem:[#allocation3 + $0x128] sm:$0xff]
        %v3548 = vld [vmem:[#allocation3 + $0x130] sm:$0xff]
        %v3549 = vld [vmem:[#allocation3 + $0x138] sm:$0xff]
        %v3550 = vld [vmem:[#allocation3 + $0x140] sm:$0xff]
        %v3551 = vld [vmem:[#allocation3 + $0x148] sm:$0xff]
        %v3552 = vld [vmem:[#allocation3 + $0x150] sm:$0xff]
        %v3553 = vld [vmem:[#allocation3 + $0x158] sm:$0xff]
        %v3554 = vld [vmem:[#allocation3 + $0x160] sm:$0xff]
        %v3555 = vld [vmem:[#allocation3 + $0x168] sm:$0xff]
        %v3556 = vld [vmem:[#allocation3 + $0x170] sm:$0xff]
        %v3557 = vld [vmem:[#allocation3 + $0x178] sm:$0xff]
        %v3558 = vld [vmem:[#allocation3 + $0x180] sm:$0xff]
        %v3559 = vld [vmem:[#allocation3 + $0x188] sm:$0xff]
        %v3561 = vsel %vm222, %v3514, 0
        %v3564 = vsel %vm222, %v3519, 0
        %v3567 = vsel %vm222, %v3524, 0
        %v3570 = vsel %vm222, %v3529, 0
        %v3573 = vsel %vm222, %v3534, 0
        %v3576 = vsel %vm222, %v3539, 0
        %v3579 = vsel %vm222, %v3544, 0
        %v3582 = vsel %vm222, %v3549, 0
        %v3585 = vsel %vm222, %v3554, 0
        %v3588 = vsel %vm222, %v3559, 0
        %3590 = vmatpush.msra.mxu0 %v3108
        %3591 = vmatpush.msra.mxu0 %v3107
        %3592 = vmatpush.msra.mxu0 %v3106
        %3593 = vmatpush.msra.mxu0 %v3105
        %3594 = vmatpush.msra.mxu0 %v3104
        %3595 = vmatpush.msra.mxu0 %v3103
        %3596 = vmatpush.msra.mxu0 %v3102
        %3597 = vmatpush.msra.mxu0 %v3101
        %3598 = vmatpush.msra.mxu0 %v3100
        %3599 = vmatpush.msra.mxu0 %v3099
        %3600 = vmatpush.msra.mxu0 %v3098
        %3601 = vmatpush.msra.mxu0 %v3097
        %3602 = vmatpush.msra.mxu0 %v3096
        %3603 = vmatpush.msra.mxu0 %v3095
        %3604 = vmatpush.msra.mxu0 %v3094
        %3605 = vmatpush.msra.mxu0 %v3093
        %3606 = vmatmul.f32.gmra.mxu0 %v3510
        %v3607 = vpop.f32.mrf.mxu0
        %v3608 = vadd.f32 0.0, %v3607
        %3609 = vmatmul.f32.gmra.mxu0 %v3515
        %v3610 = vpop.f32.mrf.mxu0
        %v3611 = vadd.f32 0.0, %v3610
        %3612 = vmatmul.f32.gmra.mxu0 %v3520
        %v3613 = vpop.f32.mrf.mxu0
        %v3614 = vadd.f32 0.0, %v3613
        %3615 = vmatmul.f32.gmra.mxu0 %v3525
        %v3616 = vpop.f32.mrf.mxu0
        %v3617 = vadd.f32 0.0, %v3616
        %3618 = vmatmul.f32.gmra.mxu0 %v3530
        %v3619 = vpop.f32.mrf.mxu0
        %v3620 = vadd.f32 0.0, %v3619
        %3621 = vmatmul.f32.gmra.mxu0 %v3535
        %v3622 = vpop.f32.mrf.mxu0
        %v3623 = vadd.f32 0.0, %v3622
        %3624 = vmatmul.f32.gmra.mxu0 %v3540
        %v3625 = vpop.f32.mrf.mxu0
        %v3626 = vadd.f32 0.0, %v3625
        %3627 = vmatmul.f32.gmra.mxu0 %v3545
        %v3628 = vpop.f32.mrf.mxu0
        %v3629 = vadd.f32 0.0, %v3628
        %3630 = vmatmul.f32.gmra.mxu0 %v3550
        %v3631 = vpop.f32.mrf.mxu0
        %v3632 = vadd.f32 0.0, %v3631
        %3633 = vmatmul.f32.gmra.mxu0 %v3555
        %v3634 = vpop.f32.mrf.mxu0
        %v3635 = vadd.f32 0.0, %v3634
        %3636 = vdwg.mxu0
        %3637 = vmatpush.msra.mxu0 %v3124
        %3638 = vmatpush.msra.mxu0 %v3123
        %3639 = vmatpush.msra.mxu0 %v3122
        %3640 = vmatpush.msra.mxu0 %v3121
        %3641 = vmatpush.msra.mxu0 %v3120
        %3642 = vmatpush.msra.mxu0 %v3119
        %3643 = vmatpush.msra.mxu0 %v3118
        %3644 = vmatpush.msra.mxu0 %v3117
        %3645 = vmatpush.msra.mxu0 %v3116
        %3646 = vmatpush.msra.mxu0 %v3115
        %3647 = vmatpush.msra.mxu0 %v3114
        %3648 = vmatpush.msra.mxu0 %v3113
        %3649 = vmatpush.msra.mxu0 %v3112
        %3650 = vmatpush.msra.mxu0 %v3111
        %3651 = vmatpush.msra.mxu0 %v3110
        %3652 = vmatpush.msra.mxu0 %v3109
        %3653 = vmatmul.f32.gmra.mxu0 %v3511
        %v3654 = vpop.f32.mrf.mxu0
        %v3655 = vadd.f32 %v3608, %v3654
        %3656 = vmatmul.f32.gmra.mxu0 %v3516
        %v3657 = vpop.f32.mrf.mxu0
        %v3658 = vadd.f32 %v3611, %v3657
        %3659 = vmatmul.f32.gmra.mxu0 %v3521
        %v3660 = vpop.f32.mrf.mxu0
        %v3661 = vadd.f32 %v3614, %v3660
        %3662 = vmatmul.f32.gmra.mxu0 %v3526
        %v3663 = vpop.f32.mrf.mxu0
        %v3664 = vadd.f32 %v3617, %v3663
        %3665 = vmatmul.f32.gmra.mxu0 %v3531
        %v3666 = vpop.f32.mrf.mxu0
        %v3667 = vadd.f32 %v3620, %v3666
        %3668 = vmatmul.f32.gmra.mxu0 %v3536
        %v3669 = vpop.f32.mrf.mxu0
        %v3670 = vadd.f32 %v3623, %v3669
        %3671 = vmatmul.f32.gmra.mxu0 %v3541
        %v3672 = vpop.f32.mrf.mxu0
        %v3673 = vadd.f32 %v3626, %v3672
        %3674 = vmatmul.f32.gmra.mxu0 %v3546
        %v3675 = vpop.f32.mrf.mxu0
        %v3676 = vadd.f32 %v3629, %v3675
        %3677 = vmatmul.f32.gmra.mxu0 %v3551
        %v3678 = vpop.f32.mrf.mxu0
        %v3679 = vadd.f32 %v3632, %v3678
        %3680 = vmatmul.f32.gmra.mxu0 %v3556
        %v3681 = vpop.f32.mrf.mxu0
        %v3682 = vadd.f32 %v3635, %v3681
        %3683 = vdwg.mxu0
        %3684 = vmatpush.msra.mxu0 %v3140
        %3685 = vmatpush.msra.mxu0 %v3139
        %3686 = vmatpush.msra.mxu0 %v3138
        %3687 = vmatpush.msra.mxu0 %v3137
        %3688 = vmatpush.msra.mxu0 %v3136
        %3689 = vmatpush.msra.mxu0 %v3135
        %3690 = vmatpush.msra.mxu0 %v3134
        %3691 = vmatpush.msra.mxu0 %v3133
        %3692 = vmatpush.msra.mxu0 %v3132
        %3693 = vmatpush.msra.mxu0 %v3131
        %3694 = vmatpush.msra.mxu0 %v3130
        %3695 = vmatpush.msra.mxu0 %v3129
        %3696 = vmatpush.msra.mxu0 %v3128
        %3697 = vmatpush.msra.mxu0 %v3127
        %3698 = vmatpush.msra.mxu0 %v3126
        %3699 = vmatpush.msra.mxu0 %v3125
        %3700 = vmatmul.f32.gmra.mxu0 %v3512
        %v3701 = vpop.f32.mrf.mxu0
        %v3702 = vadd.f32 %v3655, %v3701
        %3703 = vmatmul.f32.gmra.mxu0 %v3517
        %v3704 = vpop.f32.mrf.mxu0
        %v3705 = vadd.f32 %v3658, %v3704
        %3706 = vmatmul.f32.gmra.mxu0 %v3522
        %v3707 = vpop.f32.mrf.mxu0
        %v3708 = vadd.f32 %v3661, %v3707
        %3709 = vmatmul.f32.gmra.mxu0 %v3527
        %v3710 = vpop.f32.mrf.mxu0
        %v3711 = vadd.f32 %v3664, %v3710
        %3712 = vmatmul.f32.gmra.mxu0 %v3532
        %v3713 = vpop.f32.mrf.mxu0
        %v3714 = vadd.f32 %v3667, %v3713
        %3715 = vmatmul.f32.gmra.mxu0 %v3537
        %v3716 = vpop.f32.mrf.mxu0
        %v3717 = vadd.f32 %v3670, %v3716
        %3718 = vmatmul.f32.gmra.mxu0 %v3542
        %v3719 = vpop.f32.mrf.mxu0
        %v3720 = vadd.f32 %v3673, %v3719
        %3721 = vmatmul.f32.gmra.mxu0 %v3547
        %v3722 = vpop.f32.mrf.mxu0
        %v3723 = vadd.f32 %v3676, %v3722
        %3724 = vmatmul.f32.gmra.mxu0 %v3552
        %v3725 = vpop.f32.mrf.mxu0
        %v3726 = vadd.f32 %v3679, %v3725
        %3727 = vmatmul.f32.gmra.mxu0 %v3557
        %v3728 = vpop.f32.mrf.mxu0
        %v3729 = vadd.f32 %v3682, %v3728
        %3730 = vdwg.mxu0
        %3731 = vmatpush.msra.mxu0 %v3156
        %3732 = vmatpush.msra.mxu0 %v3155
        %3733 = vmatpush.msra.mxu0 %v3154
        %3734 = vmatpush.msra.mxu0 %v3153
        %3735 = vmatpush.msra.mxu0 %v3152
        %3736 = vmatpush.msra.mxu0 %v3151
        %3737 = vmatpush.msra.mxu0 %v3150
        %3738 = vmatpush.msra.mxu0 %v3149
        %3739 = vmatpush.msra.mxu0 %v3148
        %3740 = vmatpush.msra.mxu0 %v3147
        %3741 = vmatpush.msra.mxu0 %v3146
        %3742 = vmatpush.msra.mxu0 %v3145
        %3743 = vmatpush.msra.mxu0 %v3144
        %3744 = vmatpush.msra.mxu0 %v3143
        %3745 = vmatpush.msra.mxu0 %v3142
        %3746 = vmatpush.msra.mxu0 %v3141
        %3747 = vmatmul.f32.gmra.mxu0 %v3513
        %v3748 = vpop.f32.mrf.mxu0
        %v3749 = vadd.f32 %v3702, %v3748
        %3750 = vmatmul.f32.gmra.mxu0 %v3518
        %v3751 = vpop.f32.mrf.mxu0
        %v3752 = vadd.f32 %v3705, %v3751
        %3753 = vmatmul.f32.gmra.mxu0 %v3523
        %v3754 = vpop.f32.mrf.mxu0
        %v3755 = vadd.f32 %v3708, %v3754
        %3756 = vmatmul.f32.gmra.mxu0 %v3528
        %v3757 = vpop.f32.mrf.mxu0
        %v3758 = vadd.f32 %v3711, %v3757
        %3759 = vmatmul.f32.gmra.mxu0 %v3533
        %v3760 = vpop.f32.mrf.mxu0
        %v3761 = vadd.f32 %v3714, %v3760
        %3762 = vmatmul.f32.gmra.mxu0 %v3538
        %v3763 = vpop.f32.mrf.mxu0
        %v3764 = vadd.f32 %v3717, %v3763
        %3765 = vmatmul.f32.gmra.mxu0 %v3543
        %v3766 = vpop.f32.mrf.mxu0
        %v3767 = vadd.f32 %v3720, %v3766
        %3768 = vmatmul.f32.gmra.mxu0 %v3548
        %v3769 = vpop.f32.mrf.mxu0
        %v3770 = vadd.f32 %v3723, %v3769
        %3771 = vmatmul.f32.gmra.mxu0 %v3553
        %v3772 = vpop.f32.mrf.mxu0
        %v3773 = vadd.f32 %v3726, %v3772
        %3774 = vmatmul.f32.gmra.mxu0 %v3558
        %v3775 = vpop.f32.mrf.mxu0
        %v3776 = vadd.f32 %v3729, %v3775
        %3777 = vdwg.mxu0
        %3778 = vmatpush.msra.mxu0 0.0
        %3779 = vmatpush.msra.mxu0 0.0
        %3780 = vmatpush.msra.mxu0 0.0
        %3781 = vmatpush.msra.mxu0 0.0
        %3782 = vmatpush.msra.mxu0 0.0
        %3783 = vmatpush.msra.mxu0 0.0
        %3784 = vmatpush.msra.mxu0 0.0
        %3785 = vmatpush.msra.mxu0 0.0
        %3786 = vmatpush.msra.mxu0 %v3164
        %3787 = vmatpush.msra.mxu0 %v3163
        %3788 = vmatpush.msra.mxu0 %v3162
        %3789 = vmatpush.msra.mxu0 %v3161
        %3790 = vmatpush.msra.mxu0 %v3160
        %3791 = vmatpush.msra.mxu0 %v3159
        %3792 = vmatpush.msra.mxu0 %v3158
        %3793 = vmatpush.msra.mxu0 %v3157
        %3794 = vmatmul.f32.gmra.mxu0 %v3561
        %v3795 = vpop.f32.mrf.mxu0
        %v3796 = vadd.f32 %v3749, %v3795
        %3797 = vmatmul.f32.gmra.mxu0 %v3564
        %v3798 = vpop.f32.mrf.mxu0
        %v3799 = vadd.f32 %v3752, %v3798
        %3800 = vmatmul.f32.gmra.mxu0 %v3567
        %v3801 = vpop.f32.mrf.mxu0
        %v3802 = vadd.f32 %v3755, %v3801
        %3803 = vmatmul.f32.gmra.mxu0 %v3570
        %v3804 = vpop.f32.mrf.mxu0
        %v3805 = vadd.f32 %v3758, %v3804
        %3806 = vmatmul.f32.gmra.mxu0 %v3573
        %v3807 = vpop.f32.mrf.mxu0
        %v3808 = vadd.f32 %v3761, %v3807
        %3809 = vmatmul.f32.gmra.mxu0 %v3576
        %v3810 = vpop.f32.mrf.mxu0
        %v3811 = vadd.f32 %v3764, %v3810
        %3812 = vmatmul.f32.gmra.mxu0 %v3579
        %v3813 = vpop.f32.mrf.mxu0
        %v3814 = vadd.f32 %v3767, %v3813
        %3815 = vmatmul.f32.gmra.mxu0 %v3582
        %v3816 = vpop.f32.mrf.mxu0
        %v3817 = vadd.f32 %v3770, %v3816
        %3818 = vmatmul.f32.gmra.mxu0 %v3585
        %v3819 = vpop.f32.mrf.mxu0
        %v3820 = vadd.f32 %v3773, %v3819
        %3821 = vmatmul.f32.gmra.mxu0 %v3588
        %v3822 = vpop.f32.mrf.mxu0
        %v3823 = vadd.f32 %v3776, %v3822
        %3824 = vdwg.mxu0
        %v3826 = vperm.slane %v3166, 0
        %v3828 = vmul.f32 %v3796, %v3826
        %v3829 = vmul.f32 %v3799, %v3826
        %v3830 = vmul.f32 %v3802, %v3826
        %v3831 = vmul.f32 %v3805, %v3826
        %v3832 = vmul.f32 %v3808, %v3826
        %v3833 = vmul.f32 %v3811, %v3826
        %v3834 = vmul.f32 %v3814, %v3826
        %v3835 = vmul.f32 %v3817, %v3826
        %v3836 = vmul.f32 %v3820, %v3826
        %v3837 = vmul.f32 %v3823, %v3826
        %v3839 = vperm.slane %v3168, 0
        %v3841 = vadd.f32 %v3828, %v3839
        %v3842 = vadd.f32 %v3829, %v3839
        %v3843 = vadd.f32 %v3830, %v3839
        %v3844 = vadd.f32 %v3831, %v3839
        %v3845 = vadd.f32 %v3832, %v3839
        %v3846 = vadd.f32 %v3833, %v3839
        %v3847 = vadd.f32 %v3834, %v3839
        %v3848 = vadd.f32 %v3835, %v3839
        %v3849 = vadd.f32 %v3836, %v3839
        %v3850 = vadd.f32 %v3837, %v3839
        %v3851 = vmax.f32 %v3841, 0.0
        %v3852 = vmax.f32 %v3842, 0.0
        %v3853 = vmax.f32 %v3843, 0.0
        %v3854 = vmax.f32 %v3844, 0.0
        %v3855 = vmax.f32 %v3845, 0.0
        %v3856 = vmax.f32 %v3846, 0.0
        %v3857 = vmax.f32 %v3847, 0.0
        %v3858 = vmax.f32 %v3848, 0.0
        %v3859 = vmax.f32 %v3849, 0.0
        %v3860 = vmax.f32 %v3850, 0.0
        %3861 = vst.msk [vmem:[#allocation2] sm:$0xff] %vm222, %v3851
        %3862 = vst.msk [vmem:[#allocation2 + $0x8] sm:$0xff] %vm222, %v3852
        %3863 = vst.msk [vmem:[#allocation2 + $0x10] sm:$0xff] %vm222, %v3853
        %3864 = vst.msk [vmem:[#allocation2 + $0x18] sm:$0xff] %vm222, %v3854
        %3865 = vst.msk [vmem:[#allocation2 + $0x20] sm:$0xff] %vm222, %v3855
        %3866 = vst.msk [vmem:[#allocation2 + $0x28] sm:$0xff] %vm222, %v3856
        %3867 = vst.msk [vmem:[#allocation2 + $0x30] sm:$0xff] %vm222, %v3857
        %3868 = vst.msk [vmem:[#allocation2 + $0x38] sm:$0xff] %vm222, %v3858
        %3869 = vst.msk [vmem:[#allocation2 + $0x40] sm:$0xff] %vm222, %v3859
        %3870 = vst.msk [vmem:[#allocation2 + $0x48] sm:$0xff] %vm222, %v3860
        %v3871 = vld [vmem:[#allocation2] ss:$2 sm:$0xf]
        %v3872 = vld [vmem:[%s2999] ss:$2 sm:$0xf]
        %s3873 = scalar_lea.vmem [#allocation2], 10
        %v3874 = vld [vmem:[%s3873] ss:$2 sm:$0xf]
        %s3875 = scalar_lea.vmem [#allocation2], 11
        %v3876 = vld [vmem:[%s3875] ss:$2 sm:$0xf]
        %v3877 = vmax.f32 %v3871, %v3872
        %v3878 = vmax.f32 %v3874, %v3876
        %v3879 = vmax.f32 %v3877, %v3878
        %vm3880 = vcmask 519168
        %3881 = vst.msk [vmem:[#allocation5 + $0x7] sm:$0xf] %vm3880, %v3879
        %s3882 = scalar_lea.vmem [#allocation2], 20
        %v3883 = vld [vmem:[%s3882] ss:$2 sm:$0xf]
        %s3884 = scalar_lea.vmem [#allocation2], 21
        %v3885 = vld [vmem:[%s3884] ss:$2 sm:$0xf]
        %s3886 = scalar_lea.vmem [#allocation2], 30
        %v3887 = vld [vmem:[%s3886] ss:$2 sm:$0xf]
        %s3888 = scalar_lea.vmem [#allocation2], 31
        %v3889 = vld [vmem:[%s3888] ss:$2 sm:$0xf]
        %v3890 = vmax.f32 %v3883, %v3885
        %v3891 = vmax.f32 %v3887, %v3889
        %v3892 = vmax.f32 %v3890, %v3891
        %3893 = vst.msk [vmem:[#allocation5 + $0xd] sm:$0xf] %vm3880, %v3892
        %s3894 = scalar_lea.vmem [#allocation2], 40
        %v3895 = vld [vmem:[%s3894] ss:$2 sm:$0xf]
        %s3896 = scalar_lea.vmem [#allocation2], 41
        %v3897 = vld [vmem:[%s3896] ss:$2 sm:$0xf]
        %s3898 = scalar_lea.vmem [#allocation2], 50
        %v3899 = vld [vmem:[%s3898] ss:$2 sm:$0xf]
        %s3900 = scalar_lea.vmem [#allocation2], 51
        %v3901 = vld [vmem:[%s3900] ss:$2 sm:$0xf]
        %v3902 = vmax.f32 %v3895, %v3897
        %v3903 = vmax.f32 %v3899, %v3901
        %v3904 = vmax.f32 %v3902, %v3903
        %3905 = vst.msk [vmem:[#allocation5 + $0x13] sm:$0xf] %vm3880, %v3904
        %s3906 = scalar_lea.vmem [#allocation2], 60
        %v3907 = vld [vmem:[%s3906] ss:$2 sm:$0xf]
        %s3908 = scalar_lea.vmem [#allocation2], 61
        %v3909 = vld [vmem:[%s3908] ss:$2 sm:$0xf]
        %s3910 = scalar_lea.vmem [#allocation2], 70
        %v3911 = vld [vmem:[%s3910] ss:$2 sm:$0xf]
        %s3912 = scalar_lea.vmem [#allocation2], 71
        %v3913 = vld [vmem:[%s3912] ss:$2 sm:$0xf]
        %v3914 = vmax.f32 %v3907, %v3909
        %v3915 = vmax.f32 %v3911, %v3913
        %v3916 = vmax.f32 %v3914, %v3915
        %3917 = vst.msk [vmem:[#allocation5 + $0x19] sm:$0xf] %vm3880, %v3916
        %s3918 = scalar_lea.vmem %s2, 576
        %v3919 = vld [vmem:[%s3918] sm:$0xff]
        %v3920 = vld [vmem:[%s3918 + $0x8] sm:$0xff]
        %v3921 = vld [vmem:[%s3918 + $0x10] sm:$0xff]
        %v3922 = vld [vmem:[%s3918 + $0x18] sm:$0xff]
        %v3923 = vld [vmem:[%s3918 + $0x20] sm:$0xff]
        %v3924 = vld [vmem:[%s3918 + $0x28] sm:$0xff]
        %v3925 = vld [vmem:[%s3918 + $0x30] sm:$0xff]
        %v3926 = vld [vmem:[%s3918 + $0x38] sm:$0xff]
        %v3927 = vld [vmem:[%s3918 + $0x40] sm:$0xff]
        %v3928 = vld [vmem:[%s3918 + $0x48] sm:$0xff]
        %v3929 = vld [vmem:[%s3918 + $0x50] sm:$0xff]
        %v3930 = vld [vmem:[%s3918 + $0x58] sm:$0xff]
        %v3931 = vld [vmem:[%s3918 + $0x60] sm:$0xff]
        %v3932 = vld [vmem:[%s3918 + $0x68] sm:$0xff]
        %v3933 = vld [vmem:[%s3918 + $0x70] sm:$0xff]
        %v3934 = vld [vmem:[%s3918 + $0x78] sm:$0xff]
        %v3935 = vld [vmem:[%s3918 + $0x80] sm:$0xff]
        %v3936 = vld [vmem:[%s3918 + $0x88] sm:$0xff]
        %v3937 = vld [vmem:[%s3918 + $0x90] sm:$0xff]
        %v3938 = vld [vmem:[%s3918 + $0x98] sm:$0xff]
        %v3939 = vld [vmem:[%s3918 + $0xa0] sm:$0xff]
        %v3940 = vld [vmem:[%s3918 + $0xa8] sm:$0xff]
        %v3941 = vld [vmem:[%s3918 + $0xb0] sm:$0xff]
        %v3942 = vld [vmem:[%s3918 + $0xb8] sm:$0xff]
        %v3943 = vld [vmem:[%s3918 + $0xc0] sm:$0xff]
        %v3944 = vld [vmem:[%s3918 + $0xc8] sm:$0xff]
        %v3945 = vld [vmem:[%s3918 + $0xd0] sm:$0xff]
        %v3946 = vld [vmem:[%s3918 + $0xd8] sm:$0xff]
        %v3947 = vld [vmem:[%s3918 + $0xe0] sm:$0xff]
        %v3948 = vld [vmem:[%s3918 + $0xe8] sm:$0xff]
        %v3949 = vld [vmem:[%s3918 + $0xf0] sm:$0xff]
        %v3950 = vld [vmem:[%s3918 + $0xf8] sm:$0xff]
        %v3951 = vld [vmem:[%s3918 + $0x100] sm:$0xff]
        %v3952 = vld [vmem:[%s3918 + $0x108] sm:$0xff]
        %v3953 = vld [vmem:[%s3918 + $0x110] sm:$0xff]
        %v3954 = vld [vmem:[%s3918 + $0x118] sm:$0xff]
        %v3955 = vld [vmem:[%s3918 + $0x120] sm:$0xff]
        %v3956 = vld [vmem:[%s3918 + $0x128] sm:$0xff]
        %v3957 = vld [vmem:[%s3918 + $0x130] sm:$0xff]
        %v3958 = vld [vmem:[%s3918 + $0x138] sm:$0xff]
        %v3959 = vld [vmem:[%s3918 + $0x140] sm:$0xff]
        %v3960 = vld [vmem:[%s3918 + $0x148] sm:$0xff]
        %v3961 = vld [vmem:[%s3918 + $0x150] sm:$0xff]
        %v3962 = vld [vmem:[%s3918 + $0x158] sm:$0xff]
        %v3963 = vld [vmem:[%s3918 + $0x160] sm:$0xff]
        %v3964 = vld [vmem:[%s3918 + $0x168] sm:$0xff]
        %v3965 = vld [vmem:[%s3918 + $0x170] sm:$0xff]
        %v3966 = vld [vmem:[%s3918 + $0x178] sm:$0xff]
        %v3967 = vld [vmem:[%s3918 + $0x180] sm:$0xff]
        %v3968 = vld [vmem:[%s3918 + $0x188] sm:$0xff]
        %v3969 = vld [vmem:[%s3918 + $0x190] sm:$0xff]
        %v3970 = vld [vmem:[%s3918 + $0x198] sm:$0xff]
        %v3971 = vld [vmem:[%s3918 + $0x1a0] sm:$0xff]
        %v3972 = vld [vmem:[%s3918 + $0x1a8] sm:$0xff]
        %v3973 = vld [vmem:[%s3918 + $0x1b0] sm:$0xff]
        %v3974 = vld [vmem:[%s3918 + $0x1b8] sm:$0xff]
        %v3975 = vld [vmem:[%s3918 + $0x1c0] sm:$0xff]
        %v3976 = vld [vmem:[%s3918 + $0x1c8] sm:$0xff]
        %v3977 = vld [vmem:[%s3918 + $0x1d0] sm:$0xff]
        %v3978 = vld [vmem:[%s3918 + $0x1d8] sm:$0xff]
        %v3979 = vld [vmem:[%s3918 + $0x1e0] sm:$0xff]
        %v3980 = vld [vmem:[%s3918 + $0x1e8] sm:$0xff]
        %v3981 = vld [vmem:[%s3918 + $0x1f0] sm:$0xff]
        %v3982 = vld [vmem:[%s3918 + $0x1f8] sm:$0xff]
        %v3983 = vld [vmem:[%s3918 + $0x200] sm:$0xff]
        %v3984 = vld [vmem:[%s3918 + $0x208] sm:$0xff]
        %v3985 = vld [vmem:[%s3918 + $0x210] sm:$0xff]
        %v3986 = vld [vmem:[%s3918 + $0x218] sm:$0xff]
        %v3987 = vld [vmem:[%s3918 + $0x220] sm:$0xff]
        %v3988 = vld [vmem:[%s3918 + $0x228] sm:$0xff]
        %v3989 = vld [vmem:[%s3918 + $0x230] sm:$0xff]
        %v3990 = vld [vmem:[%s3918 + $0x238] sm:$0xff]
        %s3991 = scalar_lea.vmem %s3, 2
        %v3992 = vld [vmem:[%s3991] sm:$0x1]
        %s3993 = scalar_lea.vmem %s4, 2
        %v3994 = vld [vmem:[%s3993] sm:$0x1]
        %v3995 = vld [vmem:[#allocation5] sm:$0xff]
        %v3996 = vld [vmem:[#allocation5 + $0x8] sm:$0xff]
        %v3997 = vld [vmem:[#allocation5 + $0x10] sm:$0xff]
        %3998 = vst.msk [vmem:[#allocation3] sm:$0xff] %vm222, %v3995
        %3999 = vst.msk [vmem:[#allocation3 + $0x28] sm:$0xff] %vm222, %v3996
        %4000 = vst.msk [vmem:[#allocation3 + $0x50] sm:$0xff] %vm222, %v3997
        %v4001 = vld [vmem:[#allocation5 + $0x1] sm:$0xff]
        %v4002 = vld [vmem:[#allocation5 + $0x9] sm:$0xff]
        %v4003 = vld [vmem:[#allocation5 + $0x11] sm:$0xff]
        %4007 = vrot.lane.b32.xlu0 %v4001, 64
        %v4008 = vpop.permute.xlu0 %4007
        %4009 = vrot.lane.b32.xlu0 %v4002, 64
        %v4010 = vpop.permute.xlu0 %4009
        %4011 = vrot.lane.b32.xlu0 %v4003, 64
        %v4012 = vpop.permute.xlu0 %4011
        %4016 = vst.msk [vmem:[#allocation3] sm:$0xff] %vm3239, %v4008
        %4017 = vst.msk [vmem:[#allocation3 + $0x28] sm:$0xff] %vm3239, %v4010
        %4018 = vst.msk [vmem:[#allocation3 + $0x50] sm:$0xff] %vm3239, %v4012
        %v4019 = vld [vmem:[#allocation5 + $0x2] sm:$0xff]
        %v4020 = vld [vmem:[#allocation5 + $0xa] sm:$0xff]
        %v4021 = vld [vmem:[#allocation5 + $0x12] sm:$0xff]
        %4022 = vst.msk [vmem:[#allocation3 + $0x8] sm:$0xff] %vm222, %v4019
        %4023 = vst.msk [vmem:[#allocation3 + $0x30] sm:$0xff] %vm222, %v4020
        %4024 = vst.msk [vmem:[#allocation3 + $0x58] sm:$0xff] %vm222, %v4021
        %v4025 = vld [vmem:[#allocation5 + $0x6] sm:$0xff]
        %v4026 = vld [vmem:[#allocation5 + $0xe] sm:$0xff]
        %v4027 = vld [vmem:[#allocation5 + $0x16] sm:$0xff]
        %4031 = vrot.lane.b32.xlu0 %v4025, 64
        %v4032 = vpop.permute.xlu0 %4031
        %4033 = vrot.lane.b32.xlu0 %v4026, 64
        %v4034 = vpop.permute.xlu0 %4033
        %4035 = vrot.lane.b32.xlu0 %v4027, 64
        %v4036 = vpop.permute.xlu0 %4035
        %4040 = vst.msk [vmem:[#allocation3 + $0x8] sm:$0xff] %vm3239, %v4032
        %4041 = vst.msk [vmem:[#allocation3 + $0x30] sm:$0xff] %vm3239, %v4034
        %4042 = vst.msk [vmem:[#allocation3 + $0x58] sm:$0xff] %vm3239, %v4036
        %v4043 = vld [vmem:[#allocation5 + $0x7] sm:$0xff]
        %v4044 = vld [vmem:[#allocation5 + $0xf] sm:$0xff]
        %v4045 = vld [vmem:[#allocation5 + $0x17] sm:$0xff]
        %4046 = vst.msk [vmem:[#allocation3 + $0x10] sm:$0xff] %vm222, %v4043
        %4047 = vst.msk [vmem:[#allocation3 + $0x38] sm:$0xff] %vm222, %v4044
        %4048 = vst.msk [vmem:[#allocation3 + $0x60] sm:$0xff] %vm222, %v4045
        %v4049 = vld [vmem:[#allocation5 + $0x8] sm:$0xff]
        %v4050 = vld [vmem:[#allocation5 + $0x10] sm:$0xff]
        %v4051 = vld [vmem:[#allocation5 + $0x18] sm:$0xff]
        %4055 = vrot.lane.b32.xlu0 %v4049, 64
        %v4056 = vpop.permute.xlu0 %4055
        %4057 = vrot.lane.b32.xlu0 %v4050, 64
        %v4058 = vpop.permute.xlu0 %4057
        %4059 = vrot.lane.b32.xlu0 %v4051, 64
        %v4060 = vpop.permute.xlu0 %4059
        %4064 = vst.msk [vmem:[#allocation3 + $0x10] sm:$0xff] %vm3239, %v4056
        %4065 = vst.msk [vmem:[#allocation3 + $0x38] sm:$0xff] %vm3239, %v4058
        %4066 = vst.msk [vmem:[#allocation3 + $0x60] sm:$0xff] %vm3239, %v4060
        %v4067 = vld [vmem:[#allocation5 + $0xc] sm:$0xff]
        %v4068 = vld [vmem:[#allocation5 + $0x14] sm:$0xff]
        %v4069 = vld [vmem:[#allocation5 + $0x1c] sm:$0xff]
        %4070 = vst.msk [vmem:[#allocation3 + $0x18] sm:$0xff] %vm222, %v4067
        %4071 = vst.msk [vmem:[#allocation3 + $0x40] sm:$0xff] %vm222, %v4068
        %4072 = vst.msk [vmem:[#allocation3 + $0x68] sm:$0xff] %vm222, %v4069
        %v4073 = vld [vmem:[#allocation5 + $0xd] sm:$0xff]
        %v4074 = vld [vmem:[#allocation5 + $0x15] sm:$0xff]
        %v4075 = vld [vmem:[#allocation5 + $0x1d] sm:$0xff]
        %4079 = vrot.lane.b32.xlu0 %v4073, 64
        %v4080 = vpop.permute.xlu0 %4079
        %4081 = vrot.lane.b32.xlu0 %v4074, 64
        %v4082 = vpop.permute.xlu0 %4081
        %4083 = vrot.lane.b32.xlu0 %v4075, 64
        %v4084 = vpop.permute.xlu0 %4083
        %4088 = vst.msk [vmem:[#allocation3 + $0x18] sm:$0xff] %vm3239, %v4080
        %4089 = vst.msk [vmem:[#allocation3 + $0x40] sm:$0xff] %vm3239, %v4082
        %4090 = vst.msk [vmem:[#allocation3 + $0x68] sm:$0xff] %vm3239, %v4084
        %v4091 = vld [vmem:[#allocation5 + $0xe] sm:$0xff]
        %v4092 = vld [vmem:[#allocation5 + $0x16] sm:$0xff]
        %v4093 = vld [vmem:[#allocation5 + $0x1e] sm:$0xff]
        %4094 = vst.msk [vmem:[#allocation3 + $0x20] sm:$0xff] %vm222, %v4091
        %4095 = vst.msk [vmem:[#allocation3 + $0x48] sm:$0xff] %vm222, %v4092
        %4096 = vst.msk [vmem:[#allocation3 + $0x70] sm:$0xff] %vm222, %v4093
        %v4097 = vld [vmem:[#allocation3] sm:$0xff]
        %v4098 = vld [vmem:[#allocation3 + $0x8] sm:$0xff]
        %v4099 = vld [vmem:[#allocation3 + $0x10] sm:$0xff]
        %v4100 = vld [vmem:[#allocation3 + $0x18] sm:$0xff]
        %v4101 = vld [vmem:[#allocation3 + $0x20] sm:$0xff]
        %v4102 = vld [vmem:[#allocation3 + $0x28] sm:$0xff]
        %v4103 = vld [vmem:[#allocation3 + $0x30] sm:$0xff]
        %v4104 = vld [vmem:[#allocation3 + $0x38] sm:$0xff]
        %v4105 = vld [vmem:[#allocation3 + $0x40] sm:$0xff]
        %v4106 = vld [vmem:[#allocation3 + $0x48] sm:$0xff]
        %v4107 = vld [vmem:[#allocation3 + $0x50] sm:$0xff]
        %v4108 = vld [vmem:[#allocation3 + $0x58] sm:$0xff]
        %v4109 = vld [vmem:[#allocation3 + $0x60] sm:$0xff]
        %v4110 = vld [vmem:[#allocation3 + $0x68] sm:$0xff]
        %v4111 = vld [vmem:[#allocation3 + $0x70] sm:$0xff]
        %v4113 = vsel %vm222, %v4101, 0
        %v4116 = vsel %vm222, %v4106, 0
        %v4119 = vsel %vm222, %v4111, 0
        %4121 = vmatpush.msra.mxu0 %v3934
        %4122 = vmatpush.msra.mxu0 %v3933
        %4123 = vmatpush.msra.mxu0 %v3932
        %4124 = vmatpush.msra.mxu0 %v3931
        %4125 = vmatpush.msra.mxu0 %v3930
        %4126 = vmatpush.msra.mxu0 %v3929
        %4127 = vmatpush.msra.mxu0 %v3928
        %4128 = vmatpush.msra.mxu0 %v3927
        %4129 = vmatpush.msra.mxu0 %v3926
        %4130 = vmatpush.msra.mxu0 %v3925
        %4131 = vmatpush.msra.mxu0 %v3924
        %4132 = vmatpush.msra.mxu0 %v3923
        %4133 = vmatpush.msra.mxu0 %v3922
        %4134 = vmatpush.msra.mxu0 %v3921
        %4135 = vmatpush.msra.mxu0 %v3920
        %4136 = vmatpush.msra.mxu0 %v3919
        %4137 = vmatmul.f32.gmra.mxu0 %v4097
        %v4138 = vpop.f32.mrf.mxu0
        %v4139 = vadd.f32 0.0, %v4138
        %4140 = vmatmul.f32.gmra.mxu0 %v4102
        %v4141 = vpop.f32.mrf.mxu0
        %v4142 = vadd.f32 0.0, %v4141
        %4143 = vmatmul.f32.gmra.mxu0 %v4107
        %v4144 = vpop.f32.mrf.mxu0
        %v4145 = vadd.f32 0.0, %v4144
        %4146 = vdwg.mxu0
        %4147 = vmatpush.msra.mxu0 %v3950
        %4148 = vmatpush.msra.mxu0 %v3949
        %4149 = vmatpush.msra.mxu0 %v3948
        %4150 = vmatpush.msra.mxu0 %v3947
        %4151 = vmatpush.msra.mxu0 %v3946
        %4152 = vmatpush.msra.mxu0 %v3945
        %4153 = vmatpush.msra.mxu0 %v3944
        %4154 = vmatpush.msra.mxu0 %v3943
        %4155 = vmatpush.msra.mxu0 %v3942
        %4156 = vmatpush.msra.mxu0 %v3941
        %4157 = vmatpush.msra.mxu0 %v3940
        %4158 = vmatpush.msra.mxu0 %v3939
        %4159 = vmatpush.msra.mxu0 %v3938
        %4160 = vmatpush.msra.mxu0 %v3937
        %4161 = vmatpush.msra.mxu0 %v3936
        %4162 = vmatpush.msra.mxu0 %v3935
        %4163 = vmatmul.f32.gmra.mxu0 %v4098
        %v4164 = vpop.f32.mrf.mxu0
        %v4165 = vadd.f32 %v4139, %v4164
        %4166 = vmatmul.f32.gmra.mxu0 %v4103
        %v4167 = vpop.f32.mrf.mxu0
        %v4168 = vadd.f32 %v4142, %v4167
        %4169 = vmatmul.f32.gmra.mxu0 %v4108
        %v4170 = vpop.f32.mrf.mxu0
        %v4171 = vadd.f32 %v4145, %v4170
        %4172 = vdwg.mxu0
        %4173 = vmatpush.msra.mxu0 %v3966
        %4174 = vmatpush.msra.mxu0 %v3965
        %4175 = vmatpush.msra.mxu0 %v3964
        %4176 = vmatpush.msra.mxu0 %v3963
        %4177 = vmatpush.msra.mxu0 %v3962
        %4178 = vmatpush.msra.mxu0 %v3961
        %4179 = vmatpush.msra.mxu0 %v3960
        %4180 = vmatpush.msra.mxu0 %v3959
        %4181 = vmatpush.msra.mxu0 %v3958
        %4182 = vmatpush.msra.mxu0 %v3957
        %4183 = vmatpush.msra.mxu0 %v3956
        %4184 = vmatpush.msra.mxu0 %v3955
        %4185 = vmatpush.msra.mxu0 %v3954
        %4186 = vmatpush.msra.mxu0 %v3953
        %4187 = vmatpush.msra.mxu0 %v3952
        %4188 = vmatpush.msra.mxu0 %v3951
        %4189 = vmatmul.f32.gmra.mxu0 %v4099
        %v4190 = vpop.f32.mrf.mxu0
        %v4191 = vadd.f32 %v4165, %v4190
        %4192 = vmatmul.f32.gmra.mxu0 %v4104
        %v4193 = vpop.f32.mrf.mxu0
        %v4194 = vadd.f32 %v4168, %v4193
        %4195 = vmatmul.f32.gmra.mxu0 %v4109
        %v4196 = vpop.f32.mrf.mxu0
        %v4197 = vadd.f32 %v4171, %v4196
        %4198 = vdwg.mxu0
        %4199 = vmatpush.msra.mxu0 %v3982
        %4200 = vmatpush.msra.mxu0 %v3981
        %4201 = vmatpush.msra.mxu0 %v3980
        %4202 = vmatpush.msra.mxu0 %v3979
        %4203 = vmatpush.msra.mxu0 %v3978
        %4204 = vmatpush.msra.mxu0 %v3977
        %4205 = vmatpush.msra.mxu0 %v3976
        %4206 = vmatpush.msra.mxu0 %v3975
        %4207 = vmatpush.msra.mxu0 %v3974
        %4208 = vmatpush.msra.mxu0 %v3973
        %4209 = vmatpush.msra.mxu0 %v3972
        %4210 = vmatpush.msra.mxu0 %v3971
        %4211 = vmatpush.msra.mxu0 %v3970
        %4212 = vmatpush.msra.mxu0 %v3969
        %4213 = vmatpush.msra.mxu0 %v3968
        %4214 = vmatpush.msra.mxu0 %v3967
        %4215 = vmatmul.f32.gmra.mxu0 %v4100
        %v4216 = vpop.f32.mrf.mxu0
        %v4217 = vadd.f32 %v4191, %v4216
        %4218 = vmatmul.f32.gmra.mxu0 %v4105
        %v4219 = vpop.f32.mrf.mxu0
        %v4220 = vadd.f32 %v4194, %v4219
        %4221 = vmatmul.f32.gmra.mxu0 %v4110
        %v4222 = vpop.f32.mrf.mxu0
        %v4223 = vadd.f32 %v4197, %v4222
        %4224 = vdwg.mxu0
        %4225 = vmatpush.msra.mxu0 0.0
        %4226 = vmatpush.msra.mxu0 0.0
        %4227 = vmatpush.msra.mxu0 0.0
        %4228 = vmatpush.msra.mxu0 0.0
        %4229 = vmatpush.msra.mxu0 0.0
        %4230 = vmatpush.msra.mxu0 0.0
        %4231 = vmatpush.msra.mxu0 0.0
        %4232 = vmatpush.msra.mxu0 0.0
        %4233 = vmatpush.msra.mxu0 %v3990
        %4234 = vmatpush.msra.mxu0 %v3989
        %4235 = vmatpush.msra.mxu0 %v3988
        %4236 = vmatpush.msra.mxu0 %v3987
        %4237 = vmatpush.msra.mxu0 %v3986
        %4238 = vmatpush.msra.mxu0 %v3985
        %4239 = vmatpush.msra.mxu0 %v3984
        %4240 = vmatpush.msra.mxu0 %v3983
        %4241 = vmatmul.f32.gmra.mxu0 %v4113
        %v4242 = vpop.f32.mrf.mxu0
        %v4243 = vadd.f32 %v4217, %v4242
        %4244 = vmatmul.f32.gmra.mxu0 %v4116
        %v4245 = vpop.f32.mrf.mxu0
        %v4246 = vadd.f32 %v4220, %v4245
        %4247 = vmatmul.f32.gmra.mxu0 %v4119
        %v4248 = vpop.f32.mrf.mxu0
        %v4249 = vadd.f32 %v4223, %v4248
        %4250 = vdwg.mxu0
        %v4252 = vperm.slane %v3992, 0
        %v4254 = vmul.f32 %v4243, %v4252
        %v4255 = vmul.f32 %v4246, %v4252
        %v4256 = vmul.f32 %v4249, %v4252
        %v4258 = vperm.slane %v3994, 0
        %v4260 = vadd.f32 %v4254, %v4258
        %v4261 = vadd.f32 %v4255, %v4258
        %v4262 = vadd.f32 %v4256, %v4258
        %v4263 = vmax.f32 %v4260, 0.0
        %v4264 = vmax.f32 %v4261, 0.0
        %v4265 = vmax.f32 %v4262, 0.0
        %4266 = vst.msk [vmem:[#allocation2] sm:$0xff] %vm222, %v4263
        %4267 = vst.msk [vmem:[#allocation2 + $0x8] sm:$0xff] %vm222, %v4264
        %4268 = vst.msk [vmem:[#allocation2 + $0x10] sm:$0xff] %vm222, %v4265
        %v4269 = vld [vmem:[#allocation2] ss:$2 sm:$0x3]
        %v4270 = vld [vmem:[%s2999] ss:$2 sm:$0x3]
        %s4271 = scalar_lea.vmem [#allocation2], 6
        %v4272 = vld [vmem:[%s4271] ss:$2 sm:$0x3]
        %s4273 = scalar_lea.vmem [#allocation2], 7
        %v4274 = vld [vmem:[%s4273] ss:$2 sm:$0x3]
        %v4275 = vmax.f32 %v4269, %v4270
        %v4276 = vmax.f32 %v4272, %v4274
        %v4277 = vmax.f32 %v4275, %v4276
        %4278 = vst.msk [vmem:[#allocation6 + $0x5] sm:$0x3] %vm244, %v4277
        %s4279 = scalar_lea.vmem [#allocation2], 12
        %v4280 = vld [vmem:[%s4279] ss:$2 sm:$0x3]
        %s4281 = scalar_lea.vmem [#allocation2], 13
        %v4282 = vld [vmem:[%s4281] ss:$2 sm:$0x3]
        %v4283 = vld [vmem:[%s3001] ss:$2 sm:$0x3]
        %v4284 = vld [vmem:[%s3003] ss:$2 sm:$0x3]
        %v4285 = vmax.f32 %v4280, %v4282
        %v4286 = vmax.f32 %v4283, %v4284
        %v4287 = vmax.f32 %v4285, %v4286
        %4288 = vst.msk [vmem:[#allocation6 + $0x9] sm:$0x3] %vm244, %v4287
        %s4289 = scalar_lea.vmem %s2, 1152
        %v4290 = vld [vmem:[%s4289] sm:$0xff]
        %v4291 = vld [vmem:[%s4289 + $0x8] sm:$0xff]
        %v4292 = vld [vmem:[%s4289 + $0x10] sm:$0xff]
        %v4293 = vld [vmem:[%s4289 + $0x18] sm:$0xff]
        %v4294 = vld [vmem:[%s4289 + $0x20] sm:$0xff]
        %v4295 = vld [vmem:[%s4289 + $0x28] sm:$0xff]
        %v4296 = vld [vmem:[%s4289 + $0x30] sm:$0xff]
        %v4297 = vld [vmem:[%s4289 + $0x38] sm:$0xff]
        %v4298 = vld [vmem:[%s4289 + $0x40] sm:$0xff]
        %v4299 = vld [vmem:[%s4289 + $0x48] sm:$0xff]
        %v4300 = vld [vmem:[%s4289 + $0x50] sm:$0xff]
        %v4301 = vld [vmem:[%s4289 + $0x58] sm:$0xff]
        %v4302 = vld [vmem:[%s4289 + $0x60] sm:$0xff]
        %v4303 = vld [vmem:[%s4289 + $0x68] sm:$0xff]
        %v4304 = vld [vmem:[%s4289 + $0x70] sm:$0xff]
        %v4305 = vld [vmem:[%s4289 + $0x78] sm:$0xff]
        %v4306 = vld [vmem:[%s4289 + $0x80] sm:$0xff]
        %v4307 = vld [vmem:[%s4289 + $0x88] sm:$0xff]
        %v4308 = vld [vmem:[%s4289 + $0x90] sm:$0xff]
        %v4309 = vld [vmem:[%s4289 + $0x98] sm:$0xff]
        %v4310 = vld [vmem:[%s4289 + $0xa0] sm:$0xff]
        %v4311 = vld [vmem:[%s4289 + $0xa8] sm:$0xff]
        %v4312 = vld [vmem:[%s4289 + $0xb0] sm:$0xff]
        %v4313 = vld [vmem:[%s4289 + $0xb8] sm:$0xff]
        %v4314 = vld [vmem:[%s4289 + $0xc0] sm:$0xff]
        %v4315 = vld [vmem:[%s4289 + $0xc8] sm:$0xff]
        %v4316 = vld [vmem:[%s4289 + $0xd0] sm:$0xff]
        %v4317 = vld [vmem:[%s4289 + $0xd8] sm:$0xff]
        %v4318 = vld [vmem:[%s4289 + $0xe0] sm:$0xff]
        %v4319 = vld [vmem:[%s4289 + $0xe8] sm:$0xff]
        %v4320 = vld [vmem:[%s4289 + $0xf0] sm:$0xff]
        %v4321 = vld [vmem:[%s4289 + $0xf8] sm:$0xff]
        %v4322 = vld [vmem:[%s4289 + $0x100] sm:$0xff]
        %v4323 = vld [vmem:[%s4289 + $0x108] sm:$0xff]
        %v4324 = vld [vmem:[%s4289 + $0x110] sm:$0xff]
        %v4325 = vld [vmem:[%s4289 + $0x118] sm:$0xff]
        %v4326 = vld [vmem:[%s4289 + $0x120] sm:$0xff]
        %v4327 = vld [vmem:[%s4289 + $0x128] sm:$0xff]
        %v4328 = vld [vmem:[%s4289 + $0x130] sm:$0xff]
        %v4329 = vld [vmem:[%s4289 + $0x138] sm:$0xff]
        %v4330 = vld [vmem:[%s4289 + $0x140] sm:$0xff]
        %v4331 = vld [vmem:[%s4289 + $0x148] sm:$0xff]
        %v4332 = vld [vmem:[%s4289 + $0x150] sm:$0xff]
        %v4333 = vld [vmem:[%s4289 + $0x158] sm:$0xff]
        %v4334 = vld [vmem:[%s4289 + $0x160] sm:$0xff]
        %v4335 = vld [vmem:[%s4289 + $0x168] sm:$0xff]
        %v4336 = vld [vmem:[%s4289 + $0x170] sm:$0xff]
        %v4337 = vld [vmem:[%s4289 + $0x178] sm:$0xff]
        %v4338 = vld [vmem:[%s4289 + $0x180] sm:$0xff]
        %v4339 = vld [vmem:[%s4289 + $0x188] sm:$0xff]
        %v4340 = vld [vmem:[%s4289 + $0x190] sm:$0xff]
        %v4341 = vld [vmem:[%s4289 + $0x198] sm:$0xff]
        %v4342 = vld [vmem:[%s4289 + $0x1a0] sm:$0xff]
        %v4343 = vld [vmem:[%s4289 + $0x1a8] sm:$0xff]
        %v4344 = vld [vmem:[%s4289 + $0x1b0] sm:$0xff]
        %v4345 = vld [vmem:[%s4289 + $0x1b8] sm:$0xff]
        %v4346 = vld [vmem:[%s4289 + $0x1c0] sm:$0xff]
        %v4347 = vld [vmem:[%s4289 + $0x1c8] sm:$0xff]
        %v4348 = vld [vmem:[%s4289 + $0x1d0] sm:$0xff]
        %v4349 = vld [vmem:[%s4289 + $0x1d8] sm:$0xff]
        %v4350 = vld [vmem:[%s4289 + $0x1e0] sm:$0xff]
        %v4351 = vld [vmem:[%s4289 + $0x1e8] sm:$0xff]
        %v4352 = vld [vmem:[%s4289 + $0x1f0] sm:$0xff]
        %v4353 = vld [vmem:[%s4289 + $0x1f8] sm:$0xff]
        %v4354 = vld [vmem:[%s4289 + $0x200] sm:$0xff]
        %v4355 = vld [vmem:[%s4289 + $0x208] sm:$0xff]
        %v4356 = vld [vmem:[%s4289 + $0x210] sm:$0xff]
        %v4357 = vld [vmem:[%s4289 + $0x218] sm:$0xff]
        %v4358 = vld [vmem:[%s4289 + $0x220] sm:$0xff]
        %v4359 = vld [vmem:[%s4289 + $0x228] sm:$0xff]
        %v4360 = vld [vmem:[%s4289 + $0x230] sm:$0xff]
        %v4361 = vld [vmem:[%s4289 + $0x238] sm:$0xff]
        %s4362 = scalar_lea.vmem %s3, 3
        %v4363 = vld [vmem:[%s4362] sm:$0x1]
        %s4364 = scalar_lea.vmem %s4, 3
        %v4365 = vld [vmem:[%s4364] sm:$0x1]
        %v4366 = vld [vmem:[#allocation6] sm:$0xff]
        %4367 = vst.msk [vmem:[#allocation3] sm:$0xff] %vm222, %v4366
        %v4368 = vld [vmem:[#allocation6 + $0x1] sm:$0xff]
        %4370 = vrot.lane.b32.xlu0 %v4368, 64
        %v4371 = vpop.permute.xlu0 %4370
        %4373 = vst.msk [vmem:[#allocation3] sm:$0xff] %vm3239, %v4371
        %v4374 = vld [vmem:[#allocation6 + $0x2] sm:$0xff]
        %4375 = vst.msk [vmem:[#allocation3 + $0x8] sm:$0xff] %vm222, %v4374
        %v4376 = vld [vmem:[#allocation6 + $0x4] sm:$0xff]
        %4378 = vrot.lane.b32.xlu0 %v4376, 64
        %v4379 = vpop.permute.xlu0 %4378
        %4381 = vst.msk [vmem:[#allocation3 + $0x8] sm:$0xff] %vm3239, %v4379
        %v4382 = vld [vmem:[#allocation6 + $0x5] sm:$0xff]
        %4383 = vst.msk [vmem:[#allocation3 + $0x10] sm:$0xff] %vm222, %v4382
        %v4384 = vld [vmem:[#allocation6 + $0x6] sm:$0xff]
        %4386 = vrot.lane.b32.xlu0 %v4384, 64
        %v4387 = vpop.permute.xlu0 %4386
        %4389 = vst.msk [vmem:[#allocation3 + $0x10] sm:$0xff] %vm3239, %v4387
        %v4390 = vld [vmem:[#allocation6 + $0x8] sm:$0xff]
        %4391 = vst.msk [vmem:[#allocation3 + $0x18] sm:$0xff] %vm222, %v4390
        %v4392 = vld [vmem:[#allocation6 + $0x9] sm:$0xff]
        %4394 = vrot.lane.b32.xlu0 %v4392, 64
        %v4395 = vpop.permute.xlu0 %4394
        %4397 = vst.msk [vmem:[#allocation3 + $0x18] sm:$0xff] %vm3239, %v4395
        %v4398 = vld [vmem:[#allocation6 + $0xa] sm:$0xff]
        %4399 = vst.msk [vmem:[#allocation3 + $0x20] sm:$0xff] %vm222, %v4398
        %v4400 = vld [vmem:[#allocation3] sm:$0xff]
        %v4401 = vld [vmem:[#allocation3 + $0x8] sm:$0xff]
        %v4402 = vld [vmem:[#allocation3 + $0x10] sm:$0xff]
        %v4403 = vld [vmem:[#allocation3 + $0x18] sm:$0xff]
        %v4404 = vld [vmem:[#allocation3 + $0x20] sm:$0xff]
        %v4406 = vsel %vm222, %v4404, 0
        %4408 = vmatpush.msra.mxu0 %v4305
        %4409 = vmatpush.msra.mxu0 %v4304
        %4410 = vmatpush.msra.mxu0 %v4303
        %4411 = vmatpush.msra.mxu0 %v4302
        %4412 = vmatpush.msra.mxu0 %v4301
        %4413 = vmatpush.msra.mxu0 %v4300
        %4414 = vmatpush.msra.mxu0 %v4299
        %4415 = vmatpush.msra.mxu0 %v4298
        %4416 = vmatpush.msra.mxu0 %v4297
        %4417 = vmatpush.msra.mxu0 %v4296
        %4418 = vmatpush.msra.mxu0 %v4295
        %4419 = vmatpush.msra.mxu0 %v4294
        %4420 = vmatpush.msra.mxu0 %v4293
        %4421 = vmatpush.msra.mxu0 %v4292
        %4422 = vmatpush.msra.mxu0 %v4291
        %4423 = vmatpush.msra.mxu0 %v4290
        %4424 = vmatmul.f32.gmra.mxu0 %v4400
        %v4425 = vpop.f32.mrf.mxu0
        %v4426 = vadd.f32 0.0, %v4425
        %4427 = vdwg.mxu0
        %4428 = vmatpush.msra.mxu0 %v4321
        %4429 = vmatpush.msra.mxu0 %v4320
        %4430 = vmatpush.msra.mxu0 %v4319
        %4431 = vmatpush.msra.mxu0 %v4318
        %4432 = vmatpush.msra.mxu0 %v4317
        %4433 = vmatpush.msra.mxu0 %v4316
        %4434 = vmatpush.msra.mxu0 %v4315
        %4435 = vmatpush.msra.mxu0 %v4314
        %4436 = vmatpush.msra.mxu0 %v4313
        %4437 = vmatpush.msra.mxu0 %v4312
        %4438 = vmatpush.msra.mxu0 %v4311
        %4439 = vmatpush.msra.mxu0 %v4310
        %4440 = vmatpush.msra.mxu0 %v4309
        %4441 = vmatpush.msra.mxu0 %v4308
        %4442 = vmatpush.msra.mxu0 %v4307
        %4443 = vmatpush.msra.mxu0 %v4306
        %4444 = vmatmul.f32.gmra.mxu0 %v4401
        %v4445 = vpop.f32.mrf.mxu0
        %v4446 = vadd.f32 %v4426, %v4445
        %4447 = vdwg.mxu0
        %4448 = vmatpush.msra.mxu0 %v4337
        %4449 = vmatpush.msra.mxu0 %v4336
        %4450 = vmatpush.msra.mxu0 %v4335
        %4451 = vmatpush.msra.mxu0 %v4334
        %4452 = vmatpush.msra.mxu0 %v4333
        %4453 = vmatpush.msra.mxu0 %v4332
        %4454 = vmatpush.msra.mxu0 %v4331
        %4455 = vmatpush.msra.mxu0 %v4330
        %4456 = vmatpush.msra.mxu0 %v4329
        %4457 = vmatpush.msra.mxu0 %v4328
        %4458 = vmatpush.msra.mxu0 %v4327
        %4459 = vmatpush.msra.mxu0 %v4326
        %4460 = vmatpush.msra.mxu0 %v4325
        %4461 = vmatpush.msra.mxu0 %v4324
        %4462 = vmatpush.msra.mxu0 %v4323
        %4463 = vmatpush.msra.mxu0 %v4322
        %4464 = vmatmul.f32.gmra.mxu0 %v4402
        %v4465 = vpop.f32.mrf.mxu0
        %v4466 = vadd.f32 %v4446, %v4465
        %4467 = vdwg.mxu0
        %4468 = vmatpush.msra.mxu0 %v4353
        %4469 = vmatpush.msra.mxu0 %v4352
        %4470 = vmatpush.msra.mxu0 %v4351
        %4471 = vmatpush.msra.mxu0 %v4350
        %4472 = vmatpush.msra.mxu0 %v4349
        %4473 = vmatpush.msra.mxu0 %v4348
        %4474 = vmatpush.msra.mxu0 %v4347
        %4475 = vmatpush.msra.mxu0 %v4346
        %4476 = vmatpush.msra.mxu0 %v4345
        %4477 = vmatpush.msra.mxu0 %v4344
        %4478 = vmatpush.msra.mxu0 %v4343
        %4479 = vmatpush.msra.mxu0 %v4342
        %4480 = vmatpush.msra.mxu0 %v4341
        %4481 = vmatpush.msra.mxu0 %v4340
        %4482 = vmatpush.msra.mxu0 %v4339
        %4483 = vmatpush.msra.mxu0 %v4338
        %4484 = vmatmul.f32.gmra.mxu0 %v4403
        %v4485 = vpop.f32.mrf.mxu0
        %v4486 = vadd.f32 %v4466, %v4485
        %4487 = vdwg.mxu0
        %4488 = vmatpush.msra.mxu0 0.0
        %4489 = vmatpush.msra.mxu0 0.0
        %4490 = vmatpush.msra.mxu0 0.0
        %4491 = vmatpush.msra.mxu0 0.0
        %4492 = vmatpush.msra.mxu0 0.0
        %4493 = vmatpush.msra.mxu0 0.0
        %4494 = vmatpush.msra.mxu0 0.0
        %4495 = vmatpush.msra.mxu0 0.0
        %4496 = vmatpush.msra.mxu0 %v4361
        %4497 = vmatpush.msra.mxu0 %v4360
        %4498 = vmatpush.msra.mxu0 %v4359
        %4499 = vmatpush.msra.mxu0 %v4358
        %4500 = vmatpush.msra.mxu0 %v4357
        %4501 = vmatpush.msra.mxu0 %v4356
        %4502 = vmatpush.msra.mxu0 %v4355
        %4503 = vmatpush.msra.mxu0 %v4354
        %4504 = vmatmul.f32.gmra.mxu0 %v4406
        %v4505 = vpop.f32.mrf.mxu0
        %v4506 = vadd.f32 %v4486, %v4505
        %4507 = vdwg.mxu0
        %v4509 = vperm.slane %v4363, 0
        %v4511 = vmul.f32 %v4506, %v4509
        %v4513 = vperm.slane %v4365, 0
        %v4515 = vadd.f32 %v4511, %v4513
        %v4516 = vmax.f32 %v4515, 0.0
        %4517 = vst.msk [vmem:[#allocation2] sm:$0xff] %vm222, %v4516
        %v4518 = vld [vmem:[#allocation2] sm:$0x1]
        %v4519 = vld [vmem:[#allocation2 + $0x1] sm:$0x1]
        %v4520 = vld [vmem:[#allocation2 + $0x4] sm:$0x1]
        %v4521 = vld [vmem:[#allocation2 + $0x5] sm:$0x1]
        %v4522 = vmax.f32 %v4518, %v4519
        %v4523 = vmax.f32 %v4520, %v4521
        %v4524 = vmax.f32 %v4522, %v4523
        %vm4525 = vcmask 516096
        %4526 = vst.msk [vmem:[%s216] sm:$0x1] %vm4525, %v4524
        %s4527 = sand.u32 %s137, 1
        %s4528 = scalar_lea.sflag [#allocation8], %s4527
        %s4529 = sand.u32 %s137, 1
        %s4530 = scalar_lea.vmem [#allocation7], %s4529
        // Predicated region
        $region41: #{cnn_block_forward.1} parent=39 // pred_check
          %p4531 = pneg %p147
        $region42: #{cnn_block_forward.1} parent=39 // pred_check_branch
          %4533 = sbr.rel (%p4531) target = $region44
        $region43: #{cnn_block_forward.1} parent=39 // pred_region
          %4535 = vsyncadd %s4528, 0
          %s4536 = scalar_lea.hbm %s5, %s19
          %s4538 = sshll.u32 %s4530, 4
          %s4539 = int_to_ptr.vmem [resolvable:$true] %s4538
          %s4540 = sshll.u32 %s4536, 4
          %s4541 = int_to_ptr.hbm [resolvable:$true] %s4540
          %4543 = dma.vmem_to_hbm [thread:$0]  %s4539, 16, %s4541, %s4528
        $region44: #{cnn_block_forward.1} parent=39 // pred_fallthru
          _
      $region40: #{cnn_block_forward.1} parent=5 // pred_fallthru
        _
      %p4544 = scmp.le.s32.totalorder 2, %s14
      // Predicated region
      $region45: #{cnn_block_forward.1} parent=5 // pred_check
        %p4545 = pneg %p4544
      $region46: #{cnn_block_forward.1} parent=5 // pred_check_branch
        %4547 = sbr.rel (%p4545) target = $region48
      $region47: #{cnn_block_forward.1} parent=5 // pred_region
        %s4548 = ssub.s32 %s14, 2
        // Predicated region
        $region49: #{cnn_block_forward.1} parent=47 // pred_check
          %p4549 = pneg %p153
        $region50: #{cnn_block_forward.1} parent=47 // pred_check_branch
          %4551 = sbr.rel (%p4549) target = $region52
        $region51: #{cnn_block_forward.1} parent=47 // pred_region
          %s4552 = sand.u32 %s138, 1
          %s4553 = scalar_lea.sflag [#allocation8], %s4552
          %s4554 = sand.u32 %s138, 1
          %s4555 = scalar_lea.vmem [#allocation7], %s4554
          %4557 = dma.done %s4553, 16
        $region52: #{cnn_block_forward.1} parent=47 // pred_fallthru
          _
      $region48: #{cnn_block_forward.1} parent=5 // pred_fallthru
        _
    $region6: #{cnn_block_forward.1} parent=1 // loop_footer
      %s18 = sadd.s32 1, %s14
    $region7: #{cnn_block_forward.1} parent=1 // loop_footer_branch
      %13 = sbr.rel target = $region3
    $region8: #{cnn_block_forward.1} parent=1 // loop_exit
      _
    %4558 = vsyncpa [#allocation8], 1
    %s4559 = scalar_lea.sflag [#allocation8], 1
    %4560 = vsyncpa %s4559, 1

</llo_original>
